<compile_context>
chip_gen: v6e
topology: v6e:2x2x1
jax: 0.10.0
libtpu: 0.0.40
codegen_flags: <defaults>
</compile_context>

<pallas_src>
import functools
import math

import jax
import jax.numpy as jnp
from jax import lax
from jax.experimental import pallas as pl
from jax.experimental.pallas import tpu as pltpu


LN_EPS = 1e-6


def _vmem_capacity_bytes():
    try:
        return pltpu.get_tpu_info().vmem_capacity_bytes
    except Exception:
        return 64 * 1024 * 1024   # conservative (v7x-sized) fallback


_VMEM_CAP = _vmem_capacity_bytes()
if _VMEM_CAP >= 96 * 1024 * 1024:
    # v5e / v6e: 128 MiB physical VMEM per TensorCore -> large tiles.
    TM, TN, TH, TQ, TKV = 512, 512, 256, 512, 512
    VMEM_LIMIT = 96 * 1024 * 1024
else:
    # v7x: 64 MiB physical VMEM per TensorCore -> keep resident set <= ~48 MiB.
    TM, TN, TH, TQ, TKV = 256, 256, 256, 256, 512
    VMEM_LIMIT = 48 * 1024 * 1024


def _tile_major(dim, pref):
    """Sublane-axis tile: a multiple of 8 that divides dim, else the full dim."""
    t = min(pref, dim)
    while t >= 8 and dim % t != 0:
        t //= 2
    return t if (t >= 8 and dim % t == 0) else dim


def _tile_minor(dim, pref):
    """Lane-axis tile: a multiple of 128 that divides dim, else the full dim."""
    t = min(pref, dim)
    while t >= 128 and dim % t != 0:
        t //= 2
    return t if (t >= 128 and dim % t == 0) else dim


def _layernorm(x, alpha, beta, eps):
    d = x.shape[-1]
    mean = jnp.mean(x, axis=-1, keepdims=True)
    diff = x - mean
    var = jnp.sum(diff * diff, axis=-1, keepdims=True) / (d - 1)   # unbiased std
    inv = pl.reciprocal(jnp.sqrt(var) + eps, approx=False)
    return alpha * diff * inv + beta


# ----------------------------------------------------------------------------
# Kernels
# ----------------------------------------------------------------------------

def _make_proj_kernel(n_out, use_ln, eps):
    """outs[i] = (LN(x) if use_ln else x) @ W[i] + b[i] for one (tm, tn) tile."""

    def kernel(*refs):
        pos = 0
        x_ref = refs[pos]; pos += 1
        if use_ln:
            a_ref, be_ref = refs[pos], refs[pos + 1]
            pos += 2
        w_refs = refs[pos:pos + n_out]; pos += n_out
        b_refs = refs[pos:pos + n_out]; pos += n_out
        o_refs = refs[pos:pos + n_out]

        x = x_ref[...]
        if use_ln:
            x = _layernorm(x, a_ref[...], be_ref[...], eps)
        for w_ref, b_ref, o_ref in zip(w_refs, b_refs, o_refs):
            o_ref[...] = (jnp.dot(x, w_ref[...],
                                  preferred_element_type=jnp.float32)
                          + b_ref[...])

    return kernel


def _ffn_kernel(x_ref, a_ref, be_ref, w1_ref, b1_ref, w2_ref, b2_ref, res_ref,
                o_ref, acc_ref, xn_ref, *, eps):
    """Fused FFN sub-layer: o = res + relu(LN(x) @ W1 + b1) @ W2 + b2.

    Grid = (M tiles, hidden tiles); the hidden dim is the reduction axis kept in
    a VMEM f32 accumulator (the [M, 4*d_model] hidden never hits HBM).  LN(x) is
    computed once per M tile and cached in a VMEM scratch.
    """
    j = pl.program_id(1)

    @pl.when(j == 0)
    def _():
        acc_ref[...] = jnp.zeros_like(acc_ref)
        xn_ref[...] = _layernorm(x_ref[...], a_ref[...], be_ref[...], eps)

    h = jnp.dot(xn_ref[...], w1_ref[...],
                preferred_element_type=jnp.float32) + b1_ref[...]
    h = jnp.maximum(h, 0.0)
    acc_ref[...] += jnp.dot(h, w2_ref[...], preferred_element_type=jnp.float32)

    @pl.when(j == pl.num_programs(1) - 1)
    def _():
        o_ref[...] = acc_ref[...] + b2_ref[...] + res_ref[...]


def _flash_mha_kernel(q_ref, k_ref, v_ref, m_ref, res_ref, wo_ref, bo_ref,
                      o_ref, m_sc, l_sc, acc_sc, *, heads, d_k):
    """Flash-style multi-head attention for one (batch, Sq-tile, Sk-tile) step.

    Online softmax over the Sk grid axis; per-head running max / sum / context
    live in VMEM scratch.  On the last Sk step the per-head contexts are
    normalized, concatenated, pushed through ONE [tq, D] @ [D, D] output
    projection, and fused with bias + residual.
    """
    ki = pl.program_id(2)

    @pl.when(ki == 0)
    def _():
        m_sc[...] = jnp.full(m_sc.shape, -jnp.inf, m_sc.dtype)
        l_sc[...] = jnp.zeros_like(l_sc)
        acc_sc[...] = jnp.zeros_like(acc_sc)

    q = q_ref[0]                                   # (tq, D)
    k = k_ref[0]                                   # (tk, D)
    v = v_ref[0]                                   # (tk, D)
    scale = 1.0 / math.sqrt(d_k)
    # Additive mask bias, computed ONCE per tile (hoisted out of the head loop).
    bias = jnp.where(m_ref[0] == 0, -1e9, 0.0)     # (tq, tk) or (1, tk)

    # TODO(synk): use lax.fori_loop over heads for heads >= 16 to bound code
    # size / live ranges; static unroll is fine for small head counts.
    for h in range(heads):
        qh = q[:, h * d_k:(h + 1) * d_k]
        kh = k[:, h * d_k:(h + 1) * d_k]
        vh = v[:, h * d_k:(h + 1) * d_k]
        # Q K^T without an explicit transpose: contract the last dims.
        s = lax.dot_general(qh, kh, (((1,), (1,)), ((), ())),
                            preferred_element_type=jnp.float32) * scale + bias
        m_prev = m_sc[h]                           # (tq, 1)
        m_new = jnp.maximum(m_prev, jnp.max(s, axis=-1, keepdims=True))
        alpha = jnp.exp(m_prev - m_new)
        p = jnp.exp(s - m_new)
        l_sc[h] = alpha * l_sc[h] + jnp.sum(p, axis=-1, keepdims=True)
        acc_sc[h] = alpha * acc_sc[h] + jnp.dot(
            p, vh, preferred_element_type=jnp.float32)
        m_sc[h] = m_new

    @pl.when(ki == pl.num_programs(2) - 1)
    def _():
        parts = []
        for h in range(heads):
            inv_l = pl.reciprocal(l_sc[h], approx=True)
            parts.append(acc_sc[h] * inv_l)
        ctx = jnp.concatenate(parts, axis=-1)      # (tq, D), head-major lanes
        out = jnp.dot(ctx, wo_ref[...], preferred_element_type=jnp.float32)
        o_ref[0] = out + bo_ref[...] + res_ref[0]


# ----------------------------------------------------------------------------
# Wrappers
# ----------------------------------------------------------------------------

def fused_projections(x2d, weights, biases, ln=None, eps=LN_EPS):
    """Compute n projections of (optionally LayerNorm'd) x in ONE pallas_call.

    All weights must share the same output width.  Grid = (N tiles, M tiles)
    with M innermost, so each weight block is DMAed once and the activation
    streams (cheaper when M > N, the usual projection regime).
    """
    M, D = x2d.shape
    n_out = len(weights)
    N = weights[0].shape[1]
    tm = _tile_major(M, TM)
    tn = _tile_minor(N, TN)
    use_ln = ln is not None

    in_specs = [pl.BlockSpec((tm, D), lambda j, i: (i, 0))]
    args = [x2d]
    if use_ln:
        alpha, beta = ln
        in_specs += [pl.BlockSpec((1, D), lambda j, i: (0, 0)),
                     pl.BlockSpec((1, D), lambda j, i: (0, 0))]
        args += [alpha.reshape(1, D), beta.reshape(1, D)]
    for w in weights:
        in_specs.append(pl.BlockSpec((D, tn), lambda j, i: (0, j)))
        args.append(w)
    for b in biases:
        in_specs.append(pl.BlockSpec((1, tn), lambda j, i: (0, j)))
        args.append(b.reshape(1, N))

    out_specs = tuple(pl.BlockSpec((tm, tn), lambda j, i: (i, j))
                      for _ in range(n_out))
    out_shapes = tuple(jax.ShapeDtypeStruct((M, N), jnp.float32)
                       for _ in range(n_out))
    if n_out == 1:
        out_specs, out_shapes = out_specs[0], out_shapes[0]

    return pl.pallas_call(
        _make_proj_kernel(n_out, use_ln, eps),
        grid_spec=pltpu.PrefetchScalarGridSpec(
            num_scalar_prefetch=0,
            grid=(N // tn, M // tm),
            in_specs=in_specs,
            out_specs=out_specs,
        ),
        out_shape=out_shapes,
        compiler_params=pltpu.CompilerParams(
            dimension_semantics=("parallel", "parallel"),
            vmem_limit_bytes=VMEM_LIMIT),
    )(*args)


def attention_core(q, k, v, mask, residual, wo, bo, heads):
    """out = residual + concat_heads(softmax(QK^T/sqrt(dk) + mask_bias) V) Wo + bo."""
    B, Sq, D = q.shape
    Sk = k.shape[1]
    d_k = D // heads
    tq = _tile_major(Sq, TQ)
    tk = _tile_minor(Sk, TKV)

    mq = mask.shape[1]
    full_mask = (mq != 1)
    mq_blk = tq if full_mask else 1
    if full_mask:
        mask_map = lambda b, qi, ki: (b, qi, ki)
    else:
        mask_map = lambda b, qi, ki: (b, 0, ki)

    return pl.pallas_call(
        functools.partial(_flash_mha_kernel, heads=heads, d_k=d_k),
        grid_spec=pltpu.PrefetchScalarGridSpec(
            num_scalar_prefetch=0,
            grid=(B, Sq // tq, Sk // tk),
            in_specs=[
                pl.BlockSpec((1, tq, D), lambda b, qi, ki: (b, qi, 0)),   # Q
                pl.BlockSpec((1, tk, D), lambda b, qi, ki: (b, ki, 0)),   # K
                pl.BlockSpec((1, tk, D), lambda b, qi, ki: (b, ki, 0)),   # V
                pl.BlockSpec((1, mq_blk, tk), mask_map),                  # mask
                pl.BlockSpec((1, tq, D), lambda b, qi, ki: (b, qi, 0)),   # residual
                pl.BlockSpec((D, D), lambda b, qi, ki: (0, 0)),           # Wo
                pl.BlockSpec((1, D), lambda b, qi, ki: (0, 0)),           # bo
            ],
            out_specs=pl.BlockSpec((1, tq, D), lambda b, qi, ki: (b, qi, 0)),
            scratch_shapes=[
                pltpu.VMEM((heads, tq, 1), jnp.float32),    # running max
                pltpu.VMEM((heads, tq, 1), jnp.float32),    # running sum
                pltpu.VMEM((heads, tq, d_k), jnp.float32),  # per-head context
            ],
        ),
        out_shape=jax.ShapeDtypeStruct((B, Sq, D), jnp.float32),
        compiler_params=pltpu.CompilerParams(
            dimension_semantics=("parallel", "parallel", "arbitrary"),
            vmem_limit_bytes=VMEM_LIMIT),
    )(q, k, v, mask, residual, wo, bo.reshape(1, D))


def self_attention_block(x, ln_alpha, ln_beta, mask, p, heads):
    """x + MHA(LN(x), LN(x), LN(x), mask)   (dropout = identity)."""
    B, S, D = x.shape
    x2d = x.reshape(B * S, D)
    q, k, v = fused_projections(
        x2d, (p["wq"], p["wk"], p["wv"]), (p["bq"], p["bk"], p["bv"]),
        ln=(ln_alpha, ln_beta))
    return attention_core(q.reshape(B, S, D), k.reshape(B, S, D),
                          v.reshape(B, S, D), mask, x, p["wo"], p["bo"], heads)


def cross_attention_block(x, e_outputs, ln_alpha, ln_beta, mask, p, heads):
    """x + MHA(LN(x), e_outputs, e_outputs, mask)   (dropout = identity)."""
    B, Sq, D = x.shape
    Sk = e_outputs.shape[1]
    q = fused_projections(x.reshape(B * Sq, D), (p["wq"],), (p["bq"],),
                          ln=(ln_alpha, ln_beta))
    k, v = fused_projections(e_outputs.reshape(B * Sk, D),
                             (p["wk"], p["wv"]), (p["bk"], p["bv"]), ln=None)
    return attention_core(q.reshape(B, Sq, D), k.reshape(B, Sk, D),
                          v.reshape(B, Sk, D), mask, x, p["wo"], p["bo"], heads)


def ffn_block(x, ln_alpha, ln_beta, p, eps=LN_EPS):
    """x + linear2(relu(linear1(LN(x)))) fused in a single pallas_call."""
    B, S, D = x.shape
    Dff = p["w1"].shape[1]
    M = B * S
    x2d = x.reshape(M, D)
    tm = _tile_major(M, TM)
    th = _tile_minor(Dff, TH)
    out = pl.pallas_call(
        functools.partial(_ffn_kernel, eps=eps),
        grid_spec=pltpu.PrefetchScalarGridSpec(
            num_scalar_prefetch=0,
            grid=(M // tm, Dff // th),
            in_specs=[
                pl.BlockSpec((tm, D), lambda i, j: (i, 0)),
                pl.BlockSpec((1, D), lambda i, j: (0, 0)),
                pl.BlockSpec((1, D), lambda i, j: (0, 0)),
                pl.BlockSpec((D, th), lambda i, j: (0, j)),
                pl.BlockSpec((1, th), lambda i, j: (0, j)),
                pl.BlockSpec((th, D), lambda i, j: (j, 0)),
                pl.BlockSpec((1, D), lambda i, j: (0, 0)),
                pl.BlockSpec((tm, D), lambda i, j: (i, 0)),
            ],
            out_specs=pl.BlockSpec((tm, D), lambda i, j: (i, 0)),
            scratch_shapes=[pltpu.VMEM((tm, D), jnp.float32),   # accumulator
                            pltpu.VMEM((tm, D), jnp.float32)],  # cached LN(x)
        ),
        out_shape=jax.ShapeDtypeStruct((M, D), jnp.float32),
        compiler_params=pltpu.CompilerParams(
            dimension_semantics=("parallel", "arbitrary"),
            vmem_limit_bytes=VMEM_LIMIT),
    )(x2d, ln_alpha.reshape(1, D), ln_beta.reshape(1, D),
      p["w1"], p["b1"].reshape(1, Dff), p["w2"], p["b2"].reshape(1, D), x2d)
    return out.reshape(B, S, D)


def decoder_layer(x, e_outputs, src_mask, trg_mask, params, heads):
    x = self_attention_block(x, params["n1_alpha"], params["n1_bias"],
                             trg_mask, params["attn1"], heads)
    x = cross_attention_block(x, e_outputs, params["n2_alpha"], params["n2_bias"],
                              src_mask, params["attn2"], heads)
    x = ffn_block(x, params["n3_alpha"], params["n3_bias"], params["ff"])
    return x


# ----------------------------------------------------------------------------
# Deterministic parameter construction
# ----------------------------------------------------------------------------

def make_params(key, d_model, heads):
    d_ff = d_model * 4
    keys = jax.random.split(key, 10)

    def lin(k, din, dout):
        kw, kb = jax.random.split(k)
        w = jax.random.normal(kw, (din, dout), jnp.float32) * 0.02
        b = jax.random.normal(kb, (dout,), jnp.float32) * 0.02
        return w, b

    def attn_params(ks):
        wq, bq = lin(ks[0], d_model, d_model)
        wk, bk = lin(ks[1], d_model, d_model)
        wv, bv = lin(ks[2], d_model, d_model)
        wo, bo = lin(ks[3], d_model, d_model)
        return dict(wq=wq, bq=bq, wk=wk, bk=bk, wv=wv, bv=bv, wo=wo, bo=bo)

    w1, b1 = lin(keys[8], d_model, d_ff)
    w2, b2 = lin(keys[9], d_ff, d_model)

    return dict(
        n1_alpha=jnp.ones((d_model,), jnp.float32),
        n1_bias=jnp.zeros((d_model,), jnp.float32),
        n2_alpha=jnp.ones((d_model,), jnp.float32),
        n2_bias=jnp.zeros((d_model,), jnp.float32),
        n3_alpha=jnp.ones((d_model,), jnp.float32),
        n3_bias=jnp.zeros((d_model,), jnp.float32),
        attn1=attn_params(keys[0:4]),
        attn2=attn_params(keys[4:8]),
        ff=dict(w1=w1, b1=b1, w2=w2, b2=b2),
    )


# ----------------------------------------------------------------------------
# Main
# ----------------------------------------------------------------------------

if __name__ == "__main__":
    B, S_trg, S_src = 2, 8, 8
    d_model, heads = 32, 4

    key = jax.random.PRNGKey(0)
    k_x, k_e, k_p = jax.random.split(key, 3)

    x = jax.random.normal(k_x, (B, S_trg, d_model), jnp.float32)
    e_outputs = jax.random.normal(k_e, (B, S_src, d_model), jnp.float32)

    # causal mask for self-attention, all-ones padding mask for cross-attention
    trg_mask = jnp.broadcast_to(
        jnp.tril(jnp.ones((S_trg, S_trg), jnp.float32))[None], (B, S_trg, S_trg))
    src_mask = jnp.ones((B, 1, S_src), jnp.float32)

    params = make_params(k_p, d_model, heads)

    fwd = jax.jit(functools.partial(decoder_layer, heads=heads))
    out = fwd(x, e_outputs, src_mask, trg_mask, params)
    jax.block_until_ready(out)
    assert out.shape == (B, S_trg, d_model)
    print("KERNEL_OK")
</pallas_src>

<mosaic_0001>
module attributes {stable_mosaic.version = 11 : i64} {
  func.func @_flash_mha_kernel(%arg0: i32, %arg1: i32, %arg2: i32, %arg3: memref<1x8x32xf32, #tpu.memory_space<vmem>>, %arg4: memref<1x8x32xf32, #tpu.memory_space<vmem>>, %arg5: memref<1x8x32xf32, #tpu.memory_space<vmem>>, %arg6: memref<1x8x8xf32, #tpu.memory_space<vmem>>, %arg7: memref<1x8x32xf32, #tpu.memory_space<vmem>>, %arg8: memref<32x32xf32, #tpu.memory_space<vmem>>, %arg9: memref<1x32xf32, #tpu.memory_space<vmem>>, %arg10: memref<1x8x32xf32, #tpu.memory_space<vmem>>, %arg11: memref<4x8x1xf32, #tpu.memory_space<vmem>>, %arg12: memref<4x8x1xf32, #tpu.memory_space<vmem>>, %arg13: memref<4x8x8xf32, #tpu.memory_space<vmem>>) attributes {dimension_semantics = [#tpu.dimension_semantics<parallel>, #tpu.dimension_semantics<parallel>, #tpu.dimension_semantics<arbitrary>], iteration_bounds = array<i64: 2, 1, 1>, scalar_prefetch = 0 : i64, scratch_operands = 3 : i64, tpu.core_type = #tpu.core_type<tc>, window_params = [{transform_indices = @transform_0, window_bounds = array<i64: 1, 8, 32>}, {transform_indices = @transform_1, window_bounds = array<i64: 1, 8, 32>}, {transform_indices = @transform_2, window_bounds = array<i64: 1, 8, 32>}, {transform_indices = @transform_3, window_bounds = array<i64: 1, 8, 8>}, {transform_indices = @transform_4, window_bounds = array<i64: 1, 8, 32>}, {pipeline_mode = #tpu.pipeline_mode<synchronous>, transform_indices = @transform_5, window_bounds = array<i64: 32, 32>}, {pipeline_mode = #tpu.pipeline_mode<synchronous>, transform_indices = @transform_6, window_bounds = array<i64: 1, 32>}, {transform_indices = @transform_7, window_bounds = array<i64: 1, 8, 32>}]} {
    %c0_i32 = arith.constant 0 : i32
    %0 = arith.cmpi eq, %arg2, %c0_i32 : i32
    %1 = arith.extui %0 : i1 to i32
    %c0_i32_0 = arith.constant 0 : i32
    %2 = arith.cmpi ne, %1, %c0_i32_0 : i32
    scf.if %2 {
      %cst_105 = arith.constant 0xFF800000 : f32
      %171 = vector.broadcast %cst_105 : f32 to vector<4x8x1xf32>
      %c0_106 = arith.constant 0 : index
      %c0_107 = arith.constant 0 : index
      %c0_108 = arith.constant 0 : index
      %172 = vector.load %arg11[%c0_106, %c0_107, %c0_108] : memref<4x8x1xf32, #tpu.memory_space<vmem>>, vector<4x8x1xf32>
      tpu.vector_store %arg11[%c0_106, %c0_107, %c0_108], %171 {strides = array<i32>} : memref<4x8x1xf32, #tpu.memory_space<vmem>>, vector<4x8x1xf32>,
      %cst_109 = arith.constant 0.000000e+00 : f32
      %173 = vector.broadcast %cst_109 : f32 to vector<4x8x1xf32>
      %c0_110 = arith.constant 0 : index
      %c0_111 = arith.constant 0 : index
      %c0_112 = arith.constant 0 : index
      %174 = vector.load %arg12[%c0_110, %c0_111, %c0_112] : memref<4x8x1xf32, #tpu.memory_space<vmem>>, vector<4x8x1xf32>
      tpu.vector_store %arg12[%c0_110, %c0_111, %c0_112], %173 {strides = array<i32>} : memref<4x8x1xf32, #tpu.memory_space<vmem>>, vector<4x8x1xf32>,
      %cst_113 = arith.constant 0.000000e+00 : f32
      %175 = vector.broadcast %cst_113 : f32 to vector<4x8x8xf32>
      %c0_114 = arith.constant 0 : index
      %c0_115 = arith.constant 0 : index
      %c0_116 = arith.constant 0 : index
      %176 = vector.load %arg13[%c0_114, %c0_115, %c0_116] : memref<4x8x8xf32, #tpu.memory_space<vmem>>, vector<4x8x8xf32>
      tpu.vector_store %arg13[%c0_114, %c0_115, %c0_116], %175 {strides = array<i32>} : memref<4x8x8xf32, #tpu.memory_space<vmem>>, vector<4x8x8xf32>,
    } else {
    }
    %c0 = arith.constant 0 : index
    %c0_1 = arith.constant 0 : index
    %c0_2 = arith.constant 0 : index
    %3 = vector.load %arg3[%c0, %c0_1, %c0_2] : memref<1x8x32xf32, #tpu.memory_space<vmem>>, vector<1x8x32xf32>
    %4 = vector.shape_cast %3 : vector<1x8x32xf32> to vector<8x32xf32>
    %c0_3 = arith.constant 0 : index
    %c0_4 = arith.constant 0 : index
    %c0_5 = arith.constant 0 : index
    %5 = vector.load %arg4[%c0_3, %c0_4, %c0_5] : memref<1x8x32xf32, #tpu.memory_space<vmem>>, vector<1x8x32xf32>
    %6 = vector.shape_cast %5 : vector<1x8x32xf32> to vector<8x32xf32>
    %c0_6 = arith.constant 0 : index
    %c0_7 = arith.constant 0 : index
    %c0_8 = arith.constant 0 : index
    %7 = vector.load %arg5[%c0_6, %c0_7, %c0_8] : memref<1x8x32xf32, #tpu.memory_space<vmem>>, vector<1x8x32xf32>
    %8 = vector.shape_cast %7 : vector<1x8x32xf32> to vector<8x32xf32>
    %c0_9 = arith.constant 0 : index
    %c0_10 = arith.constant 0 : index
    %c0_11 = arith.constant 0 : index
    %9 = vector.load %arg6[%c0_9, %c0_10, %c0_11] : memref<1x8x8xf32, #tpu.memory_space<vmem>>, vector<1x8x8xf32>
    %10 = vector.shape_cast %9 : vector<1x8x8xf32> to vector<8x8xf32>
    %cst = arith.constant 0.000000e+00 : f32
    %11 = vector.broadcast %cst : f32 to vector<8x8xf32>
    %12 = arith.cmpf oeq, %10, %11 : vector<8x8xf32>
    %cst_12 = arith.constant -1.000000e+09 : f32
    %cst_13 = arith.constant 0.000000e+00 : f32
    %13 = vector.broadcast %cst_12 : f32 to vector<8x8xf32>
    %14 = vector.broadcast %cst_13 : f32 to vector<8x8xf32>
    %15 = arith.select %12, %13, %14 : vector<8x8xi1>, vector<8x8xf32>
    %16 = vector.extract_strided_slice %4 {offsets = [0, 0], sizes = [8, 8], strides = [1, 1]} : vector<8x32xf32> to vector<8x8xf32>
    %17 = vector.extract_strided_slice %6 {offsets = [0, 0], sizes = [8, 8], strides = [1, 1]} : vector<8x32xf32> to vector<8x8xf32>
    %18 = vector.extract_strided_slice %8 {offsets = [0, 0], sizes = [8, 8], strides = [1, 1]} : vector<8x32xf32> to vector<8x8xf32>
    %cst_14 = arith.constant dense<0.000000e+00> : vector<8x8xf32>
    %19 = tpu.matmul %16, %17, %cst_14 {dimension_numbers = #tpu.dot_dimension_numbers<[1], [1], [0], [0], [0, 0, 1, 0], [], []>} : vector<8x8xf32>, vector<8x8xf32>, vector<8x8xf32> -> vector<8x8xf32>
    %cst_15 = arith.constant 0.353553385 : f32
    %20 = vector.broadcast %cst_15 : f32 to vector<8x8xf32>
    %21 = arith.mulf %19, %20 : vector<8x8xf32>
    %22 = arith.addf %21, %15 : vector<8x8xf32>
    %c0_16 = arith.constant 0 : index
    %c0_17 = arith.constant 0 : index
    %c0_18 = arith.constant 0 : index
    %23 = vector.load %arg11[%c0_16, %c0_17, %c0_18] : memref<4x8x1xf32, #tpu.memory_space<vmem>>, vector<1x8x1xf32>
    %24 = vector.shape_cast %23 : vector<1x8x1xf32> to vector<8x1xf32>
    %cst_19 = arith.constant dense<0xFF800000> : vector<8xf32>
    %25 = vector.multi_reduction <maximumf>, %22, %cst_19 [1] : vector<8x8xf32> to vector<8xf32>
    %26 = vector.shape_cast %25 : vector<8xf32> to vector<8x1xf32>
    %27 = arith.maximumf %24, %26 : vector<8x1xf32>
    %28 = arith.subf %24, %27 : vector<8x1xf32>
    %29 = math.exp %28 : vector<8x1xf32>
    %30 = vector.broadcast %27 : vector<8x1xf32> to vector<8x8xf32>
    %31 = arith.subf %22, %30 : vector<8x8xf32>
    %32 = math.exp %31 : vector<8x8xf32>
    %c0_20 = arith.constant 0 : index
    %c0_21 = arith.constant 0 : index
    %c0_22 = arith.constant 0 : index
    %33 = vector.load %arg12[%c0_20, %c0_21, %c0_22] : memref<4x8x1xf32, #tpu.memory_space<vmem>>, vector<1x8x1xf32>
    %34 = vector.shape_cast %33 : vector<1x8x1xf32> to vector<8x1xf32>
    %35 = arith.mulf %29, %34 : vector<8x1xf32>
    %cst_23 = arith.constant dense<0.000000e+00> : vector<8xf32>
    %36 = vector.multi_reduction <add>, %32, %cst_23 [1] : vector<8x8xf32> to vector<8xf32>
    %37 = vector.shape_cast %36 : vector<8xf32> to vector<8x1xf32>
    %38 = arith.addf %35, %37 : vector<8x1xf32>
    %c0_24 = arith.constant 0 : index
    %c0_25 = arith.constant 0 : index
    %c0_26 = arith.constant 0 : index
    %39 = vector.load %arg12[%c0_24, %c0_25, %c0_26] : memref<4x8x1xf32, #tpu.memory_space<vmem>>, vector<1x8x1xf32>
    %40 = vector.shape_cast %39 : vector<1x8x1xf32> to vector<8x1xf32>
    %41 = vector.shape_cast %38 : vector<8x1xf32> to vector<1x8x1xf32>
    tpu.vector_store %arg12[%c0_24, %c0_25, %c0_26], %41 {strides = array<i32>} : memref<4x8x1xf32, #tpu.memory_space<vmem>>, vector<1x8x1xf32>,
    %c0_27 = arith.constant 0 : index
    %c0_28 = arith.constant 0 : index
    %c0_29 = arith.constant 0 : index
    %42 = vector.load %arg13[%c0_27, %c0_28, %c0_29] : memref<4x8x8xf32, #tpu.memory_space<vmem>>, vector<1x8x8xf32>
    %43 = vector.shape_cast %42 : vector<1x8x8xf32> to vector<8x8xf32>
    %44 = vector.broadcast %29 : vector<8x1xf32> to vector<8x8xf32>
    %45 = arith.mulf %44, %43 : vector<8x8xf32>
    %cst_30 = arith.constant dense<0.000000e+00> : vector<8x8xf32>
    %46 = tpu.matmul %32, %18, %cst_30 {dimension_numbers = #tpu.dot_dimension_numbers<[1], [0], [0], [1], [0, 0, 1, 1], [], []>} : vector<8x8xf32>, vector<8x8xf32>, vector<8x8xf32> -> vector<8x8xf32>
    %47 = arith.addf %45, %46 : vector<8x8xf32>
    %c0_31 = arith.constant 0 : index
    %c0_32 = arith.constant 0 : index
    %c0_33 = arith.constant 0 : index
    %48 = vector.load %arg13[%c0_31, %c0_32, %c0_33] : memref<4x8x8xf32, #tpu.memory_space<vmem>>, vector<1x8x8xf32>
    %49 = vector.shape_cast %48 : vector<1x8x8xf32> to vector<8x8xf32>
    %50 = vector.shape_cast %47 : vector<8x8xf32> to vector<1x8x8xf32>
    tpu.vector_store %arg13[%c0_31, %c0_32, %c0_33], %50 {strides = array<i32>} : memref<4x8x8xf32, #tpu.memory_space<vmem>>, vector<1x8x8xf32>,
    %c0_34 = arith.constant 0 : index
    %c0_35 = arith.constant 0 : index
    %c0_36 = arith.constant 0 : index
    %51 = vector.load %arg11[%c0_34, %c0_35, %c0_36] : memref<4x8x1xf32, #tpu.memory_space<vmem>>, vector<1x8x1xf32>
    %52 = vector.shape_cast %51 : vector<1x8x1xf32> to vector<8x1xf32>
    %53 = vector.shape_cast %27 : vector<8x1xf32> to vector<1x8x1xf32>
    tpu.vector_store %arg11[%c0_34, %c0_35, %c0_36], %53 {strides = array<i32>} : memref<4x8x1xf32, #tpu.memory_space<vmem>>, vector<1x8x1xf32>,
    %54 = vector.extract_strided_slice %4 {offsets = [0, 8], sizes = [8, 8], strides = [1, 1]} : vector<8x32xf32> to vector<8x8xf32>
    %55 = vector.extract_strided_slice %6 {offsets = [0, 8], sizes = [8, 8], strides = [1, 1]} : vector<8x32xf32> to vector<8x8xf32>
    %56 = vector.extract_strided_slice %8 {offsets = [0, 8], sizes = [8, 8], strides = [1, 1]} : vector<8x32xf32> to vector<8x8xf32>
    %cst_37 = arith.constant dense<0.000000e+00> : vector<8x8xf32>
    %57 = tpu.matmul %54, %55, %cst_37 {dimension_numbers = #tpu.dot_dimension_numbers<[1], [1], [0], [0], [0, 0, 1, 0], [], []>} : vector<8x8xf32>, vector<8x8xf32>, vector<8x8xf32> -> vector<8x8xf32>
    %cst_38 = arith.constant 0.353553385 : f32
    %58 = vector.broadcast %cst_38 : f32 to vector<8x8xf32>
    %59 = arith.mulf %57, %58 : vector<8x8xf32>
    %60 = arith.addf %59, %15 : vector<8x8xf32>
    %c1 = arith.constant 1 : index
    %c0_39 = arith.constant 0 : index
    %c0_40 = arith.constant 0 : index
    %61 = vector.load %arg11[%c1, %c0_39, %c0_40] : memref<4x8x1xf32, #tpu.memory_space<vmem>>, vector<1x8x1xf32>
    %62 = vector.shape_cast %61 : vector<1x8x1xf32> to vector<8x1xf32>
    %cst_41 = arith.constant dense<0xFF800000> : vector<8xf32>
    %63 = vector.multi_reduction <maximumf>, %60, %cst_41 [1] : vector<8x8xf32> to vector<8xf32>
    %64 = vector.shape_cast %63 : vector<8xf32> to vector<8x1xf32>
    %65 = arith.maximumf %62, %64 : vector<8x1xf32>
    %66 = arith.subf %62, %65 : vector<8x1xf32>
    %67 = math.exp %66 : vector<8x1xf32>
    %68 = vector.broadcast %65 : vector<8x1xf32> to vector<8x8xf32>
    %69 = arith.subf %60, %68 : vector<8x8xf32>
    %70 = math.exp %69 : vector<8x8xf32>
    %c1_42 = arith.constant 1 : index
    %c0_43 = arith.constant 0 : index
    %c0_44 = arith.constant 0 : index
    %71 = vector.load %arg12[%c1_42, %c0_43, %c0_44] : memref<4x8x1xf32, #tpu.memory_space<vmem>>, vector<1x8x1xf32>
    %72 = vector.shape_cast %71 : vector<1x8x1xf32> to vector<8x1xf32>
    %73 = arith.mulf %67, %72 : vector<8x1xf32>
    %cst_45 = arith.constant dense<0.000000e+00> : vector<8xf32>
    %74 = vector.multi_reduction <add>, %70, %cst_45 [1] : vector<8x8xf32> to vector<8xf32>
    %75 = vector.shape_cast %74 : vector<8xf32> to vector<8x1xf32>
    %76 = arith.addf %73, %75 : vector<8x1xf32>
    %c1_46 = arith.constant 1 : index
    %c0_47 = arith.constant 0 : index
    %c0_48 = arith.constant 0 : index
    %77 = vector.load %arg12[%c1_46, %c0_47, %c0_48] : memref<4x8x1xf32, #tpu.memory_space<vmem>>, vector<1x8x1xf32>
    %78 = vector.shape_cast %77 : vector<1x8x1xf32> to vector<8x1xf32>
    %79 = vector.shape_cast %76 : vector<8x1xf32> to vector<1x8x1xf32>
    tpu.vector_store %arg12[%c1_46, %c0_47, %c0_48], %79 {strides = array<i32>} : memref<4x8x1xf32, #tpu.memory_space<vmem>>, vector<1x8x1xf32>,
    %c1_49 = arith.constant 1 : index
    %c0_50 = arith.constant 0 : index
    %c0_51 = arith.constant 0 : index
    %80 = vector.load %arg13[%c1_49, %c0_50, %c0_51] : memref<4x8x8xf32, #tpu.memory_space<vmem>>, vector<1x8x8xf32>
    %81 = vector.shape_cast %80 : vector<1x8x8xf32> to vector<8x8xf32>
    %82 = vector.broadcast %67 : vector<8x1xf32> to vector<8x8xf32>
    %83 = arith.mulf %82, %81 : vector<8x8xf32>
    %cst_52 = arith.constant dense<0.000000e+00> : vector<8x8xf32>
    %84 = tpu.matmul %70, %56, %cst_52 {dimension_numbers = #tpu.dot_dimension_numbers<[1], [0], [0], [1], [0, 0, 1, 1], [], []>} : vector<8x8xf32>, vector<8x8xf32>, vector<8x8xf32> -> vector<8x8xf32>
    %85 = arith.addf %83, %84 : vector<8x8xf32>
    %c1_53 = arith.constant 1 : index
    %c0_54 = arith.constant 0 : index
    %c0_55 = arith.constant 0 : index
    %86 = vector.load %arg13[%c1_53, %c0_54, %c0_55] : memref<4x8x8xf32, #tpu.memory_space<vmem>>, vector<1x8x8xf32>
    %87 = vector.shape_cast %86 : vector<1x8x8xf32> to vector<8x8xf32>
    %88 = vector.shape_cast %85 : vector<8x8xf32> to vector<1x8x8xf32>
    tpu.vector_store %arg13[%c1_53, %c0_54, %c0_55], %88 {strides = array<i32>} : memref<4x8x8xf32, #tpu.memory_space<vmem>>, vector<1x8x8xf32>,
    %c1_56 = arith.constant 1 : index
    %c0_57 = arith.constant 0 : index
    %c0_58 = arith.constant 0 : index
    %89 = vector.load %arg11[%c1_56, %c0_57, %c0_58] : memref<4x8x1xf32, #tpu.memory_space<vmem>>, vector<1x8x1xf32>
    %90 = vector.shape_cast %89 : vector<1x8x1xf32> to vector<8x1xf32>
    %91 = vector.shape_cast %65 : vector<8x1xf32> to vector<1x8x1xf32>
    tpu.vector_store %arg11[%c1_56, %c0_57, %c0_58], %91 {strides = array<i32>} : memref<4x8x1xf32, #tpu.memory_space<vmem>>, vector<1x8x1xf32>,
    %92 = vector.extract_strided_slice %4 {offsets = [0, 16], sizes = [8, 8], strides = [1, 1]} : vector<8x32xf32> to vector<8x8xf32>
    %93 = vector.extract_strided_slice %6 {offsets = [0, 16], sizes = [8, 8], strides = [1, 1]} : vector<8x32xf32> to vector<8x8xf32>
    %94 = vector.extract_strided_slice %8 {offsets = [0, 16], sizes = [8, 8], strides = [1, 1]} : vector<8x32xf32> to vector<8x8xf32>
    %cst_59 = arith.constant dense<0.000000e+00> : vector<8x8xf32>
    %95 = tpu.matmul %92, %93, %cst_59 {dimension_numbers = #tpu.dot_dimension_numbers<[1], [1], [0], [0], [0, 0, 1, 0], [], []>} : vector<8x8xf32>, vector<8x8xf32>, vector<8x8xf32> -> vector<8x8xf32>
    %cst_60 = arith.constant 0.353553385 : f32
    %96 = vector.broadcast %cst_60 : f32 to vector<8x8xf32>
    %97 = arith.mulf %95, %96 : vector<8x8xf32>
    %98 = arith.addf %97, %15 : vector<8x8xf32>
    %c2 = arith.constant 2 : index
    %c0_61 = arith.constant 0 : index
    %c0_62 = arith.constant 0 : index
    %99 = vector.load %arg11[%c2, %c0_61, %c0_62] : memref<4x8x1xf32, #tpu.memory_space<vmem>>, vector<1x8x1xf32>
    %100 = vector.shape_cast %99 : vector<1x8x1xf32> to vector<8x1xf32>
    %cst_63 = arith.constant dense<0xFF800000> : vector<8xf32>
    %101 = vector.multi_reduction <maximumf>, %98, %cst_63 [1] : vector<8x8xf32> to vector<8xf32>
    %102 = vector.shape_cast %101 : vector<8xf32> to vector<8x1xf32>
    %103 = arith.maximumf %100, %102 : vector<8x1xf32>
    %104 = arith.subf %100, %103 : vector<8x1xf32>
    %105 = math.exp %104 : vector<8x1xf32>
    %106 = vector.broadcast %103 : vector<8x1xf32> to vector<8x8xf32>
    %107 = arith.subf %98, %106 : vector<8x8xf32>
    %108 = math.exp %107 : vector<8x8xf32>
    %c2_64 = arith.constant 2 : index
    %c0_65 = arith.constant 0 : index
    %c0_66 = arith.constant 0 : index
    %109 = vector.load %arg12[%c2_64, %c0_65, %c0_66] : memref<4x8x1xf32, #tpu.memory_space<vmem>>, vector<1x8x1xf32>
    %110 = vector.shape_cast %109 : vector<1x8x1xf32> to vector<8x1xf32>
    %111 = arith.mulf %105, %110 : vector<8x1xf32>
    %cst_67 = arith.constant dense<0.000000e+00> : vector<8xf32>
    %112 = vector.multi_reduction <add>, %108, %cst_67 [1] : vector<8x8xf32> to vector<8xf32>
    %113 = vector.shape_cast %112 : vector<8xf32> to vector<8x1xf32>
    %114 = arith.addf %111, %113 : vector<8x1xf32>
    %c2_68 = arith.constant 2 : index
    %c0_69 = arith.constant 0 : index
    %c0_70 = arith.constant 0 : index
    %115 = vector.load %arg12[%c2_68, %c0_69, %c0_70] : memref<4x8x1xf32, #tpu.memory_space<vmem>>, vector<1x8x1xf32>
    %116 = vector.shape_cast %115 : vector<1x8x1xf32> to vector<8x1xf32>
    %117 = vector.shape_cast %114 : vector<8x1xf32> to vector<1x8x1xf32>
    tpu.vector_store %arg12[%c2_68, %c0_69, %c0_70], %117 {strides = array<i32>} : memref<4x8x1xf32, #tpu.memory_space<vmem>>, vector<1x8x1xf32>,
    %c2_71 = arith.constant 2 : index
    %c0_72 = arith.constant 0 : index
    %c0_73 = arith.constant 0 : index
    %118 = vector.load %arg13[%c2_71, %c0_72, %c0_73] : memref<4x8x8xf32, #tpu.memory_space<vmem>>, vector<1x8x8xf32>
    %119 = vector.shape_cast %118 : vector<1x8x8xf32> to vector<8x8xf32>
    %120 = vector.broadcast %105 : vector<8x1xf32> to vector<8x8xf32>
    %121 = arith.mulf %120, %119 : vector<8x8xf32>
    %cst_74 = arith.constant dense<0.000000e+00> : vector<8x8xf32>
    %122 = tpu.matmul %108, %94, %cst_74 {dimension_numbers = #tpu.dot_dimension_numbers<[1], [0], [0], [1], [0, 0, 1, 1], [], []>} : vector<8x8xf32>, vector<8x8xf32>, vector<8x8xf32> -> vector<8x8xf32>
    %123 = arith.addf %121, %122 : vector<8x8xf32>
    %c2_75 = arith.constant 2 : index
    %c0_76 = arith.constant 0 : index
    %c0_77 = arith.constant 0 : index
    %124 = vector.load %arg13[%c2_75, %c0_76, %c0_77] : memref<4x8x8xf32, #tpu.memory_space<vmem>>, vector<1x8x8xf32>
    %125 = vector.shape_cast %124 : vector<1x8x8xf32> to vector<8x8xf32>
    %126 = vector.shape_cast %123 : vector<8x8xf32> to vector<1x8x8xf32>
    tpu.vector_store %arg13[%c2_75, %c0_76, %c0_77], %126 {strides = array<i32>} : memref<4x8x8xf32, #tpu.memory_space<vmem>>, vector<1x8x8xf32>,
    %c2_78 = arith.constant 2 : index
    %c0_79 = arith.constant 0 : index
    %c0_80 = arith.constant 0 : index
    %127 = vector.load %arg11[%c2_78, %c0_79, %c0_80] : memref<4x8x1xf32, #tpu.memory_space<vmem>>, vector<1x8x1xf32>
    %128 = vector.shape_cast %127 : vector<1x8x1xf32> to vector<8x1xf32>
    %129 = vector.shape_cast %103 : vector<8x1xf32> to vector<1x8x1xf32>
    tpu.vector_store %arg11[%c2_78, %c0_79, %c0_80], %129 {strides = array<i32>} : memref<4x8x1xf32, #tpu.memory_space<vmem>>, vector<1x8x1xf32>,
    %130 = vector.extract_strided_slice %4 {offsets = [0, 24], sizes = [8, 8], strides = [1, 1]} : vector<8x32xf32> to vector<8x8xf32>
    %131 = vector.extract_strided_slice %6 {offsets = [0, 24], sizes = [8, 8], strides = [1, 1]} : vector<8x32xf32> to vector<8x8xf32>
    %132 = vector.extract_strided_slice %8 {offsets = [0, 24], sizes = [8, 8], strides = [1, 1]} : vector<8x32xf32> to vector<8x8xf32>
    %cst_81 = arith.constant dense<0.000000e+00> : vector<8x8xf32>
    %133 = tpu.matmul %130, %131, %cst_81 {dimension_numbers = #tpu.dot_dimension_numbers<[1], [1], [0], [0], [0, 0, 1, 0], [], []>} : vector<8x8xf32>, vector<8x8xf32>, vector<8x8xf32> -> vector<8x8xf32>
    %cst_82 = arith.constant 0.353553385 : f32
    %134 = vector.broadcast %cst_82 : f32 to vector<8x8xf32>
    %135 = arith.mulf %133, %134 : vector<8x8xf32>
    %136 = arith.addf %135, %15 : vector<8x8xf32>
    %c3 = arith.constant 3 : index
    %c0_83 = arith.constant 0 : index
    %c0_84 = arith.constant 0 : index
    %137 = vector.load %arg11[%c3, %c0_83, %c0_84] : memref<4x8x1xf32, #tpu.memory_space<vmem>>, vector<1x8x1xf32>
    %138 = vector.shape_cast %137 : vector<1x8x1xf32> to vector<8x1xf32>
    %cst_85 = arith.constant dense<0xFF800000> : vector<8xf32>
    %139 = vector.multi_reduction <maximumf>, %136, %cst_85 [1] : vector<8x8xf32> to vector<8xf32>
    %140 = vector.shape_cast %139 : vector<8xf32> to vector<8x1xf32>
    %141 = arith.maximumf %138, %140 : vector<8x1xf32>
    %142 = arith.subf %138, %141 : vector<8x1xf32>
    %143 = math.exp %142 : vector<8x1xf32>
    %144 = vector.broadcast %141 : vector<8x1xf32> to vector<8x8xf32>
    %145 = arith.subf %136, %144 : vector<8x8xf32>
    %146 = math.exp %145 : vector<8x8xf32>
    %c3_86 = arith.constant 3 : index
    %c0_87 = arith.constant 0 : index
    %c0_88 = arith.constant 0 : index
    %147 = vector.load %arg12[%c3_86, %c0_87, %c0_88] : memref<4x8x1xf32, #tpu.memory_space<vmem>>, vector<1x8x1xf32>
    %148 = vector.shape_cast %147 : vector<1x8x1xf32> to vector<8x1xf32>
    %149 = arith.mulf %143, %148 : vector<8x1xf32>
    %cst_89 = arith.constant dense<0.000000e+00> : vector<8xf32>
    %150 = vector.multi_reduction <add>, %146, %cst_89 [1] : vector<8x8xf32> to vector<8xf32>
    %151 = vector.shape_cast %150 : vector<8xf32> to vector<8x1xf32>
    %152 = arith.addf %149, %151 : vector<8x1xf32>
    %c3_90 = arith.constant 3 : index
    %c0_91 = arith.constant 0 : index
    %c0_92 = arith.constant 0 : index
    %153 = vector.load %arg12[%c3_90, %c0_91, %c0_92] : memref<4x8x1xf32, #tpu.memory_space<vmem>>, vector<1x8x1xf32>
    %154 = vector.shape_cast %153 : vector<1x8x1xf32> to vector<8x1xf32>
    %155 = vector.shape_cast %152 : vector<8x1xf32> to vector<1x8x1xf32>
    tpu.vector_store %arg12[%c3_90, %c0_91, %c0_92], %155 {strides = array<i32>} : memref<4x8x1xf32, #tpu.memory_space<vmem>>, vector<1x8x1xf32>,
    %c3_93 = arith.constant 3 : index
    %c0_94 = arith.constant 0 : index
    %c0_95 = arith.constant 0 : index
    %156 = vector.load %arg13[%c3_93, %c0_94, %c0_95] : memref<4x8x8xf32, #tpu.memory_space<vmem>>, vector<1x8x8xf32>
    %157 = vector.shape_cast %156 : vector<1x8x8xf32> to vector<8x8xf32>
    %158 = vector.broadcast %143 : vector<8x1xf32> to vector<8x8xf32>
    %159 = arith.mulf %158, %157 : vector<8x8xf32>
    %cst_96 = arith.constant dense<0.000000e+00> : vector<8x8xf32>
    %160 = tpu.matmul %146, %132, %cst_96 {dimension_numbers = #tpu.dot_dimension_numbers<[1], [0], [0], [1], [0, 0, 1, 1], [], []>} : vector<8x8xf32>, vector<8x8xf32>, vector<8x8xf32> -> vector<8x8xf32>
    %161 = arith.addf %159, %160 : vector<8x8xf32>
    %c3_97 = arith.constant 3 : index
    %c0_98 = arith.constant 0 : index
    %c0_99 = arith.constant 0 : index
    %162 = vector.load %arg13[%c3_97, %c0_98, %c0_99] : memref<4x8x8xf32, #tpu.memory_space<vmem>>, vector<1x8x8xf32>
    %163 = vector.shape_cast %162 : vector<1x8x8xf32> to vector<8x8xf32>
    %164 = vector.shape_cast %161 : vector<8x8xf32> to vector<1x8x8xf32>
    tpu.vector_store %arg13[%c3_97, %c0_98, %c0_99], %164 {strides = array<i32>} : memref<4x8x8xf32, #tpu.memory_space<vmem>>, vector<1x8x8xf32>,
    %c3_100 = arith.constant 3 : index
    %c0_101 = arith.constant 0 : index
    %c0_102 = arith.constant 0 : index
    %165 = vector.load %arg11[%c3_100, %c0_101, %c0_102] : memref<4x8x1xf32, #tpu.memory_space<vmem>>, vector<1x8x1xf32>
    %166 = vector.shape_cast %165 : vector<1x8x1xf32> to vector<8x1xf32>
    %167 = vector.shape_cast %141 : vector<8x1xf32> to vector<1x8x1xf32>
    tpu.vector_store %arg11[%c3_100, %c0_101, %c0_102], %167 {strides = array<i32>} : memref<4x8x1xf32, #tpu.memory_space<vmem>>, vector<1x8x1xf32>,
    %c0_i32_103 = arith.constant 0 : i32
    %168 = arith.cmpi eq, %arg2, %c0_i32_103 : i32
    %169 = arith.extui %168 : i1 to i32
    %c0_i32_104 = arith.constant 0 : i32
    %170 = arith.cmpi ne, %169, %c0_i32_104 : i32
    scf.if %170 {
      %c0_105 = arith.constant 0 : index
      %c0_106 = arith.constant 0 : index
      %c0_107 = arith.constant 0 : index
      %171 = vector.load %arg12[%c0_105, %c0_106, %c0_107] : memref<4x8x1xf32, #tpu.memory_space<vmem>>, vector<1x8x1xf32>
      %172 = vector.shape_cast %171 : vector<1x8x1xf32> to vector<8x1xf32>
      %173 = tpu.reciprocal %172 {approx = true} : vector<8x1xf32> -> vector<8x1xf32>
      %c0_108 = arith.constant 0 : index
      %c0_109 = arith.constant 0 : index
      %c0_110 = arith.constant 0 : index
      %174 = vector.load %arg13[%c0_108, %c0_109, %c0_110] : memref<4x8x8xf32, #tpu.memory_space<vmem>>, vector<1x8x8xf32>
      %175 = vector.shape_cast %174 : vector<1x8x8xf32> to vector<8x8xf32>
      %176 = vector.broadcast %173 : vector<8x1xf32> to vector<8x8xf32>
      %177 = arith.mulf %175, %176 : vector<8x8xf32>
      %c1_111 = arith.constant 1 : index
      %c0_112 = arith.constant 0 : index
      %c0_113 = arith.constant 0 : index
      %178 = vector.load %arg12[%c1_111, %c0_112, %c0_113] : memref<4x8x1xf32, #tpu.memory_space<vmem>>, vector<1x8x1xf32>
      %179 = vector.shape_cast %178 : vector<1x8x1xf32> to vector<8x1xf32>
      %180 = tpu.reciprocal %179 {approx = true} : vector<8x1xf32> -> vector<8x1xf32>
      %c1_114 = arith.constant 1 : index
      %c0_115 = arith.constant 0 : index
      %c0_116 = arith.constant 0 : index
      %181 = vector.load %arg13[%c1_114, %c0_115, %c0_116] : memref<4x8x8xf32, #tpu.memory_space<vmem>>, vector<1x8x8xf32>
      %182 = vector.shape_cast %181 : vector<1x8x8xf32> to vector<8x8xf32>
      %183 = vector.broadcast %180 : vector<8x1xf32> to vector<8x8xf32>
      %184 = arith.mulf %182, %183 : vector<8x8xf32>
      %c2_117 = arith.constant 2 : index
      %c0_118 = arith.constant 0 : index
      %c0_119 = arith.constant 0 : index
      %185 = vector.load %arg12[%c2_117, %c0_118, %c0_119] : memref<4x8x1xf32, #tpu.memory_space<vmem>>, vector<1x8x1xf32>
      %186 = vector.shape_cast %185 : vector<1x8x1xf32> to vector<8x1xf32>
      %187 = tpu.reciprocal %186 {approx = true} : vector<8x1xf32> -> vector<8x1xf32>
      %c2_120 = arith.constant 2 : index
      %c0_121 = arith.constant 0 : index
      %c0_122 = arith.constant 0 : index
      %188 = vector.load %arg13[%c2_120, %c0_121, %c0_122] : memref<4x8x8xf32, #tpu.memory_space<vmem>>, vector<1x8x8xf32>
      %189 = vector.shape_cast %188 : vector<1x8x8xf32> to vector<8x8xf32>
      %190 = vector.broadcast %187 : vector<8x1xf32> to vector<8x8xf32>
      %191 = arith.mulf %189, %190 : vector<8x8xf32>
      %c3_123 = arith.constant 3 : index
      %c0_124 = arith.constant 0 : index
      %c0_125 = arith.constant 0 : index
      %192 = vector.load %arg12[%c3_123, %c0_124, %c0_125] : memref<4x8x1xf32, #tpu.memory_space<vmem>>, vector<1x8x1xf32>
      %193 = vector.shape_cast %192 : vector<1x8x1xf32> to vector<8x1xf32>
      %194 = tpu.reciprocal %193 {approx = true} : vector<8x1xf32> -> vector<8x1xf32>
      %c3_126 = arith.constant 3 : index
      %c0_127 = arith.constant 0 : index
      %c0_128 = arith.constant 0 : index
      %195 = vector.load %arg13[%c3_126, %c0_127, %c0_128] : memref<4x8x8xf32, #tpu.memory_space<vmem>>, vector<1x8x8xf32>
      %196 = vector.shape_cast %195 : vector<1x8x8xf32> to vector<8x8xf32>
      %197 = vector.broadcast %194 : vector<8x1xf32> to vector<8x8xf32>
      %198 = arith.mulf %196, %197 : vector<8x8xf32>
      %199 = tpu.concatenate %177, %184, %191, %198 in 1 : vector<8x8xf32>, vector<8x8xf32>, vector<8x8xf32>, vector<8x8xf32> -> vector<8x32xf32>
      %c0_129 = arith.constant 0 : index
      %c0_130 = arith.constant 0 : index
      %200 = vector.load %arg8[%c0_129, %c0_130] : memref<32x32xf32, #tpu.memory_space<vmem>>, vector<32x32xf32>
      %cst_131 = arith.constant dense<0.000000e+00> : vector<8x32xf32>
      %201 = tpu.matmul %199, %200, %cst_131 {dimension_numbers = #tpu.dot_dimension_numbers<[1], [0], [0], [1], [0, 0, 1, 1], [], []>} : vector<8x32xf32>, vector<32x32xf32>, vector<8x32xf32> -> vector<8x32xf32>
      %c0_132 = arith.constant 0 : index
      %c0_133 = arith.constant 0 : index
      %202 = vector.load %arg9[%c0_132, %c0_133] : memref<1x32xf32, #tpu.memory_space<vmem>>, vector<1x32xf32>
      %203 = vector.broadcast %202 : vector<1x32xf32> to vector<8x32xf32>
      %204 = arith.addf %201, %203 : vector<8x32xf32>
      %c0_134 = arith.constant 0 : index
      %c0_135 = arith.constant 0 : index
      %c0_136 = arith.constant 0 : index
      %205 = vector.load %arg7[%c0_134, %c0_135, %c0_136] : memref<1x8x32xf32, #tpu.memory_space<vmem>>, vector<1x8x32xf32>
      %206 = vector.shape_cast %205 : vector<1x8x32xf32> to vector<8x32xf32>
      %207 = arith.addf %204, %206 : vector<8x32xf32>
      %c0_137 = arith.constant 0 : index
      %c0_138 = arith.constant 0 : index
      %c0_139 = arith.constant 0 : index
      %208 = vector.load %arg10[%c0_137, %c0_138, %c0_139] : memref<1x8x32xf32, #tpu.memory_space<vmem>>, vector<1x8x32xf32>
      %209 = vector.shape_cast %208 : vector<1x8x32xf32> to vector<8x32xf32>
      %210 = vector.shape_cast %207 : vector<8x32xf32> to vector<1x8x32xf32>
      tpu.vector_store %arg10[%c0_137, %c0_138, %c0_139], %210 {strides = array<i32>} : memref<1x8x32xf32, #tpu.memory_space<vmem>>, vector<1x8x32xf32>,
    } else {
    }
    return
  }
  func.func @transform_0(%arg0: i32, %arg1: i32, %arg2: i32) -> (i32, i32, i32) {
    %c0_i32 = arith.constant 0 : i32
    %c0_i32_0 = arith.constant 0 : i32
    return %arg0, %arg1, %c0_i32 : i32, i32, i32
  }
  func.func @transform_1(%arg0: i32, %arg1: i32, %arg2: i32) -> (i32, i32, i32) {
    %c0_i32 = arith.constant 0 : i32
    %c0_i32_0 = arith.constant 0 : i32
    return %arg0, %arg2, %c0_i32 : i32, i32, i32
  }
  func.func @transform_2(%arg0: i32, %arg1: i32, %arg2: i32) -> (i32, i32, i32) {
    %c0_i32 = arith.constant 0 : i32
    %c0_i32_0 = arith.constant 0 : i32
    return %arg0, %arg2, %c0_i32 : i32, i32, i32
  }
  func.func @transform_3(%arg0: i32, %arg1: i32, %arg2: i32) -> (i32, i32, i32) {
    %c0_i32 = arith.constant 0 : i32
    return %arg0, %arg1, %arg2 : i32, i32, i32
  }
  func.func @transform_4(%arg0: i32, %arg1: i32, %arg2: i32) -> (i32, i32, i32) {
    %c0_i32 = arith.constant 0 : i32
    %c0_i32_0 = arith.constant 0 : i32
    return %arg0, %arg1, %c0_i32 : i32, i32, i32
  }
  func.func @transform_5(%arg0: i32, %arg1: i32, %arg2: i32) -> (i32, i32) {
    %c0_i32 = arith.constant 0 : i32
    %c0_i32_0 = arith.constant 0 : i32
    %c0_i32_1 = arith.constant 0 : i32
    return %c0_i32, %c0_i32_0 : i32, i32
  }
  func.func @transform_6(%arg0: i32, %arg1: i32, %arg2: i32) -> (i32, i32) {
    %c0_i32 = arith.constant 0 : i32
    %c0_i32_0 = arith.constant 0 : i32
    %c0_i32_1 = arith.constant 0 : i32
    return %c0_i32, %c0_i32_0 : i32, i32
  }
  func.func @transform_7(%arg0: i32, %arg1: i32, %arg2: i32) -> (i32, i32, i32) {
    %c0_i32 = arith.constant 0 : i32
    %c0_i32_0 = arith.constant 0 : i32
    return %arg0, %arg1, %c0_i32 : i32, i32, i32
  }
}

module attributes {stable_mosaic.version = 11 : i64} {
  func.func @kernel(%arg0: i32, %arg1: i32, %arg2: memref<16x32xf32, #tpu.memory_space<vmem>>, %arg3: memref<32x32xf32, #tpu.memory_space<vmem>>, %arg4: memref<32x32xf32, #tpu.memory_space<vmem>>, %arg5: memref<1x32xf32, #tpu.memory_space<vmem>>, %arg6: memref<1x32xf32, #tpu.memory_space<vmem>>, %arg7: memref<16x32xf32, #tpu.memory_space<vmem>>, %arg8: memref<16x32xf32, #tpu.memory_space<vmem>>) attributes {dimension_semantics = [#tpu.dimension_semantics<parallel>, #tpu.dimension_semantics<parallel>], iteration_bounds = array<i64: 1, 1>, scalar_prefetch = 0 : i64, scratch_operands = 0 : i64, tpu.core_type = #tpu.core_type<tc>, window_params = [{transform_indices = @transform_0, window_bounds = array<i64: 16, 32>}, {transform_indices = @transform_1, window_bounds = array<i64: 32, 32>}, {transform_indices = @transform_2, window_bounds = array<i64: 32, 32>}, {transform_indices = @transform_3, window_bounds = array<i64: 1, 32>}, {transform_indices = @transform_4, window_bounds = array<i64: 1, 32>}, {transform_indices = @transform_5, window_bounds = array<i64: 16, 32>}, {transform_indices = @transform_6, window_bounds = array<i64: 16, 32>}]} {
    %c0 = arith.constant 0 : index
    %c0_0 = arith.constant 0 : index
    %0 = vector.load %arg2[%c0, %c0_0] : memref<16x32xf32, #tpu.memory_space<vmem>>, vector<16x32xf32>
    %c0_1 = arith.constant 0 : index
    %c0_2 = arith.constant 0 : index
    %1 = vector.load %arg3[%c0_1, %c0_2] : memref<32x32xf32, #tpu.memory_space<vmem>>, vector<32x32xf32>
    %cst = arith.constant dense<0.000000e+00> : vector<16x32xf32>
    %2 = tpu.matmul %0, %1, %cst {dimension_numbers = #tpu.dot_dimension_numbers<[1], [0], [0], [1], [0, 0, 1, 1], [], []>} : vector<16x32xf32>, vector<32x32xf32>, vector<16x32xf32> -> vector<16x32xf32>
    %c0_3 = arith.constant 0 : index
    %c0_4 = arith.constant 0 : index
    %3 = vector.load %arg5[%c0_3, %c0_4] : memref<1x32xf32, #tpu.memory_space<vmem>>, vector<1x32xf32>
    %4 = vector.broadcast %3 : vector<1x32xf32> to vector<16x32xf32>
    %5 = arith.addf %2, %4 : vector<16x32xf32>
    %c0_5 = arith.constant 0 : index
    %c0_6 = arith.constant 0 : index
    %6 = vector.load %arg7[%c0_5, %c0_6] : memref<16x32xf32, #tpu.memory_space<vmem>>, vector<16x32xf32>
    tpu.vector_store %arg7[%c0_5, %c0_6], %5 {strides = array<i32>} : memref<16x32xf32, #tpu.memory_space<vmem>>, vector<16x32xf32>,
    %c0_7 = arith.constant 0 : index
    %c0_8 = arith.constant 0 : index
    %7 = vector.load %arg4[%c0_7, %c0_8] : memref<32x32xf32, #tpu.memory_space<vmem>>, vector<32x32xf32>
    %cst_9 = arith.constant dense<0.000000e+00> : vector<16x32xf32>
    %8 = tpu.matmul %0, %7, %cst_9 {dimension_numbers = #tpu.dot_dimension_numbers<[1], [0], [0], [1], [0, 0, 1, 1], [], []>} : vector<16x32xf32>, vector<32x32xf32>, vector<16x32xf32> -> vector<16x32xf32>
    %c0_10 = arith.constant 0 : index
    %c0_11 = arith.constant 0 : index
    %9 = vector.load %arg6[%c0_10, %c0_11] : memref<1x32xf32, #tpu.memory_space<vmem>>, vector<1x32xf32>
    %10 = vector.broadcast %9 : vector<1x32xf32> to vector<16x32xf32>
    %11 = arith.addf %8, %10 : vector<16x32xf32>
    %c0_12 = arith.constant 0 : index
    %c0_13 = arith.constant 0 : index
    %12 = vector.load %arg8[%c0_12, %c0_13] : memref<16x32xf32, #tpu.memory_space<vmem>>, vector<16x32xf32>
    tpu.vector_store %arg8[%c0_12, %c0_13], %11 {strides = array<i32>} : memref<16x32xf32, #tpu.memory_space<vmem>>, vector<16x32xf32>,
    return
  }
  func.func @transform_0(%arg0: i32, %arg1: i32) -> (i32, i32) {
    %c0_i32 = arith.constant 0 : i32
    %c0_i32_0 = arith.constant 0 : i32
    return %arg1, %c0_i32 : i32, i32
  }
  func.func @transform_1(%arg0: i32, %arg1: i32) -> (i32, i32) {
    %c0_i32 = arith.constant 0 : i32
    %c0_i32_0 = arith.constant 0 : i32
    return %c0_i32, %arg0 : i32, i32
  }
  func.func @transform_2(%arg0: i32, %arg1: i32) -> (i32, i32) {
    %c0_i32 = arith.constant 0 : i32
    %c0_i32_0 = arith.constant 0 : i32
    return %c0_i32, %arg0 : i32, i32
  }
  func.func @transform_3(%arg0: i32, %arg1: i32) -> (i32, i32) {
    %c0_i32 = arith.constant 0 : i32
    %c0_i32_0 = arith.constant 0 : i32
    return %c0_i32, %arg0 : i32, i32
  }
  func.func @transform_4(%arg0: i32, %arg1: i32) -> (i32, i32) {
    %c0_i32 = arith.constant 0 : i32
    %c0_i32_0 = arith.constant 0 : i32
    return %c0_i32, %arg0 : i32, i32
  }
  func.func @transform_5(%arg0: i32, %arg1: i32) -> (i32, i32) {
    %c0_i32 = arith.constant 0 : i32
    return %arg1, %arg0 : i32, i32
  }
  func.func @transform_6(%arg0: i32, %arg1: i32) -> (i32, i32) {
    %c0_i32 = arith.constant 0 : i32
    return %arg1, %arg0 : i32, i32
  }
}

module attributes {stable_mosaic.version = 11 : i64} {
  func.func @kernel(%arg0: i32, %arg1: i32, %arg2: memref<16x32xf32, #tpu.memory_space<vmem>>, %arg3: memref<1x32xf32, #tpu.memory_space<vmem>>, %arg4: memref<1x32xf32, #tpu.memory_space<vmem>>, %arg5: memref<32x32xf32, #tpu.memory_space<vmem>>, %arg6: memref<1x32xf32, #tpu.memory_space<vmem>>, %arg7: memref<16x32xf32, #tpu.memory_space<vmem>>) attributes {dimension_semantics = [#tpu.dimension_semantics<parallel>, #tpu.dimension_semantics<parallel>], iteration_bounds = array<i64: 1, 1>, scalar_prefetch = 0 : i64, scratch_operands = 0 : i64, tpu.core_type = #tpu.core_type<tc>, window_params = [{transform_indices = @transform_0, window_bounds = array<i64: 16, 32>}, {pipeline_mode = #tpu.pipeline_mode<synchronous>, transform_indices = @transform_1, window_bounds = array<i64: 1, 32>}, {pipeline_mode = #tpu.pipeline_mode<synchronous>, transform_indices = @transform_2, window_bounds = array<i64: 1, 32>}, {transform_indices = @transform_3, window_bounds = array<i64: 32, 32>}, {transform_indices = @transform_4, window_bounds = array<i64: 1, 32>}, {transform_indices = @transform_5, window_bounds = array<i64: 16, 32>}]} {
    %c0 = arith.constant 0 : index
    %c0_0 = arith.constant 0 : index
    %0 = vector.load %arg2[%c0, %c0_0] : memref<16x32xf32, #tpu.memory_space<vmem>>, vector<16x32xf32>
    %c0_1 = arith.constant 0 : index
    %c0_2 = arith.constant 0 : index
    %1 = vector.load %arg3[%c0_1, %c0_2] : memref<1x32xf32, #tpu.memory_space<vmem>>, vector<1x32xf32>
    %c0_3 = arith.constant 0 : index
    %c0_4 = arith.constant 0 : index
    %2 = vector.load %arg4[%c0_3, %c0_4] : memref<1x32xf32, #tpu.memory_space<vmem>>, vector<1x32xf32>
    %cst = arith.constant dense<0.000000e+00> : vector<16xf32>
    %3 = vector.multi_reduction <add>, %0, %cst [1] : vector<16x32xf32> to vector<16xf32>
    %4 = vector.shape_cast %3 : vector<16xf32> to vector<16x1xf32>
    %cst_5 = arith.constant 3.200000e+01 : f32
    %5 = vector.broadcast %cst_5 : f32 to vector<16x1xf32>
    %6 = arith.divf %4, %5 : vector<16x1xf32>
    %7 = vector.broadcast %6 : vector<16x1xf32> to vector<16x32xf32>
    %8 = arith.subf %0, %7 : vector<16x32xf32>
    %9 = arith.mulf %8, %8 : vector<16x32xf32>
    %cst_6 = arith.constant dense<0.000000e+00> : vector<16xf32>
    %10 = vector.multi_reduction <add>, %9, %cst_6 [1] : vector<16x32xf32> to vector<16xf32>
    %11 = vector.shape_cast %10 : vector<16xf32> to vector<16x1xf32>
    %cst_7 = arith.constant 3.100000e+01 : f32
    %12 = vector.broadcast %cst_7 : f32 to vector<16x1xf32>
    %13 = arith.divf %11, %12 : vector<16x1xf32>
    %14 = math.sqrt %13 : vector<16x1xf32>
    %cst_8 = arith.constant 9.99999997E-7 : f32
    %15 = vector.broadcast %cst_8 : f32 to vector<16x1xf32>
    %16 = arith.addf %14, %15 : vector<16x1xf32>
    %17 = tpu.reciprocal %16 : vector<16x1xf32> -> vector<16x1xf32>
    %18 = vector.broadcast %1 : vector<1x32xf32> to vector<16x32xf32>
    %19 = arith.mulf %18, %8 : vector<16x32xf32>
    %20 = vector.broadcast %17 : vector<16x1xf32> to vector<16x32xf32>
    %21 = arith.mulf %19, %20 : vector<16x32xf32>
    %22 = vector.broadcast %2 : vector<1x32xf32> to vector<16x32xf32>
    %23 = arith.addf %21, %22 : vector<16x32xf32>
    %c0_9 = arith.constant 0 : index
    %c0_10 = arith.constant 0 : index
    %24 = vector.load %arg5[%c0_9, %c0_10] : memref<32x32xf32, #tpu.memory_space<vmem>>, vector<32x32xf32>
    %cst_11 = arith.constant dense<0.000000e+00> : vector<16x32xf32>
    %25 = tpu.matmul %23, %24, %cst_11 {dimension_numbers = #tpu.dot_dimension_numbers<[1], [0], [0], [1], [0, 0, 1, 1], [], []>} : vector<16x32xf32>, vector<32x32xf32>, vector<16x32xf32> -> vector<16x32xf32>
    %c0_12 = arith.constant 0 : index
    %c0_13 = arith.constant 0 : index
    %26 = vector.load %arg6[%c0_12, %c0_13] : memref<1x32xf32, #tpu.memory_space<vmem>>, vector<1x32xf32>
    %27 = vector.broadcast %26 : vector<1x32xf32> to vector<16x32xf32>
    %28 = arith.addf %25, %27 : vector<16x32xf32>
    %c0_14 = arith.constant 0 : index
    %c0_15 = arith.constant 0 : index
    %29 = vector.load %arg7[%c0_14, %c0_15] : memref<16x32xf32, #tpu.memory_space<vmem>>, vector<16x32xf32>
    tpu.vector_store %arg7[%c0_14, %c0_15], %28 {strides = array<i32>} : memref<16x32xf32, #tpu.memory_space<vmem>>, vector<16x32xf32>,
    return
  }
  func.func @transform_0(%arg0: i32, %arg1: i32) -> (i32, i32) {
    %c0_i32 = arith.constant 0 : i32
    %c0_i32_0 = arith.constant 0 : i32
    return %arg1, %c0_i32 : i32, i32
  }
  func.func @transform_1(%arg0: i32, %arg1: i32) -> (i32, i32) {
    %c0_i32 = arith.constant 0 : i32
    %c0_i32_0 = arith.constant 0 : i32
    %c0_i32_1 = arith.constant 0 : i32
    return %c0_i32, %c0_i32_0 : i32, i32
  }
  func.func @transform_2(%arg0: i32, %arg1: i32) -> (i32, i32) {
    %c0_i32 = arith.constant 0 : i32
    %c0_i32_0 = arith.constant 0 : i32
    %c0_i32_1 = arith.constant 0 : i32
    return %c0_i32, %c0_i32_0 : i32, i32
  }
  func.func @transform_3(%arg0: i32, %arg1: i32) -> (i32, i32) {
    %c0_i32 = arith.constant 0 : i32
    %c0_i32_0 = arith.constant 0 : i32
    return %c0_i32, %arg0 : i32, i32
  }
  func.func @transform_4(%arg0: i32, %arg1: i32) -> (i32, i32) {
    %c0_i32 = arith.constant 0 : i32
    %c0_i32_0 = arith.constant 0 : i32
    return %c0_i32, %arg0 : i32, i32
  }
  func.func @transform_5(%arg0: i32, %arg1: i32) -> (i32, i32) {
    %c0_i32 = arith.constant 0 : i32
    return %arg1, %arg0 : i32, i32
  }
}

module attributes {stable_mosaic.version = 11 : i64} {
  func.func @kernel(%arg0: i32, %arg1: i32, %arg2: memref<16x32xf32, #tpu.memory_space<vmem>>, %arg3: memref<1x32xf32, #tpu.memory_space<vmem>>, %arg4: memref<1x32xf32, #tpu.memory_space<vmem>>, %arg5: memref<32x32xf32, #tpu.memory_space<vmem>>, %arg6: memref<32x32xf32, #tpu.memory_space<vmem>>, %arg7: memref<32x32xf32, #tpu.memory_space<vmem>>, %arg8: memref<1x32xf32, #tpu.memory_space<vmem>>, %arg9: memref<1x32xf32, #tpu.memory_space<vmem>>, %arg10: memref<1x32xf32, #tpu.memory_space<vmem>>, %arg11: memref<16x32xf32, #tpu.memory_space<vmem>>, %arg12: memref<16x32xf32, #tpu.memory_space<vmem>>, %arg13: memref<16x32xf32, #tpu.memory_space<vmem>>) attributes {dimension_semantics = [#tpu.dimension_semantics<parallel>, #tpu.dimension_semantics<parallel>], iteration_bounds = array<i64: 1, 1>, scalar_prefetch = 0 : i64, scratch_operands = 0 : i64, tpu.core_type = #tpu.core_type<tc>, window_params = [{transform_indices = @transform_0, window_bounds = array<i64: 16, 32>}, {pipeline_mode = #tpu.pipeline_mode<synchronous>, transform_indices = @transform_1, window_bounds = array<i64: 1, 32>}, {pipeline_mode = #tpu.pipeline_mode<synchronous>, transform_indices = @transform_2, window_bounds = array<i64: 1, 32>}, {transform_indices = @transform_3, window_bounds = array<i64: 32, 32>}, {transform_indices = @transform_4, window_bounds = array<i64: 32, 32>}, {transform_indices = @transform_5, window_bounds = array<i64: 32, 32>}, {transform_indices = @transform_6, window_bounds = array<i64: 1, 32>}, {transform_indices = @transform_7, window_bounds = array<i64: 1, 32>}, {transform_indices = @transform_8, window_bounds = array<i64: 1, 32>}, {transform_indices = @transform_9, window_bounds = array<i64: 16, 32>}, {transform_indices = @transform_10, window_bounds = array<i64: 16, 32>}, {transform_indices = @transform_11, window_bounds = array<i64: 16, 32>}]} {
    %c0 = arith.constant 0 : index
    %c0_0 = arith.constant 0 : index
    %0 = vector.load %arg2[%c0, %c0_0] : memref<16x32xf32, #tpu.memory_space<vmem>>, vector<16x32xf32>
    %c0_1 = arith.constant 0 : index
    %c0_2 = arith.constant 0 : index
    %1 = vector.load %arg3[%c0_1, %c0_2] : memref<1x32xf32, #tpu.memory_space<vmem>>, vector<1x32xf32>
    %c0_3 = arith.constant 0 : index
    %c0_4 = arith.constant 0 : index
    %2 = vector.load %arg4[%c0_3, %c0_4] : memref<1x32xf32, #tpu.memory_space<vmem>>, vector<1x32xf32>
    %cst = arith.constant dense<0.000000e+00> : vector<16xf32>
    %3 = vector.multi_reduction <add>, %0, %cst [1] : vector<16x32xf32> to vector<16xf32>
    %4 = vector.shape_cast %3 : vector<16xf32> to vector<16x1xf32>
    %cst_5 = arith.constant 3.200000e+01 : f32
    %5 = vector.broadcast %cst_5 : f32 to vector<16x1xf32>
    %6 = arith.divf %4, %5 : vector<16x1xf32>
    %7 = vector.broadcast %6 : vector<16x1xf32> to vector<16x32xf32>
    %8 = arith.subf %0, %7 : vector<16x32xf32>
    %9 = arith.mulf %8, %8 : vector<16x32xf32>
    %cst_6 = arith.constant dense<0.000000e+00> : vector<16xf32>
    %10 = vector.multi_reduction <add>, %9, %cst_6 [1] : vector<16x32xf32> to vector<16xf32>
    %11 = vector.shape_cast %10 : vector<16xf32> to vector<16x1xf32>
    %cst_7 = arith.constant 3.100000e+01 : f32
    %12 = vector.broadcast %cst_7 : f32 to vector<16x1xf32>
    %13 = arith.divf %11, %12 : vector<16x1xf32>
    %14 = math.sqrt %13 : vector<16x1xf32>
    %cst_8 = arith.constant 9.99999997E-7 : f32
    %15 = vector.broadcast %cst_8 : f32 to vector<16x1xf32>
    %16 = arith.addf %14, %15 : vector<16x1xf32>
    %17 = tpu.reciprocal %16 : vector<16x1xf32> -> vector<16x1xf32>
    %18 = vector.broadcast %1 : vector<1x32xf32> to vector<16x32xf32>
    %19 = arith.mulf %18, %8 : vector<16x32xf32>
    %20 = vector.broadcast %17 : vector<16x1xf32> to vector<16x32xf32>
    %21 = arith.mulf %19, %20 : vector<16x32xf32>
    %22 = vector.broadcast %2 : vector<1x32xf32> to vector<16x32xf32>
    %23 = arith.addf %21, %22 : vector<16x32xf32>
    %c0_9 = arith.constant 0 : index
    %c0_10 = arith.constant 0 : index
    %24 = vector.load %arg5[%c0_9, %c0_10] : memref<32x32xf32, #tpu.memory_space<vmem>>, vector<32x32xf32>
    %cst_11 = arith.constant dense<0.000000e+00> : vector<16x32xf32>
    %25 = tpu.matmul %23, %24, %cst_11 {dimension_numbers = #tpu.dot_dimension_numbers<[1], [0], [0], [1], [0, 0, 1, 1], [], []>} : vector<16x32xf32>, vector<32x32xf32>, vector<16x32xf32> -> vector<16x32xf32>
    %c0_12 = arith.constant 0 : index
    %c0_13 = arith.constant 0 : index
    %26 = vector.load %arg8[%c0_12, %c0_13] : memref<1x32xf32, #tpu.memory_space<vmem>>, vector<1x32xf32>
    %27 = vector.broadcast %26 : vector<1x32xf32> to vector<16x32xf32>
    %28 = arith.addf %25, %27 : vector<16x32xf32>
    %c0_14 = arith.constant 0 : index
    %c0_15 = arith.constant 0 : index
    %29 = vector.load %arg11[%c0_14, %c0_15] : memref<16x32xf32, #tpu.memory_space<vmem>>, vector<16x32xf32>
    tpu.vector_store %arg11[%c0_14, %c0_15], %28 {strides = array<i32>} : memref<16x32xf32, #tpu.memory_space<vmem>>, vector<16x32xf32>,
    %c0_16 = arith.constant 0 : index
    %c0_17 = arith.constant 0 : index
    %30 = vector.load %arg6[%c0_16, %c0_17] : memref<32x32xf32, #tpu.memory_space<vmem>>, vector<32x32xf32>
    %cst_18 = arith.constant dense<0.000000e+00> : vector<16x32xf32>
    %31 = tpu.matmul %23, %30, %cst_18 {dimension_numbers = #tpu.dot_dimension_numbers<[1], [0], [0], [1], [0, 0, 1, 1], [], []>} : vector<16x32xf32>, vector<32x32xf32>, vector<16x32xf32> -> vector<16x32xf32>
    %c0_19 = arith.constant 0 : index
    %c0_20 = arith.constant 0 : index
    %32 = vector.load %arg9[%c0_19, %c0_20] : memref<1x32xf32, #tpu.memory_space<vmem>>, vector<1x32xf32>
    %33 = vector.broadcast %32 : vector<1x32xf32> to vector<16x32xf32>
    %34 = arith.addf %31, %33 : vector<16x32xf32>
    %c0_21 = arith.constant 0 : index
    %c0_22 = arith.constant 0 : index
    %35 = vector.load %arg12[%c0_21, %c0_22] : memref<16x32xf32, #tpu.memory_space<vmem>>, vector<16x32xf32>
    tpu.vector_store %arg12[%c0_21, %c0_22], %34 {strides = array<i32>} : memref<16x32xf32, #tpu.memory_space<vmem>>, vector<16x32xf32>,
    %c0_23 = arith.constant 0 : index
    %c0_24 = arith.constant 0 : index
    %36 = vector.load %arg7[%c0_23, %c0_24] : memref<32x32xf32, #tpu.memory_space<vmem>>, vector<32x32xf32>
    %cst_25 = arith.constant dense<0.000000e+00> : vector<16x32xf32>
    %37 = tpu.matmul %23, %36, %cst_25 {dimension_numbers = #tpu.dot_dimension_numbers<[1], [0], [0], [1], [0, 0, 1, 1], [], []>} : vector<16x32xf32>, vector<32x32xf32>, vector<16x32xf32> -> vector<16x32xf32>
    %c0_26 = arith.constant 0 : index
    %c0_27 = arith.constant 0 : index
    %38 = vector.load %arg10[%c0_26, %c0_27] : memref<1x32xf32, #tpu.memory_space<vmem>>, vector<1x32xf32>
    %39 = vector.broadcast %38 : vector<1x32xf32> to vector<16x32xf32>
    %40 = arith.addf %37, %39 : vector<16x32xf32>
    %c0_28 = arith.constant 0 : index
    %c0_29 = arith.constant 0 : index
    %41 = vector.load %arg13[%c0_28, %c0_29] : memref<16x32xf32, #tpu.memory_space<vmem>>, vector<16x32xf32>
    tpu.vector_store %arg13[%c0_28, %c0_29], %40 {strides = array<i32>} : memref<16x32xf32, #tpu.memory_space<vmem>>, vector<16x32xf32>,
    return
  }
  func.func @transform_0(%arg0: i32, %arg1: i32) -> (i32, i32) {
    %c0_i32 = arith.constant 0 : i32
    %c0_i32_0 = arith.constant 0 : i32
    return %arg1, %c0_i32 : i32, i32
  }
  func.func @transform_1(%arg0: i32, %arg1: i32) -> (i32, i32) {
    %c0_i32 = arith.constant 0 : i32
    %c0_i32_0 = arith.constant 0 : i32
    %c0_i32_1 = arith.constant 0 : i32
    return %c0_i32, %c0_i32_0 : i32, i32
  }
  func.func @transform_2(%arg0: i32, %arg1: i32) -> (i32, i32) {
    %c0_i32 = arith.constant 0 : i32
    %c0_i32_0 = arith.constant 0 : i32
    %c0_i32_1 = arith.constant 0 : i32
    return %c0_i32, %c0_i32_0 : i32, i32
  }
  func.func @transform_3(%arg0: i32, %arg1: i32) -> (i32, i32) {
    %c0_i32 = arith.constant 0 : i32
    %c0_i32_0 = arith.constant 0 : i32
    return %c0_i32, %arg0 : i32, i32
  }
  func.func @transform_4(%arg0: i32, %arg1: i32) -> (i32, i32) {
    %c0_i32 = arith.constant 0 : i32
    %c0_i32_0 = arith.constant 0 : i32
    return %c0_i32, %arg0 : i32, i32
  }
  func.func @transform_5(%arg0: i32, %arg1: i32) -> (i32, i32) {
    %c0_i32 = arith.constant 0 : i32
    %c0_i32_0 = arith.constant 0 : i32
    return %c0_i32, %arg0 : i32, i32
  }
  func.func @transform_6(%arg0: i32, %arg1: i32) -> (i32, i32) {
    %c0_i32 = arith.constant 0 : i32
    %c0_i32_0 = arith.constant 0 : i32
    return %c0_i32, %arg0 : i32, i32
  }
  func.func @transform_7(%arg0: i32, %arg1: i32) -> (i32, i32) {
    %c0_i32 = arith.constant 0 : i32
    %c0_i32_0 = arith.constant 0 : i32
    return %c0_i32, %arg0 : i32, i32
  }
  func.func @transform_8(%arg0: i32, %arg1: i32) -> (i32, i32) {
    %c0_i32 = arith.constant 0 : i32
    %c0_i32_0 = arith.constant 0 : i32
    return %c0_i32, %arg0 : i32, i32
  }
  func.func @transform_9(%arg0: i32, %arg1: i32) -> (i32, i32) {
    %c0_i32 = arith.constant 0 : i32
    return %arg1, %arg0 : i32, i32
  }
  func.func @transform_10(%arg0: i32, %arg1: i32) -> (i32, i32) {
    %c0_i32 = arith.constant 0 : i32
    return %arg1, %arg0 : i32, i32
  }
  func.func @transform_11(%arg0: i32, %arg1: i32) -> (i32, i32) {
    %c0_i32 = arith.constant 0 : i32
    return %arg1, %arg0 : i32, i32
  }
}

module attributes {stable_mosaic.version = 11 : i64} {
  func.func @_ffn_kernel(%arg0: i32, %arg1: i32, %arg2: memref<16x32xf32, #tpu.memory_space<vmem>>, %arg3: memref<1x32xf32, #tpu.memory_space<vmem>>, %arg4: memref<1x32xf32, #tpu.memory_space<vmem>>, %arg5: memref<32x128xf32, #tpu.memory_space<vmem>>, %arg6: memref<1x128xf32, #tpu.memory_space<vmem>>, %arg7: memref<128x32xf32, #tpu.memory_space<vmem>>, %arg8: memref<1x32xf32, #tpu.memory_space<vmem>>, %arg9: memref<16x32xf32, #tpu.memory_space<vmem>>, %arg10: memref<16x32xf32, #tpu.memory_space<vmem>>, %arg11: memref<16x32xf32, #tpu.memory_space<vmem>>, %arg12: memref<16x32xf32, #tpu.memory_space<vmem>>) attributes {dimension_semantics = [#tpu.dimension_semantics<parallel>, #tpu.dimension_semantics<arbitrary>], iteration_bounds = array<i64: 1, 1>, scalar_prefetch = 0 : i64, scratch_operands = 2 : i64, tpu.core_type = #tpu.core_type<tc>, window_params = [{transform_indices = @transform_0, window_bounds = array<i64: 16, 32>}, {pipeline_mode = #tpu.pipeline_mode<synchronous>, transform_indices = @transform_1, window_bounds = array<i64: 1, 32>}, {pipeline_mode = #tpu.pipeline_mode<synchronous>, transform_indices = @transform_2, window_bounds = array<i64: 1, 32>}, {transform_indices = @transform_3, window_bounds = array<i64: 32, 128>}, {transform_indices = @transform_4, window_bounds = array<i64: 1, 128>}, {transform_indices = @transform_5, window_bounds = array<i64: 128, 32>}, {pipeline_mode = #tpu.pipeline_mode<synchronous>, transform_indices = @transform_6, window_bounds = array<i64: 1, 32>}, {transform_indices = @transform_7, window_bounds = array<i64: 16, 32>}, {transform_indices = @transform_8, window_bounds = array<i64: 16, 32>}]} {
    %c0_i32 = arith.constant 0 : i32
    %0 = arith.cmpi eq, %arg1, %c0_i32 : i32
    %1 = arith.extui %0 : i1 to i32
    %c0_i32_0 = arith.constant 0 : i32
    %2 = arith.cmpi ne, %1, %c0_i32_0 : i32
    scf.if %2 {
      %cst_16 = arith.constant 0.000000e+00 : f32
      %19 = vector.broadcast %cst_16 : f32 to vector<16x32xf32>
      %c0_17 = arith.constant 0 : index
      %c0_18 = arith.constant 0 : index
      %20 = vector.load %arg11[%c0_17, %c0_18] : memref<16x32xf32, #tpu.memory_space<vmem>>, vector<16x32xf32>
      tpu.vector_store %arg11[%c0_17, %c0_18], %19 {strides = array<i32>} : memref<16x32xf32, #tpu.memory_space<vmem>>, vector<16x32xf32>,
      %c0_19 = arith.constant 0 : index
      %c0_20 = arith.constant 0 : index
      %21 = vector.load %arg2[%c0_19, %c0_20] : memref<16x32xf32, #tpu.memory_space<vmem>>, vector<16x32xf32>
      %c0_21 = arith.constant 0 : index
      %c0_22 = arith.constant 0 : index
      %22 = vector.load %arg3[%c0_21, %c0_22] : memref<1x32xf32, #tpu.memory_space<vmem>>, vector<1x32xf32>
      %c0_23 = arith.constant 0 : index
      %c0_24 = arith.constant 0 : index
      %23 = vector.load %arg4[%c0_23, %c0_24] : memref<1x32xf32, #tpu.memory_space<vmem>>, vector<1x32xf32>
      %cst_25 = arith.constant dense<0.000000e+00> : vector<16xf32>
      %24 = vector.multi_reduction <add>, %21, %cst_25 [1] : vector<16x32xf32> to vector<16xf32>
      %25 = vector.shape_cast %24 : vector<16xf32> to vector<16x1xf32>
      %cst_26 = arith.constant 3.200000e+01 : f32
      %26 = vector.broadcast %cst_26 : f32 to vector<16x1xf32>
      %27 = arith.divf %25, %26 : vector<16x1xf32>
      %28 = vector.broadcast %27 : vector<16x1xf32> to vector<16x32xf32>
      %29 = arith.subf %21, %28 : vector<16x32xf32>
      %30 = arith.mulf %29, %29 : vector<16x32xf32>
      %cst_27 = arith.constant dense<0.000000e+00> : vector<16xf32>
      %31 = vector.multi_reduction <add>, %30, %cst_27 [1] : vector<16x32xf32> to vector<16xf32>
      %32 = vector.shape_cast %31 : vector<16xf32> to vector<16x1xf32>
      %cst_28 = arith.constant 3.100000e+01 : f32
      %33 = vector.broadcast %cst_28 : f32 to vector<16x1xf32>
      %34 = arith.divf %32, %33 : vector<16x1xf32>
      %35 = math.sqrt %34 : vector<16x1xf32>
      %cst_29 = arith.constant 9.99999997E-7 : f32
      %36 = vector.broadcast %cst_29 : f32 to vector<16x1xf32>
      %37 = arith.addf %35, %36 : vector<16x1xf32>
      %38 = tpu.reciprocal %37 : vector<16x1xf32> -> vector<16x1xf32>
      %39 = vector.broadcast %22 : vector<1x32xf32> to vector<16x32xf32>
      %40 = arith.mulf %39, %29 : vector<16x32xf32>
      %41 = vector.broadcast %38 : vector<16x1xf32> to vector<16x32xf32>
      %42 = arith.mulf %40, %41 : vector<16x32xf32>
      %43 = vector.broadcast %23 : vector<1x32xf32> to vector<16x32xf32>
      %44 = arith.addf %42, %43 : vector<16x32xf32>
      %c0_30 = arith.constant 0 : index
      %c0_31 = arith.constant 0 : index
      %45 = vector.load %arg12[%c0_30, %c0_31] : memref<16x32xf32, #tpu.memory_space<vmem>>, vector<16x32xf32>
      tpu.vector_store %arg12[%c0_30, %c0_31], %44 {strides = array<i32>} : memref<16x32xf32, #tpu.memory_space<vmem>>, vector<16x32xf32>,
    } else {
    }
    %c0 = arith.constant 0 : index
    %c0_1 = arith.constant 0 : index
    %3 = vector.load %arg12[%c0, %c0_1] : memref<16x32xf32, #tpu.memory_space<vmem>>, vector<16x32xf32>
    %c0_2 = arith.constant 0 : index
    %c0_3 = arith.constant 0 : index
    %4 = vector.load %arg5[%c0_2, %c0_3] : memref<32x128xf32, #tpu.memory_space<vmem>>, vector<32x128xf32>
    %cst = arith.constant dense<0.000000e+00> : vector<16x128xf32>
    %5 = tpu.matmul %3, %4, %cst {dimension_numbers = #tpu.dot_dimension_numbers<[1], [0], [0], [1], [0, 0, 1, 1], [], []>} : vector<16x32xf32>, vector<32x128xf32>, vector<16x128xf32> -> vector<16x128xf32>
    %c0_4 = arith.constant 0 : index
    %c0_5 = arith.constant 0 : index
    %6 = vector.load %arg6[%c0_4, %c0_5] : memref<1x128xf32, #tpu.memory_space<vmem>>, vector<1x128xf32>
    %7 = vector.broadcast %6 : vector<1x128xf32> to vector<16x128xf32>
    %8 = arith.addf %5, %7 : vector<16x128xf32>
    %cst_6 = arith.constant 0.000000e+00 : f32
    %9 = vector.broadcast %cst_6 : f32 to vector<16x128xf32>
    %10 = arith.maximumf %8, %9 : vector<16x128xf32>
    %c0_7 = arith.constant 0 : index
    %c0_8 = arith.constant 0 : index
    %11 = vector.load %arg11[%c0_7, %c0_8] : memref<16x32xf32, #tpu.memory_space<vmem>>, vector<16x32xf32>
    %c0_9 = arith.constant 0 : index
    %c0_10 = arith.constant 0 : index
    %12 = vector.load %arg7[%c0_9, %c0_10] : memref<128x32xf32, #tpu.memory_space<vmem>>, vector<128x32xf32>
    %cst_11 = arith.constant dense<0.000000e+00> : vector<16x32xf32>
    %13 = tpu.matmul %10, %12, %cst_11 {dimension_numbers = #tpu.dot_dimension_numbers<[1], [0], [0], [1], [0, 0, 1, 1], [], []>} : vector<16x128xf32>, vector<128x32xf32>, vector<16x32xf32> -> vector<16x32xf32>
    %14 = arith.addf %11, %13 : vector<16x32xf32>
    %c0_12 = arith.constant 0 : index
    %c0_13 = arith.constant 0 : index
    %15 = vector.load %arg11[%c0_12, %c0_13] : memref<16x32xf32, #tpu.memory_space<vmem>>, vector<16x32xf32>
    tpu.vector_store %arg11[%c0_12, %c0_13], %14 {strides = array<i32>} : memref<16x32xf32, #tpu.memory_space<vmem>>, vector<16x32xf32>,
    %c0_i32_14 = arith.constant 0 : i32
    %16 = arith.cmpi eq, %arg1, %c0_i32_14 : i32
    %17 = arith.extui %16 : i1 to i32
    %c0_i32_15 = arith.constant 0 : i32
    %18 = arith.cmpi ne, %17, %c0_i32_15 : i32
    scf.if %18 {
      %c0_16 = arith.constant 0 : index
      %c0_17 = arith.constant 0 : index
      %19 = vector.load %arg11[%c0_16, %c0_17] : memref<16x32xf32, #tpu.memory_space<vmem>>, vector<16x32xf32>
      %c0_18 = arith.constant 0 : index
      %c0_19 = arith.constant 0 : index
      %20 = vector.load %arg8[%c0_18, %c0_19] : memref<1x32xf32, #tpu.memory_space<vmem>>, vector<1x32xf32>
      %21 = vector.broadcast %20 : vector<1x32xf32> to vector<16x32xf32>
      %22 = arith.addf %19, %21 : vector<16x32xf32>
      %c0_20 = arith.constant 0 : index
      %c0_21 = arith.constant 0 : index
      %23 = vector.load %arg9[%c0_20, %c0_21] : memref<16x32xf32, #tpu.memory_space<vmem>>, vector<16x32xf32>
      %24 = arith.addf %22, %23 : vector<16x32xf32>
      %c0_22 = arith.constant 0 : index
      %c0_23 = arith.constant 0 : index
      %25 = vector.load %arg10[%c0_22, %c0_23] : memref<16x32xf32, #tpu.memory_space<vmem>>, vector<16x32xf32>
      tpu.vector_store %arg10[%c0_22, %c0_23], %24 {strides = array<i32>} : memref<16x32xf32, #tpu.memory_space<vmem>>, vector<16x32xf32>,
    } else {
    }
    return
  }
  func.func @transform_0(%arg0: i32, %arg1: i32) -> (i32, i32) {
    %c0_i32 = arith.constant 0 : i32
    %c0_i32_0 = arith.constant 0 : i32
    return %arg0, %c0_i32 : i32, i32
  }
  func.func @transform_1(%arg0: i32, %arg1: i32) -> (i32, i32) {
    %c0_i32 = arith.constant 0 : i32
    %c0_i32_0 = arith.constant 0 : i32
    %c0_i32_1 = arith.constant 0 : i32
    return %c0_i32, %c0_i32_0 : i32, i32
  }
  func.func @transform_2(%arg0: i32, %arg1: i32) -> (i32, i32) {
    %c0_i32 = arith.constant 0 : i32
    %c0_i32_0 = arith.constant 0 : i32
    %c0_i32_1 = arith.constant 0 : i32
    return %c0_i32, %c0_i32_0 : i32, i32
  }
  func.func @transform_3(%arg0: i32, %arg1: i32) -> (i32, i32) {
    %c0_i32 = arith.constant 0 : i32
    %c0_i32_0 = arith.constant 0 : i32
    return %c0_i32, %arg1 : i32, i32
  }
  func.func @transform_4(%arg0: i32, %arg1: i32) -> (i32, i32) {
    %c0_i32 = arith.constant 0 : i32
    %c0_i32_0 = arith.constant 0 : i32
    return %c0_i32, %arg1 : i32, i32
  }
  func.func @transform_5(%arg0: i32, %arg1: i32) -> (i32, i32) {
    %c0_i32 = arith.constant 0 : i32
    %c0_i32_0 = arith.constant 0 : i32
    return %arg1, %c0_i32 : i32, i32
  }
  func.func @transform_6(%arg0: i32, %arg1: i32) -> (i32, i32) {
    %c0_i32 = arith.constant 0 : i32
    %c0_i32_0 = arith.constant 0 : i32
    %c0_i32_1 = arith.constant 0 : i32
    return %c0_i32, %c0_i32_0 : i32, i32
  }
  func.func @transform_7(%arg0: i32, %arg1: i32) -> (i32, i32) {
    %c0_i32 = arith.constant 0 : i32
    %c0_i32_0 = arith.constant 0 : i32
    return %arg0, %c0_i32 : i32, i32
  }
  func.func @transform_8(%arg0: i32, %arg1: i32) -> (i32, i32) {
    %c0_i32 = arith.constant 0 : i32
    %c0_i32_0 = arith.constant 0 : i32
    return %arg0, %c0_i32 : i32, i32
  }
}

module attributes {stable_mosaic.version = 11 : i64} {
  func.func @_flash_mha_kernel(%arg0: i32, %arg1: i32, %arg2: i32, %arg3: memref<1x8x32xf32, #tpu.memory_space<vmem>>, %arg4: memref<1x8x32xf32, #tpu.memory_space<vmem>>, %arg5: memref<1x8x32xf32, #tpu.memory_space<vmem>>, %arg6: memref<1x1x8xf32, #tpu.memory_space<vmem>>, %arg7: memref<1x8x32xf32, #tpu.memory_space<vmem>>, %arg8: memref<32x32xf32, #tpu.memory_space<vmem>>, %arg9: memref<1x32xf32, #tpu.memory_space<vmem>>, %arg10: memref<1x8x32xf32, #tpu.memory_space<vmem>>, %arg11: memref<4x8x1xf32, #tpu.memory_space<vmem>>, %arg12: memref<4x8x1xf32, #tpu.memory_space<vmem>>, %arg13: memref<4x8x8xf32, #tpu.memory_space<vmem>>) attributes {dimension_semantics = [#tpu.dimension_semantics<parallel>, #tpu.dimension_semantics<parallel>, #tpu.dimension_semantics<arbitrary>], iteration_bounds = array<i64: 2, 1, 1>, scalar_prefetch = 0 : i64, scratch_operands = 3 : i64, tpu.core_type = #tpu.core_type<tc>, window_params = [{transform_indices = @transform_0, window_bounds = array<i64: 1, 8, 32>}, {transform_indices = @transform_1, window_bounds = array<i64: 1, 8, 32>}, {transform_indices = @transform_2, window_bounds = array<i64: 1, 8, 32>}, {transform_indices = @transform_3, window_bounds = array<i64: 1, 1, 8>}, {transform_indices = @transform_4, window_bounds = array<i64: 1, 8, 32>}, {pipeline_mode = #tpu.pipeline_mode<synchronous>, transform_indices = @transform_5, window_bounds = array<i64: 32, 32>}, {pipeline_mode = #tpu.pipeline_mode<synchronous>, transform_indices = @transform_6, window_bounds = array<i64: 1, 32>}, {transform_indices = @transform_7, window_bounds = array<i64: 1, 8, 32>}]} {
    %c0_i32 = arith.constant 0 : i32
    %0 = arith.cmpi eq, %arg2, %c0_i32 : i32
    %1 = arith.extui %0 : i1 to i32
    %c0_i32_0 = arith.constant 0 : i32
    %2 = arith.cmpi ne, %1, %c0_i32_0 : i32
    scf.if %2 {
      %cst_105 = arith.constant 0xFF800000 : f32
      %175 = vector.broadcast %cst_105 : f32 to vector<4x8x1xf32>
      %c0_106 = arith.constant 0 : index
      %c0_107 = arith.constant 0 : index
      %c0_108 = arith.constant 0 : index
      %176 = vector.load %arg11[%c0_106, %c0_107, %c0_108] : memref<4x8x1xf32, #tpu.memory_space<vmem>>, vector<4x8x1xf32>
      tpu.vector_store %arg11[%c0_106, %c0_107, %c0_108], %175 {strides = array<i32>} : memref<4x8x1xf32, #tpu.memory_space<vmem>>, vector<4x8x1xf32>,
      %cst_109 = arith.constant 0.000000e+00 : f32
      %177 = vector.broadcast %cst_109 : f32 to vector<4x8x1xf32>
      %c0_110 = arith.constant 0 : index
      %c0_111 = arith.constant 0 : index
      %c0_112 = arith.constant 0 : index
      %178 = vector.load %arg12[%c0_110, %c0_111, %c0_112] : memref<4x8x1xf32, #tpu.memory_space<vmem>>, vector<4x8x1xf32>
      tpu.vector_store %arg12[%c0_110, %c0_111, %c0_112], %177 {strides = array<i32>} : memref<4x8x1xf32, #tpu.memory_space<vmem>>, vector<4x8x1xf32>,
      %cst_113 = arith.constant 0.000000e+00 : f32
      %179 = vector.broadcast %cst_113 : f32 to vector<4x8x8xf32>
      %c0_114 = arith.constant 0 : index
      %c0_115 = arith.constant 0 : index
      %c0_116 = arith.constant 0 : index
      %180 = vector.load %arg13[%c0_114, %c0_115, %c0_116] : memref<4x8x8xf32, #tpu.memory_space<vmem>>, vector<4x8x8xf32>
      tpu.vector_store %arg13[%c0_114, %c0_115, %c0_116], %179 {strides = array<i32>} : memref<4x8x8xf32, #tpu.memory_space<vmem>>, vector<4x8x8xf32>,
    } else {
    }
    %c0 = arith.constant 0 : index
    %c0_1 = arith.constant 0 : index
    %c0_2 = arith.constant 0 : index
    %3 = vector.load %arg3[%c0, %c0_1, %c0_2] : memref<1x8x32xf32, #tpu.memory_space<vmem>>, vector<1x8x32xf32>
    %4 = vector.shape_cast %3 : vector<1x8x32xf32> to vector<8x32xf32>
    %c0_3 = arith.constant 0 : index
    %c0_4 = arith.constant 0 : index
    %c0_5 = arith.constant 0 : index
    %5 = vector.load %arg4[%c0_3, %c0_4, %c0_5] : memref<1x8x32xf32, #tpu.memory_space<vmem>>, vector<1x8x32xf32>
    %6 = vector.shape_cast %5 : vector<1x8x32xf32> to vector<8x32xf32>
    %c0_6 = arith.constant 0 : index
    %c0_7 = arith.constant 0 : index
    %c0_8 = arith.constant 0 : index
    %7 = vector.load %arg5[%c0_6, %c0_7, %c0_8] : memref<1x8x32xf32, #tpu.memory_space<vmem>>, vector<1x8x32xf32>
    %8 = vector.shape_cast %7 : vector<1x8x32xf32> to vector<8x32xf32>
    %c0_9 = arith.constant 0 : index
    %c0_10 = arith.constant 0 : index
    %c0_11 = arith.constant 0 : index
    %9 = vector.load %arg6[%c0_9, %c0_10, %c0_11] : memref<1x1x8xf32, #tpu.memory_space<vmem>>, vector<1x1x8xf32>
    %10 = vector.shape_cast %9 : vector<1x1x8xf32> to vector<1x8xf32>
    %cst = arith.constant 0.000000e+00 : f32
    %11 = vector.broadcast %cst : f32 to vector<1x8xf32>
    %12 = arith.cmpf oeq, %10, %11 : vector<1x8xf32>
    %cst_12 = arith.constant -1.000000e+09 : f32
    %cst_13 = arith.constant 0.000000e+00 : f32
    %13 = vector.broadcast %cst_12 : f32 to vector<1x8xf32>
    %14 = vector.broadcast %cst_13 : f32 to vector<1x8xf32>
    %15 = arith.select %12, %13, %14 : vector<1x8xi1>, vector<1x8xf32>
    %16 = vector.extract_strided_slice %4 {offsets = [0, 0], sizes = [8, 8], strides = [1, 1]} : vector<8x32xf32> to vector<8x8xf32>
    %17 = vector.extract_strided_slice %6 {offsets = [0, 0], sizes = [8, 8], strides = [1, 1]} : vector<8x32xf32> to vector<8x8xf32>
    %18 = vector.extract_strided_slice %8 {offsets = [0, 0], sizes = [8, 8], strides = [1, 1]} : vector<8x32xf32> to vector<8x8xf32>
    %cst_14 = arith.constant dense<0.000000e+00> : vector<8x8xf32>
    %19 = tpu.matmul %16, %17, %cst_14 {dimension_numbers = #tpu.dot_dimension_numbers<[1], [1], [0], [0], [0, 0, 1, 0], [], []>} : vector<8x8xf32>, vector<8x8xf32>, vector<8x8xf32> -> vector<8x8xf32>
    %cst_15 = arith.constant 0.353553385 : f32
    %20 = vector.broadcast %cst_15 : f32 to vector<8x8xf32>
    %21 = arith.mulf %19, %20 : vector<8x8xf32>
    %22 = vector.broadcast %15 : vector<1x8xf32> to vector<8x8xf32>
    %23 = arith.addf %21, %22 : vector<8x8xf32>
    %c0_16 = arith.constant 0 : index
    %c0_17 = arith.constant 0 : index
    %c0_18 = arith.constant 0 : index
    %24 = vector.load %arg11[%c0_16, %c0_17, %c0_18] : memref<4x8x1xf32, #tpu.memory_space<vmem>>, vector<1x8x1xf32>
    %25 = vector.shape_cast %24 : vector<1x8x1xf32> to vector<8x1xf32>
    %cst_19 = arith.constant dense<0xFF800000> : vector<8xf32>
    %26 = vector.multi_reduction <maximumf>, %23, %cst_19 [1] : vector<8x8xf32> to vector<8xf32>
    %27 = vector.shape_cast %26 : vector<8xf32> to vector<8x1xf32>
    %28 = arith.maximumf %25, %27 : vector<8x1xf32>
    %29 = arith.subf %25, %28 : vector<8x1xf32>
    %30 = math.exp %29 : vector<8x1xf32>
    %31 = vector.broadcast %28 : vector<8x1xf32> to vector<8x8xf32>
    %32 = arith.subf %23, %31 : vector<8x8xf32>
    %33 = math.exp %32 : vector<8x8xf32>
    %c0_20 = arith.constant 0 : index
    %c0_21 = arith.constant 0 : index
    %c0_22 = arith.constant 0 : index
    %34 = vector.load %arg12[%c0_20, %c0_21, %c0_22] : memref<4x8x1xf32, #tpu.memory_space<vmem>>, vector<1x8x1xf32>
    %35 = vector.shape_cast %34 : vector<1x8x1xf32> to vector<8x1xf32>
    %36 = arith.mulf %30, %35 : vector<8x1xf32>
    %cst_23 = arith.constant dense<0.000000e+00> : vector<8xf32>
    %37 = vector.multi_reduction <add>, %33, %cst_23 [1] : vector<8x8xf32> to vector<8xf32>
    %38 = vector.shape_cast %37 : vector<8xf32> to vector<8x1xf32>
    %39 = arith.addf %36, %38 : vector<8x1xf32>
    %c0_24 = arith.constant 0 : index
    %c0_25 = arith.constant 0 : index
    %c0_26 = arith.constant 0 : index
    %40 = vector.load %arg12[%c0_24, %c0_25, %c0_26] : memref<4x8x1xf32, #tpu.memory_space<vmem>>, vector<1x8x1xf32>
    %41 = vector.shape_cast %40 : vector<1x8x1xf32> to vector<8x1xf32>
    %42 = vector.shape_cast %39 : vector<8x1xf32> to vector<1x8x1xf32>
    tpu.vector_store %arg12[%c0_24, %c0_25, %c0_26], %42 {strides = array<i32>} : memref<4x8x1xf32, #tpu.memory_space<vmem>>, vector<1x8x1xf32>,
    %c0_27 = arith.constant 0 : index
    %c0_28 = arith.constant 0 : index
    %c0_29 = arith.constant 0 : index
    %43 = vector.load %arg13[%c0_27, %c0_28, %c0_29] : memref<4x8x8xf32, #tpu.memory_space<vmem>>, vector<1x8x8xf32>
    %44 = vector.shape_cast %43 : vector<1x8x8xf32> to vector<8x8xf32>
    %45 = vector.broadcast %30 : vector<8x1xf32> to vector<8x8xf32>
    %46 = arith.mulf %45, %44 : vector<8x8xf32>
    %cst_30 = arith.constant dense<0.000000e+00> : vector<8x8xf32>
    %47 = tpu.matmul %33, %18, %cst_30 {dimension_numbers = #tpu.dot_dimension_numbers<[1], [0], [0], [1], [0, 0, 1, 1], [], []>} : vector<8x8xf32>, vector<8x8xf32>, vector<8x8xf32> -> vector<8x8xf32>
    %48 = arith.addf %46, %47 : vector<8x8xf32>
    %c0_31 = arith.constant 0 : index
    %c0_32 = arith.constant 0 : index
    %c0_33 = arith.constant 0 : index
    %49 = vector.load %arg13[%c0_31, %c0_32, %c0_33] : memref<4x8x8xf32, #tpu.memory_space<vmem>>, vector<1x8x8xf32>
    %50 = vector.shape_cast %49 : vector<1x8x8xf32> to vector<8x8xf32>
    %51 = vector.shape_cast %48 : vector<8x8xf32> to vector<1x8x8xf32>
    tpu.vector_store %arg13[%c0_31, %c0_32, %c0_33], %51 {strides = array<i32>} : memref<4x8x8xf32, #tpu.memory_space<vmem>>, vector<1x8x8xf32>,
    %c0_34 = arith.constant 0 : index
    %c0_35 = arith.constant 0 : index
    %c0_36 = arith.constant 0 : index
    %52 = vector.load %arg11[%c0_34, %c0_35, %c0_36] : memref<4x8x1xf32, #tpu.memory_space<vmem>>, vector<1x8x1xf32>
    %53 = vector.shape_cast %52 : vector<1x8x1xf32> to vector<8x1xf32>
    %54 = vector.shape_cast %28 : vector<8x1xf32> to vector<1x8x1xf32>
    tpu.vector_store %arg11[%c0_34, %c0_35, %c0_36], %54 {strides = array<i32>} : memref<4x8x1xf32, #tpu.memory_space<vmem>>, vector<1x8x1xf32>,
    %55 = vector.extract_strided_slice %4 {offsets = [0, 8], sizes = [8, 8], strides = [1, 1]} : vector<8x32xf32> to vector<8x8xf32>
    %56 = vector.extract_strided_slice %6 {offsets = [0, 8], sizes = [8, 8], strides = [1, 1]} : vector<8x32xf32> to vector<8x8xf32>
    %57 = vector.extract_strided_slice %8 {offsets = [0, 8], sizes = [8, 8], strides = [1, 1]} : vector<8x32xf32> to vector<8x8xf32>
    %cst_37 = arith.constant dense<0.000000e+00> : vector<8x8xf32>
    %58 = tpu.matmul %55, %56, %cst_37 {dimension_numbers = #tpu.dot_dimension_numbers<[1], [1], [0], [0], [0, 0, 1, 0], [], []>} : vector<8x8xf32>, vector<8x8xf32>, vector<8x8xf32> -> vector<8x8xf32>
    %cst_38 = arith.constant 0.353553385 : f32
    %59 = vector.broadcast %cst_38 : f32 to vector<8x8xf32>
    %60 = arith.mulf %58, %59 : vector<8x8xf32>
    %61 = vector.broadcast %15 : vector<1x8xf32> to vector<8x8xf32>
    %62 = arith.addf %60, %61 : vector<8x8xf32>
    %c1 = arith.constant 1 : index
    %c0_39 = arith.constant 0 : index
    %c0_40 = arith.constant 0 : index
    %63 = vector.load %arg11[%c1, %c0_39, %c0_40] : memref<4x8x1xf32, #tpu.memory_space<vmem>>, vector<1x8x1xf32>
    %64 = vector.shape_cast %63 : vector<1x8x1xf32> to vector<8x1xf32>
    %cst_41 = arith.constant dense<0xFF800000> : vector<8xf32>
    %65 = vector.multi_reduction <maximumf>, %62, %cst_41 [1] : vector<8x8xf32> to vector<8xf32>
    %66 = vector.shape_cast %65 : vector<8xf32> to vector<8x1xf32>
    %67 = arith.maximumf %64, %66 : vector<8x1xf32>
    %68 = arith.subf %64, %67 : vector<8x1xf32>
    %69 = math.exp %68 : vector<8x1xf32>
    %70 = vector.broadcast %67 : vector<8x1xf32> to vector<8x8xf32>
    %71 = arith.subf %62, %70 : vector<8x8xf32>
    %72 = math.exp %71 : vector<8x8xf32>
    %c1_42 = arith.constant 1 : index
    %c0_43 = arith.constant 0 : index
    %c0_44 = arith.constant 0 : index
    %73 = vector.load %arg12[%c1_42, %c0_43, %c0_44] : memref<4x8x1xf32, #tpu.memory_space<vmem>>, vector<1x8x1xf32>
    %74 = vector.shape_cast %73 : vector<1x8x1xf32> to vector<8x1xf32>
    %75 = arith.mulf %69, %74 : vector<8x1xf32>
    %cst_45 = arith.constant dense<0.000000e+00> : vector<8xf32>
    %76 = vector.multi_reduction <add>, %72, %cst_45 [1] : vector<8x8xf32> to vector<8xf32>
    %77 = vector.shape_cast %76 : vector<8xf32> to vector<8x1xf32>
    %78 = arith.addf %75, %77 : vector<8x1xf32>
    %c1_46 = arith.constant 1 : index
    %c0_47 = arith.constant 0 : index
    %c0_48 = arith.constant 0 : index
    %79 = vector.load %arg12[%c1_46, %c0_47, %c0_48] : memref<4x8x1xf32, #tpu.memory_space<vmem>>, vector<1x8x1xf32>
    %80 = vector.shape_cast %79 : vector<1x8x1xf32> to vector<8x1xf32>
    %81 = vector.shape_cast %78 : vector<8x1xf32> to vector<1x8x1xf32>
    tpu.vector_store %arg12[%c1_46, %c0_47, %c0_48], %81 {strides = array<i32>} : memref<4x8x1xf32, #tpu.memory_space<vmem>>, vector<1x8x1xf32>,
    %c1_49 = arith.constant 1 : index
    %c0_50 = arith.constant 0 : index
    %c0_51 = arith.constant 0 : index
    %82 = vector.load %arg13[%c1_49, %c0_50, %c0_51] : memref<4x8x8xf32, #tpu.memory_space<vmem>>, vector<1x8x8xf32>
    %83 = vector.shape_cast %82 : vector<1x8x8xf32> to vector<8x8xf32>
    %84 = vector.broadcast %69 : vector<8x1xf32> to vector<8x8xf32>
    %85 = arith.mulf %84, %83 : vector<8x8xf32>
    %cst_52 = arith.constant dense<0.000000e+00> : vector<8x8xf32>
    %86 = tpu.matmul %72, %57, %cst_52 {dimension_numbers = #tpu.dot_dimension_numbers<[1], [0], [0], [1], [0, 0, 1, 1], [], []>} : vector<8x8xf32>, vector<8x8xf32>, vector<8x8xf32> -> vector<8x8xf32>
    %87 = arith.addf %85, %86 : vector<8x8xf32>
    %c1_53 = arith.constant 1 : index
    %c0_54 = arith.constant 0 : index
    %c0_55 = arith.constant 0 : index
    %88 = vector.load %arg13[%c1_53, %c0_54, %c0_55] : memref<4x8x8xf32, #tpu.memory_space<vmem>>, vector<1x8x8xf32>
    %89 = vector.shape_cast %88 : vector<1x8x8xf32> to vector<8x8xf32>
    %90 = vector.shape_cast %87 : vector<8x8xf32> to vector<1x8x8xf32>
    tpu.vector_store %arg13[%c1_53, %c0_54, %c0_55], %90 {strides = array<i32>} : memref<4x8x8xf32, #tpu.memory_space<vmem>>, vector<1x8x8xf32>,
    %c1_56 = arith.constant 1 : index
    %c0_57 = arith.constant 0 : index
    %c0_58 = arith.constant 0 : index
    %91 = vector.load %arg11[%c1_56, %c0_57, %c0_58] : memref<4x8x1xf32, #tpu.memory_space<vmem>>, vector<1x8x1xf32>
    %92 = vector.shape_cast %91 : vector<1x8x1xf32> to vector<8x1xf32>
    %93 = vector.shape_cast %67 : vector<8x1xf32> to vector<1x8x1xf32>
    tpu.vector_store %arg11[%c1_56, %c0_57, %c0_58], %93 {strides = array<i32>} : memref<4x8x1xf32, #tpu.memory_space<vmem>>, vector<1x8x1xf32>,
    %94 = vector.extract_strided_slice %4 {offsets = [0, 16], sizes = [8, 8], strides = [1, 1]} : vector<8x32xf32> to vector<8x8xf32>
    %95 = vector.extract_strided_slice %6 {offsets = [0, 16], sizes = [8, 8], strides = [1, 1]} : vector<8x32xf32> to vector<8x8xf32>
    %96 = vector.extract_strided_slice %8 {offsets = [0, 16], sizes = [8, 8], strides = [1, 1]} : vector<8x32xf32> to vector<8x8xf32>
    %cst_59 = arith.constant dense<0.000000e+00> : vector<8x8xf32>
    %97 = tpu.matmul %94, %95, %cst_59 {dimension_numbers = #tpu.dot_dimension_numbers<[1], [1], [0], [0], [0, 0, 1, 0], [], []>} : vector<8x8xf32>, vector<8x8xf32>, vector<8x8xf32> -> vector<8x8xf32>
    %cst_60 = arith.constant 0.353553385 : f32
    %98 = vector.broadcast %cst_60 : f32 to vector<8x8xf32>
    %99 = arith.mulf %97, %98 : vector<8x8xf32>
    %100 = vector.broadcast %15 : vector<1x8xf32> to vector<8x8xf32>
    %101 = arith.addf %99, %100 : vector<8x8xf32>
    %c2 = arith.constant 2 : index
    %c0_61 = arith.constant 0 : index
    %c0_62 = arith.constant 0 : index
    %102 = vector.load %arg11[%c2, %c0_61, %c0_62] : memref<4x8x1xf32, #tpu.memory_space<vmem>>, vector<1x8x1xf32>
    %103 = vector.shape_cast %102 : vector<1x8x1xf32> to vector<8x1xf32>
    %cst_63 = arith.constant dense<0xFF800000> : vector<8xf32>
    %104 = vector.multi_reduction <maximumf>, %101, %cst_63 [1] : vector<8x8xf32> to vector<8xf32>
    %105 = vector.shape_cast %104 : vector<8xf32> to vector<8x1xf32>
    %106 = arith.maximumf %103, %105 : vector<8x1xf32>
    %107 = arith.subf %103, %106 : vector<8x1xf32>
    %108 = math.exp %107 : vector<8x1xf32>
    %109 = vector.broadcast %106 : vector<8x1xf32> to vector<8x8xf32>
    %110 = arith.subf %101, %109 : vector<8x8xf32>
    %111 = math.exp %110 : vector<8x8xf32>
    %c2_64 = arith.constant 2 : index
    %c0_65 = arith.constant 0 : index
    %c0_66 = arith.constant 0 : index
    %112 = vector.load %arg12[%c2_64, %c0_65, %c0_66] : memref<4x8x1xf32, #tpu.memory_space<vmem>>, vector<1x8x1xf32>
    %113 = vector.shape_cast %112 : vector<1x8x1xf32> to vector<8x1xf32>
    %114 = arith.mulf %108, %113 : vector<8x1xf32>
    %cst_67 = arith.constant dense<0.000000e+00> : vector<8xf32>
    %115 = vector.multi_reduction <add>, %111, %cst_67 [1] : vector<8x8xf32> to vector<8xf32>
    %116 = vector.shape_cast %115 : vector<8xf32> to vector<8x1xf32>
    %117 = arith.addf %114, %116 : vector<8x1xf32>
    %c2_68 = arith.constant 2 : index
    %c0_69 = arith.constant 0 : index
    %c0_70 = arith.constant 0 : index
    %118 = vector.load %arg12[%c2_68, %c0_69, %c0_70] : memref<4x8x1xf32, #tpu.memory_space<vmem>>, vector<1x8x1xf32>
    %119 = vector.shape_cast %118 : vector<1x8x1xf32> to vector<8x1xf32>
    %120 = vector.shape_cast %117 : vector<8x1xf32> to vector<1x8x1xf32>
    tpu.vector_store %arg12[%c2_68, %c0_69, %c0_70], %120 {strides = array<i32>} : memref<4x8x1xf32, #tpu.memory_space<vmem>>, vector<1x8x1xf32>,
    %c2_71 = arith.constant 2 : index
    %c0_72 = arith.constant 0 : index
    %c0_73 = arith.constant 0 : index
    %121 = vector.load %arg13[%c2_71, %c0_72, %c0_73] : memref<4x8x8xf32, #tpu.memory_space<vmem>>, vector<1x8x8xf32>
    %122 = vector.shape_cast %121 : vector<1x8x8xf32> to vector<8x8xf32>
    %123 = vector.broadcast %108 : vector<8x1xf32> to vector<8x8xf32>
    %124 = arith.mulf %123, %122 : vector<8x8xf32>
    %cst_74 = arith.constant dense<0.000000e+00> : vector<8x8xf32>
    %125 = tpu.matmul %111, %96, %cst_74 {dimension_numbers = #tpu.dot_dimension_numbers<[1], [0], [0], [1], [0, 0, 1, 1], [], []>} : vector<8x8xf32>, vector<8x8xf32>, vector<8x8xf32> -> vector<8x8xf32>
    %126 = arith.addf %124, %125 : vector<8x8xf32>
    %c2_75 = arith.constant 2 : index
    %c0_76 = arith.constant 0 : index
    %c0_77 = arith.constant 0 : index
    %127 = vector.load %arg13[%c2_75, %c0_76, %c0_77] : memref<4x8x8xf32, #tpu.memory_space<vmem>>, vector<1x8x8xf32>
    %128 = vector.shape_cast %127 : vector<1x8x8xf32> to vector<8x8xf32>
    %129 = vector.shape_cast %126 : vector<8x8xf32> to vector<1x8x8xf32>
    tpu.vector_store %arg13[%c2_75, %c0_76, %c0_77], %129 {strides = array<i32>} : memref<4x8x8xf32, #tpu.memory_space<vmem>>, vector<1x8x8xf32>,
    %c2_78 = arith.constant 2 : index
    %c0_79 = arith.constant 0 : index
    %c0_80 = arith.constant 0 : index
    %130 = vector.load %arg11[%c2_78, %c0_79, %c0_80] : memref<4x8x1xf32, #tpu.memory_space<vmem>>, vector<1x8x1xf32>
    %131 = vector.shape_cast %130 : vector<1x8x1xf32> to vector<8x1xf32>
    %132 = vector.shape_cast %106 : vector<8x1xf32> to vector<1x8x1xf32>
    tpu.vector_store %arg11[%c2_78, %c0_79, %c0_80], %132 {strides = array<i32>} : memref<4x8x1xf32, #tpu.memory_space<vmem>>, vector<1x8x1xf32>,
    %133 = vector.extract_strided_slice %4 {offsets = [0, 24], sizes = [8, 8], strides = [1, 1]} : vector<8x32xf32> to vector<8x8xf32>
    %134 = vector.extract_strided_slice %6 {offsets = [0, 24], sizes = [8, 8], strides = [1, 1]} : vector<8x32xf32> to vector<8x8xf32>
    %135 = vector.extract_strided_slice %8 {offsets = [0, 24], sizes = [8, 8], strides = [1, 1]} : vector<8x32xf32> to vector<8x8xf32>
    %cst_81 = arith.constant dense<0.000000e+00> : vector<8x8xf32>
    %136 = tpu.matmul %133, %134, %cst_81 {dimension_numbers = #tpu.dot_dimension_numbers<[1], [1], [0], [0], [0, 0, 1, 0], [], []>} : vector<8x8xf32>, vector<8x8xf32>, vector<8x8xf32> -> vector<8x8xf32>
    %cst_82 = arith.constant 0.353553385 : f32
    %137 = vector.broadcast %cst_82 : f32 to vector<8x8xf32>
    %138 = arith.mulf %136, %137 : vector<8x8xf32>
    %139 = vector.broadcast %15 : vector<1x8xf32> to vector<8x8xf32>
    %140 = arith.addf %138, %139 : vector<8x8xf32>
    %c3 = arith.constant 3 : index
    %c0_83 = arith.constant 0 : index
    %c0_84 = arith.constant 0 : index
    %141 = vector.load %arg11[%c3, %c0_83, %c0_84] : memref<4x8x1xf32, #tpu.memory_space<vmem>>, vector<1x8x1xf32>
    %142 = vector.shape_cast %141 : vector<1x8x1xf32> to vector<8x1xf32>
    %cst_85 = arith.constant dense<0xFF800000> : vector<8xf32>
    %143 = vector.multi_reduction <maximumf>, %140, %cst_85 [1] : vector<8x8xf32> to vector<8xf32>
    %144 = vector.shape_cast %143 : vector<8xf32> to vector<8x1xf32>
    %145 = arith.maximumf %142, %144 : vector<8x1xf32>
    %146 = arith.subf %142, %145 : vector<8x1xf32>
    %147 = math.exp %146 : vector<8x1xf32>
    %148 = vector.broadcast %145 : vector<8x1xf32> to vector<8x8xf32>
    %149 = arith.subf %140, %148 : vector<8x8xf32>
    %150 = math.exp %149 : vector<8x8xf32>
    %c3_86 = arith.constant 3 : index
    %c0_87 = arith.constant 0 : index
    %c0_88 = arith.constant 0 : index
    %151 = vector.load %arg12[%c3_86, %c0_87, %c0_88] : memref<4x8x1xf32, #tpu.memory_space<vmem>>, vector<1x8x1xf32>
    %152 = vector.shape_cast %151 : vector<1x8x1xf32> to vector<8x1xf32>
    %153 = arith.mulf %147, %152 : vector<8x1xf32>
    %cst_89 = arith.constant dense<0.000000e+00> : vector<8xf32>
    %154 = vector.multi_reduction <add>, %150, %cst_89 [1] : vector<8x8xf32> to vector<8xf32>
    %155 = vector.shape_cast %154 : vector<8xf32> to vector<8x1xf32>
    %156 = arith.addf %153, %155 : vector<8x1xf32>
    %c3_90 = arith.constant 3 : index
    %c0_91 = arith.constant 0 : index
    %c0_92 = arith.constant 0 : index
    %157 = vector.load %arg12[%c3_90, %c0_91, %c0_92] : memref<4x8x1xf32, #tpu.memory_space<vmem>>, vector<1x8x1xf32>
    %158 = vector.shape_cast %157 : vector<1x8x1xf32> to vector<8x1xf32>
    %159 = vector.shape_cast %156 : vector<8x1xf32> to vector<1x8x1xf32>
    tpu.vector_store %arg12[%c3_90, %c0_91, %c0_92], %159 {strides = array<i32>} : memref<4x8x1xf32, #tpu.memory_space<vmem>>, vector<1x8x1xf32>,
    %c3_93 = arith.constant 3 : index
    %c0_94 = arith.constant 0 : index
    %c0_95 = arith.constant 0 : index
    %160 = vector.load %arg13[%c3_93, %c0_94, %c0_95] : memref<4x8x8xf32, #tpu.memory_space<vmem>>, vector<1x8x8xf32>
    %161 = vector.shape_cast %160 : vector<1x8x8xf32> to vector<8x8xf32>
    %162 = vector.broadcast %147 : vector<8x1xf32> to vector<8x8xf32>
    %163 = arith.mulf %162, %161 : vector<8x8xf32>
    %cst_96 = arith.constant dense<0.000000e+00> : vector<8x8xf32>
    %164 = tpu.matmul %150, %135, %cst_96 {dimension_numbers = #tpu.dot_dimension_numbers<[1], [0], [0], [1], [0, 0, 1, 1], [], []>} : vector<8x8xf32>, vector<8x8xf32>, vector<8x8xf32> -> vector<8x8xf32>
    %165 = arith.addf %163, %164 : vector<8x8xf32>
    %c3_97 = arith.constant 3 : index
    %c0_98 = arith.constant 0 : index
    %c0_99 = arith.constant 0 : index
    %166 = vector.load %arg13[%c3_97, %c0_98, %c0_99] : memref<4x8x8xf32, #tpu.memory_space<vmem>>, vector<1x8x8xf32>
    %167 = vector.shape_cast %166 : vector<1x8x8xf32> to vector<8x8xf32>
    %168 = vector.shape_cast %165 : vector<8x8xf32> to vector<1x8x8xf32>
    tpu.vector_store %arg13[%c3_97, %c0_98, %c0_99], %168 {strides = array<i32>} : memref<4x8x8xf32, #tpu.memory_space<vmem>>, vector<1x8x8xf32>,
    %c3_100 = arith.constant 3 : index
    %c0_101 = arith.constant 0 : index
    %c0_102 = arith.constant 0 : index
    %169 = vector.load %arg11[%c3_100, %c0_101, %c0_102] : memref<4x8x1xf32, #tpu.memory_space<vmem>>, vector<1x8x1xf32>
    %170 = vector.shape_cast %169 : vector<1x8x1xf32> to vector<8x1xf32>
    %171 = vector.shape_cast %145 : vector<8x1xf32> to vector<1x8x1xf32>
    tpu.vector_store %arg11[%c3_100, %c0_101, %c0_102], %171 {strides = array<i32>} : memref<4x8x1xf32, #tpu.memory_space<vmem>>, vector<1x8x1xf32>,
    %c0_i32_103 = arith.constant 0 : i32
    %172 = arith.cmpi eq, %arg2, %c0_i32_103 : i32
    %173 = arith.extui %172 : i1 to i32
    %c0_i32_104 = arith.constant 0 : i32
    %174 = arith.cmpi ne, %173, %c0_i32_104 : i32
    scf.if %174 {
      %c0_105 = arith.constant 0 : index
      %c0_106 = arith.constant 0 : index
      %c0_107 = arith.constant 0 : index
      %175 = vector.load %arg12[%c0_105, %c0_106, %c0_107] : memref<4x8x1xf32, #tpu.memory_space<vmem>>, vector<1x8x1xf32>
      %176 = vector.shape_cast %175 : vector<1x8x1xf32> to vector<8x1xf32>
      %177 = tpu.reciprocal %176 {approx = true} : vector<8x1xf32> -> vector<8x1xf32>
      %c0_108 = arith.constant 0 : index
      %c0_109 = arith.constant 0 : index
      %c0_110 = arith.constant 0 : index
      %178 = vector.load %arg13[%c0_108, %c0_109, %c0_110] : memref<4x8x8xf32, #tpu.memory_space<vmem>>, vector<1x8x8xf32>
      %179 = vector.shape_cast %178 : vector<1x8x8xf32> to vector<8x8xf32>
      %180 = vector.broadcast %177 : vector<8x1xf32> to vector<8x8xf32>
      %181 = arith.mulf %179, %180 : vector<8x8xf32>
      %c1_111 = arith.constant 1 : index
      %c0_112 = arith.constant 0 : index
      %c0_113 = arith.constant 0 : index
      %182 = vector.load %arg12[%c1_111, %c0_112, %c0_113] : memref<4x8x1xf32, #tpu.memory_space<vmem>>, vector<1x8x1xf32>
      %183 = vector.shape_cast %182 : vector<1x8x1xf32> to vector<8x1xf32>
      %184 = tpu.reciprocal %183 {approx = true} : vector<8x1xf32> -> vector<8x1xf32>
      %c1_114 = arith.constant 1 : index
      %c0_115 = arith.constant 0 : index
      %c0_116 = arith.constant 0 : index
      %185 = vector.load %arg13[%c1_114, %c0_115, %c0_116] : memref<4x8x8xf32, #tpu.memory_space<vmem>>, vector<1x8x8xf32>
      %186 = vector.shape_cast %185 : vector<1x8x8xf32> to vector<8x8xf32>
      %187 = vector.broadcast %184 : vector<8x1xf32> to vector<8x8xf32>
      %188 = arith.mulf %186, %187 : vector<8x8xf32>
      %c2_117 = arith.constant 2 : index
      %c0_118 = arith.constant 0 : index
      %c0_119 = arith.constant 0 : index
      %189 = vector.load %arg12[%c2_117, %c0_118, %c0_119] : memref<4x8x1xf32, #tpu.memory_space<vmem>>, vector<1x8x1xf32>
      %190 = vector.shape_cast %189 : vector<1x8x1xf32> to vector<8x1xf32>
      %191 = tpu.reciprocal %190 {approx = true} : vector<8x1xf32> -> vector<8x1xf32>
      %c2_120 = arith.constant 2 : index
      %c0_121 = arith.constant 0 : index
      %c0_122 = arith.constant 0 : index
      %192 = vector.load %arg13[%c2_120, %c0_121, %c0_122] : memref<4x8x8xf32, #tpu.memory_space<vmem>>, vector<1x8x8xf32>
      %193 = vector.shape_cast %192 : vector<1x8x8xf32> to vector<8x8xf32>
      %194 = vector.broadcast %191 : vector<8x1xf32> to vector<8x8xf32>
      %195 = arith.mulf %193, %194 : vector<8x8xf32>
      %c3_123 = arith.constant 3 : index
      %c0_124 = arith.constant 0 : index
      %c0_125 = arith.constant 0 : index
      %196 = vector.load %arg12[%c3_123, %c0_124, %c0_125] : memref<4x8x1xf32, #tpu.memory_space<vmem>>, vector<1x8x1xf32>
      %197 = vector.shape_cast %196 : vector<1x8x1xf32> to vector<8x1xf32>
      %198 = tpu.reciprocal %197 {approx = true} : vector<8x1xf32> -> vector<8x1xf32>
      %c3_126 = arith.constant 3 : index
      %c0_127 = arith.constant 0 : index
      %c0_128 = arith.constant 0 : index
      %199 = vector.load %arg13[%c3_126, %c0_127, %c0_128] : memref<4x8x8xf32, #tpu.memory_space<vmem>>, vector<1x8x8xf32>
      %200 = vector.shape_cast %199 : vector<1x8x8xf32> to vector<8x8xf32>
      %201 = vector.broadcast %198 : vector<8x1xf32> to vector<8x8xf32>
      %202 = arith.mulf %200, %201 : vector<8x8xf32>
      %203 = tpu.concatenate %181, %188, %195, %202 in 1 : vector<8x8xf32>, vector<8x8xf32>, vector<8x8xf32>, vector<8x8xf32> -> vector<8x32xf32>
      %c0_129 = arith.constant 0 : index
      %c0_130 = arith.constant 0 : index
      %204 = vector.load %arg8[%c0_129, %c0_130] : memref<32x32xf32, #tpu.memory_space<vmem>>, vector<32x32xf32>
      %cst_131 = arith.constant dense<0.000000e+00> : vector<8x32xf32>
      %205 = tpu.matmul %203, %204, %cst_131 {dimension_numbers = #tpu.dot_dimension_numbers<[1], [0], [0], [1], [0, 0, 1, 1], [], []>} : vector<8x32xf32>, vector<32x32xf32>, vector<8x32xf32> -> vector<8x32xf32>
      %c0_132 = arith.constant 0 : index
      %c0_133 = arith.constant 0 : index
      %206 = vector.load %arg9[%c0_132, %c0_133] : memref<1x32xf32, #tpu.memory_space<vmem>>, vector<1x32xf32>
      %207 = vector.broadcast %206 : vector<1x32xf32> to vector<8x32xf32>
      %208 = arith.addf %205, %207 : vector<8x32xf32>
      %c0_134 = arith.constant 0 : index
      %c0_135 = arith.constant 0 : index
      %c0_136 = arith.constant 0 : index
      %209 = vector.load %arg7[%c0_134, %c0_135, %c0_136] : memref<1x8x32xf32, #tpu.memory_space<vmem>>, vector<1x8x32xf32>
      %210 = vector.shape_cast %209 : vector<1x8x32xf32> to vector<8x32xf32>
      %211 = arith.addf %208, %210 : vector<8x32xf32>
      %c0_137 = arith.constant 0 : index
      %c0_138 = arith.constant 0 : index
      %c0_139 = arith.constant 0 : index
      %212 = vector.load %arg10[%c0_137, %c0_138, %c0_139] : memref<1x8x32xf32, #tpu.memory_space<vmem>>, vector<1x8x32xf32>
      %213 = vector.shape_cast %212 : vector<1x8x32xf32> to vector<8x32xf32>
      %214 = vector.shape_cast %211 : vector<8x32xf32> to vector<1x8x32xf32>
      tpu.vector_store %arg10[%c0_137, %c0_138, %c0_139], %214 {strides = array<i32>} : memref<1x8x32xf32, #tpu.memory_space<vmem>>, vector<1x8x32xf32>,
    } else {
    }
    return
  }
  func.func @transform_0(%arg0: i32, %arg1: i32, %arg2: i32) -> (i32, i32, i32) {
    %c0_i32 = arith.constant 0 : i32
    %c0_i32_0 = arith.constant 0 : i32
    return %arg0, %arg1, %c0_i32 : i32, i32, i32
  }
  func.func @transform_1(%arg0: i32, %arg1: i32, %arg2: i32) -> (i32, i32, i32) {
    %c0_i32 = arith.constant 0 : i32
    %c0_i32_0 = arith.constant 0 : i32
    return %arg0, %arg2, %c0_i32 : i32, i32, i32
  }
  func.func @transform_2(%arg0: i32, %arg1: i32, %arg2: i32) -> (i32, i32, i32) {
    %c0_i32 = arith.constant 0 : i32
    %c0_i32_0 = arith.constant 0 : i32
    return %arg0, %arg2, %c0_i32 : i32, i32, i32
  }
  func.func @transform_3(%arg0: i32, %arg1: i32, %arg2: i32) -> (i32, i32, i32) {
    %c0_i32 = arith.constant 0 : i32
    %c0_i32_0 = arith.constant 0 : i32
    return %arg0, %c0_i32, %arg2 : i32, i32, i32
  }
  func.func @transform_4(%arg0: i32, %arg1: i32, %arg2: i32) -> (i32, i32, i32) {
    %c0_i32 = arith.constant 0 : i32
    %c0_i32_0 = arith.constant 0 : i32
    return %arg0, %arg1, %c0_i32 : i32, i32, i32
  }
  func.func @transform_5(%arg0: i32, %arg1: i32, %arg2: i32) -> (i32, i32) {
    %c0_i32 = arith.constant 0 : i32
    %c0_i32_0 = arith.constant 0 : i32
    %c0_i32_1 = arith.constant 0 : i32
    return %c0_i32, %c0_i32_0 : i32, i32
  }
  func.func @transform_6(%arg0: i32, %arg1: i32, %arg2: i32) -> (i32, i32) {
    %c0_i32 = arith.constant 0 : i32
    %c0_i32_0 = arith.constant 0 : i32
    %c0_i32_1 = arith.constant 0 : i32
    return %c0_i32, %c0_i32_0 : i32, i32
  }
  func.func @transform_7(%arg0: i32, %arg1: i32, %arg2: i32) -> (i32, i32, i32) {
    %c0_i32 = arith.constant 0 : i32
    %c0_i32_0 = arith.constant 0 : i32
    return %arg0, %arg1, %c0_i32 : i32, i32, i32
  }
}

</mosaic_0001>

<llo_original>
// kernel: decoder_layer.8
$region0: #{decoder_layer.8}
  #allocation0 [shape = 'u32[]', space=smem, size = 0x4, offset = 0x4, fixed_abs, tag = 'smem constant byte address 0x4 - core index']
  #allocation1 [shape = 'u32[144,128]{1,0:T(1,128)}', space=vmem, size = 0x12000, scoped, tag = 'internal scratch']
  %s0 = inlined_call_operand.vmem [shape: f32[16,32], index: 0, kind: input, shape index: {}]
  %s1 = inlined_call_operand.vmem [shape: f32[1,32], index: 1, kind: input, shape index: {}]
  %s2 = inlined_call_operand.vmem [shape: f32[1,32], index: 2, kind: input, shape index: {}]
  %s3 = inlined_call_operand.vmem [shape: f32[32,32], index: 3, kind: input, shape index: {}]
  %s4 = inlined_call_operand.vmem [shape: f32[1,32], index: 4, kind: input, shape index: {}]
  %s5 = inlined_call_operand.vmem [shape: f32[16,32], index: 5, kind: output, shape index: {}]
  %s6 = sld [smem:[#allocation0]]
  $region30: #{decoder_layer.8} parent=0
    _
  %s8 = ssub.s32 1, %s6
  %s9 = scalar_select 0, %s8, %s6
  // Predicated region
  $region2: #{decoder_layer.8} parent=0 // pred_check
    _
  $region3: #{decoder_layer.8} parent=0 // pred_check_branch
    %11 = sbr.rel (0) target = $region5
  $region4: #{decoder_layer.8} parent=0 // pred_region
    _
  $region5: #{decoder_layer.8} parent=0 // pred_fallthru
    _
  // Predicated region
  $region6: #{decoder_layer.8} parent=0 // pred_check
    _
  $region7: #{decoder_layer.8} parent=0 // pred_check_branch
    %13 = sbr.rel (0) target = $region9
  $region8: #{decoder_layer.8} parent=0 // pred_region
    _
  $region9: #{decoder_layer.8} parent=0 // pred_fallthru
    _
  // Predicated region
  $region10: #{decoder_layer.8} parent=0 // pred_check
    _
  $region11: #{decoder_layer.8} parent=0 // pred_check_branch
    %15 = sbr.rel (0) target = $region13
  $region12: #{decoder_layer.8} parent=0 // pred_region
    _
  $region13: #{decoder_layer.8} parent=0 // pred_fallthru
    _
  // Predicated region
  $region14: #{decoder_layer.8} parent=0 // pred_check
    _
  $region15: #{decoder_layer.8} parent=0 // pred_check_branch
    %17 = sbr.rel (0) target = $region17
  $region16: #{decoder_layer.8} parent=0 // pred_region
    _
  $region17: #{decoder_layer.8} parent=0 // pred_fallthru
    _
  // Predicated region
  $region18: #{decoder_layer.8} parent=0 // pred_check
    _
  $region19: #{decoder_layer.8} parent=0 // pred_check_branch
    %19 = sbr.rel (0) target = $region21
  $region20: #{decoder_layer.8} parent=0 // pred_region
    _
  $region21: #{decoder_layer.8} parent=0 // pred_fallthru
    _
  %v20 = vld [vmem:[%s0] sm:$0xff]
  %v21 = vld [vmem:[%s0 + $0x8] sm:$0xff]
  %v22 = vld [vmem:[%s1] sm:$0x1]
  %v23 = vld [vmem:[%s2] sm:$0x1]
  %vm24 = vcmask 261120
  %v25 = vsel %vm24, %v20, 0.0
  %26 = vadd.xlane.f32.xlu0 %v25
  %v27 = vpop.xlane.xlu0 %26
  %v28 = vsel %vm24, %v21, 0.0
  %29 = vadd.xlane.f32.xlu0 %v28
  %v30 = vpop.xlane.xlu0 %29
  %v31 = vrcp.pop 32.0
  %v32 = vmul.f32 %v27, %v31
  %v33 = vmul.f32 %v30, %v31
  %v34 = vsub.f32 %v20, %v32
  %v35 = vsub.f32 %v21, %v33
  %v36 = vmul.f32 %v34, %v34
  %v37 = vmul.f32 %v35, %v35
  %v38 = vsel %vm24, %v36, 0.0
  %39 = vadd.xlane.f32.xlu0 %v38
  %v40 = vpop.xlane.xlu0 %39
  %v41 = vsel %vm24, %v37, 0.0
  %42 = vadd.xlane.f32.xlu0 %v41
  %v43 = vpop.xlane.xlu0 %42
  %v44 = vrcp.pop 31.0
  %v45 = vmul.f32 %v40, %v44
  %v46 = vmul.f32 %v43, %v44
  %v47 = vrsqrt.pop %v45
  %v48 = vmul.f32 %v45, %v47
  %vm49 = vcmp.eq.f32.partialorder %v45, inf
  %v50 = vsel %vm49, %v45, %v48
  %vm51 = vcmp.eq.f32.partialorder %v45, 0.0
  %v52 = vand.u32 %v45, 2147483648
  %v53 = vsel %vm51, %v52, %v50
  %v54 = vrsqrt.pop %v46
  %v55 = vmul.f32 %v46, %v54
  %vm56 = vcmp.eq.f32.partialorder %v46, inf
  %v57 = vsel %vm56, %v46, %v55
  %vm58 = vcmp.eq.f32.partialorder %v46, 0.0
  %v59 = vand.u32 %v46, 2147483648
  %v60 = vsel %vm58, %v59, %v57
  %v61 = vadd.f32 %v53, 1e-06
  %v62 = vadd.f32 %v60, 1e-06
  %v63 = vrcp.pop %v61
  %v64 = vrcp.pop %v62
  %v66 = vlaneseq
  %v67 = vshrl.u32 %v66, 7
  %v68 = vsub.s32 0, %v67
  %v69 = vrot.slane %v22, %v68
  %v71 = vmul.f32 %v69, %v34
  %v72 = vmul.f32 %v69, %v35
  %v73 = vmul.f32 %v71, %v63
  %v74 = vmul.f32 %v72, %v64
  %v76 = vlaneseq
  %v77 = vshrl.u32 %v76, 7
  %v78 = vsub.s32 0, %v77
  %v79 = vrot.slane %v23, %v78
  %v81 = vadd.f32 %v73, %v79
  %v82 = vadd.f32 %v74, %v79
  %v83 = vld [vmem:[%s3] sm:$0xff]
  %v84 = vld [vmem:[%s3 + $0x8] sm:$0xff]
  %v85 = vld [vmem:[%s3 + $0x10] sm:$0xff]
  %v86 = vld [vmem:[%s3 + $0x18] sm:$0xff]
  %v87 = vld [vmem:[%s4] sm:$0x1]
  %v89 = vlaneseq
  %v90 = vshrl.u32 %v89, 7
  %v91 = vsub.s32 0, %v90
  %v92 = vrot.slane %v87, %v91
  %v95 = vsel %vm24, %v81, 0
  %v98 = vsel %vm24, %v82, 0
  %100 = vmatprep.subr.mxu0 0.0
  %101 = vmatpush1.msra.mxu0 0.0
  %102 = vmatprep.subr.mxu0 0.0
  %103 = vmatpush1.msra.mxu0 0.0
  %104 = vmatprep.subr.mxu0 0.0
  %105 = vmatpush1.msra.mxu0 0.0
  %106 = vmatprep.subr.mxu0 0.0
  %107 = vmatpush1.msra.mxu0 0.0
  %108 = vmatprep.subr.mxu0 0.0
  %109 = vmatpush1.msra.mxu0 0.0
  %110 = vmatprep.subr.mxu0 0.0
  %111 = vmatpush1.msra.mxu0 0.0
  %112 = vmatprep.subr.mxu0 0.0
  %113 = vmatpush1.msra.mxu0 0.0
  %114 = vmatprep.subr.mxu0 0.0
  %115 = vmatpush1.msra.mxu0 0.0
  %116 = vmatprep.subr.mxu0 0.0
  %117 = vmatpush1.msra.mxu0 0.0
  %118 = vmatprep.subr.mxu0 0.0
  %119 = vmatpush1.msra.mxu0 0.0
  %120 = vmatprep.subr.mxu0 0.0
  %121 = vmatpush1.msra.mxu0 0.0
  %122 = vmatprep.subr.mxu0 0.0
  %123 = vmatpush1.msra.mxu0 0.0
  %124 = vmatprep.subr.mxu0 0.0
  %125 = vmatpush1.msra.mxu0 %v86
  %126 = vmatprep.subr.mxu0 0.0
  %127 = vmatpush1.msra.mxu0 %v85
  %128 = vmatprep.subr.mxu0 0.0
  %129 = vmatpush1.msra.mxu0 %v84
  %130 = vmatprep.subr.mxu0 0.0
  %131 = vmatpush1.msra.mxu0 %v83
  %132 = vmatprep.subr.mxu0 0.0
  %133 = vmatpush2.msra.mxu0 0.0
  %134 = vmatprep.subr.mxu0 0.0
  %135 = vmatpush2.msra.mxu0 0.0
  %136 = vmatprep.subr.mxu0 0.0
  %137 = vmatpush2.msra.mxu0 0.0
  %138 = vmatprep.subr.mxu0 0.0
  %139 = vmatpush2.msra.mxu0 0.0
  %140 = vmatprep.subr.mxu0 0.0
  %141 = vmatpush2.msra.mxu0 0.0
  %142 = vmatprep.subr.mxu0 0.0
  %143 = vmatpush2.msra.mxu0 0.0
  %144 = vmatprep.subr.mxu0 0.0
  %145 = vmatpush2.msra.mxu0 0.0
  %146 = vmatprep.subr.mxu0 0.0
  %147 = vmatpush2.msra.mxu0 0.0
  %148 = vmatprep.subr.mxu0 0.0
  %149 = vmatpush2.msra.mxu0 0.0
  %150 = vmatprep.subr.mxu0 0.0
  %151 = vmatpush2.msra.mxu0 0.0
  %152 = vmatprep.subr.mxu0 0.0
  %153 = vmatpush2.msra.mxu0 0.0
  %154 = vmatprep.subr.mxu0 0.0
  %155 = vmatpush2.msra.mxu0 0.0
  %156 = vmatprep.subr.mxu0 0.0
  %157 = vmatpush2.msra.mxu0 0.0
  %158 = vmatprep.subr.mxu0 0.0
  %159 = vmatpush2.msra.mxu0 0.0
  %160 = vmatprep.subr.mxu0 0.0
  %161 = vmatpush2.msra.mxu0 0.0
  %162 = vmatprep.subr.mxu0 0.0
  %163 = vmatpush2.msra.mxu0 0.0
  %164 = vmatprep.mubr.f32.mxu0 0.0
  %165 = vmatmul.mubr.f32.gmra.mxu0 %v95
  %v166 = vpop.f32.mrf.mxu0
  %v167 = vadd.f32 %v92, %v166
  %v168 = vpop.f32.mrf.mxu0
  %169 = vmatprep.mubr.f32.mxu0 0.0
  %170 = vmatmul.mubr.f32.gmra.mxu0 %v98
  %v171 = vpop.f32.mrf.mxu0
  %v172 = vadd.f32 %v92, %v171
  %v173 = vpop.f32.mrf.mxu0
  %174 = vdwg.mxu0
  %175 = vst.msk [vmem:[%s5] sm:$0xff] %vm24, %v167
  %176 = vst.msk [vmem:[%s5 + $0x8] sm:$0xff] %vm24, %v172
  // Predicated region
  $region22: #{decoder_layer.8} parent=0 // pred_check
    _
  $region23: #{decoder_layer.8} parent=0 // pred_check_branch
    %178 = sbr.rel (0) target = $region25
  $region24: #{decoder_layer.8} parent=0 // pred_region
    _
  $region25: #{decoder_layer.8} parent=0 // pred_fallthru
    _
  // Predicated region
  $region26: #{decoder_layer.8} parent=0 // pred_check
    _
  $region27: #{decoder_layer.8} parent=0 // pred_check_branch
    %180 = sbr.rel (0) target = $region29
  $region28: #{decoder_layer.8} parent=0 // pred_region
    _
  $region29: #{decoder_layer.8} parent=0 // pred_fallthru
    _

// kernel: decoder_layer.9
$region0: #{decoder_layer.9}
  #allocation0 [shape = 'u32[]', space=smem, size = 0x4, offset = 0x4, fixed_abs, tag = 'smem constant byte address 0x4 - core index']
  #allocation1 [shape = 'u32[144,128]{1,0:T(1,128)}', space=vmem, size = 0x12000, scoped, tag = 'internal scratch']
  %s0 = inlined_call_operand.hbm [shape: f32[16,32], index: 0, kind: input, shape index: {}]
  %s1 = inlined_call_operand.vmem [shape: f32[32,32], index: 1, kind: input, shape index: {}]
  %s2 = inlined_call_operand.vmem [shape: f32[32,32], index: 2, kind: input, shape index: {}]
  %s3 = inlined_call_operand.vmem [shape: f32[1,32], index: 3, kind: input, shape index: {}]
  %s4 = inlined_call_operand.hbm [shape: f32[1,32], index: 4, kind: input, shape index: {}]
  %s5 = inlined_call_operand.vmem [shape: f32[16,32], index: 5, kind: output, shape index: {0}]
  %s6 = inlined_call_operand.vmem [shape: f32[16,32], index: 6, kind: output, shape index: {1}]
  %7 = xla_tuple %s5, %s6
  %s8 = sld [smem:[#allocation0]]
  $region46: #{decoder_layer.9} parent=0
    _
  %s10 = ssub.s32 1, %s8
  %s11 = scalar_select 0, %s10, %s8
  $region1: #{decoder_layer.9} parent=0
    #allocation2 [shape = 'u8[8192]{0}', space=vmem, size = 0x2000, scoped, tag = 'input window, operand 0, single buffered']
    #allocation3 [shape = 's32[1]{0}', space=sflag, size = 0x4, scoped, tag = 'scoped memory for decoder_layer.9']
    #allocation4 [shape = 'u8[512]{0}', space=vmem, size = 0x400, scoped, tag = 'input window, operand 4, single buffered']
    #allocation5 [shape = 's32[1]{0}', space=sflag, size = 0x4, scoped, tag = 'scoped memory for decoder_layer.9']
    %12 = vsyncpa [#allocation3], 0
    %13 = vsyncpa [#allocation5], 0
    // Predicated region
    $region2: #{decoder_layer.9} parent=1 // pred_check
      _
    $region3: #{decoder_layer.9} parent=1 // pred_check_branch
      %15 = sbr.rel (0) target = $region5
    $region4: #{decoder_layer.9} parent=1 // pred_region
      %s17 = ssub.s32 256, 256
      %18 = vsyncadd [#allocation3], %s17
      %s19 = sshll.u32 [#allocation2], 4
      %s20 = int_to_ptr.vmem [resolvable:$true] %s19
      %25 = dma.hbm_to_vmem [thread:$0]  %s0, 256, %s20, [#allocation3], 128, 128, 8
    $region5: #{decoder_layer.9} parent=1 // pred_fallthru
      _
    // Predicated region
    $region6: #{decoder_layer.9} parent=1 // pred_check
      _
    $region7: #{decoder_layer.9} parent=1 // pred_check_branch
      %27 = sbr.rel (0) target = $region9
    $region8: #{decoder_layer.9} parent=1 // pred_region
      _
    $region9: #{decoder_layer.9} parent=1 // pred_fallthru
      _
    // Predicated region
    $region10: #{decoder_layer.9} parent=1 // pred_check
      _
    $region11: #{decoder_layer.9} parent=1 // pred_check_branch
      %29 = sbr.rel (0) target = $region13
    $region12: #{decoder_layer.9} parent=1 // pred_region
      _
    $region13: #{decoder_layer.9} parent=1 // pred_fallthru
      _
    // Predicated region
    $region14: #{decoder_layer.9} parent=1 // pred_check
      _
    $region15: #{decoder_layer.9} parent=1 // pred_check_branch
      %31 = sbr.rel (0) target = $region17
    $region16: #{decoder_layer.9} parent=1 // pred_region
      _
    $region17: #{decoder_layer.9} parent=1 // pred_fallthru
      _
    // Predicated region
    $region18: #{decoder_layer.9} parent=1 // pred_check
      _
    $region19: #{decoder_layer.9} parent=1 // pred_check_branch
      %33 = sbr.rel (0) target = $region21
    $region20: #{decoder_layer.9} parent=1 // pred_region
      %s35 = ssub.s32 16, 16
      %36 = vsyncadd [#allocation5], %s35
      %s38 = sshll.u32 [#allocation4], 4
      %s39 = int_to_ptr.vmem [resolvable:$true] %s38
      %41 = dma.hbm_to_vmem [thread:$0]  %s4, 16, %s39, [#allocation5]
    $region21: #{decoder_layer.9} parent=1 // pred_fallthru
      _
    // Predicated region
    $region22: #{decoder_layer.9} parent=1 // pred_check
      _
    $region23: #{decoder_layer.9} parent=1 // pred_check_branch
      %43 = sbr.rel (0) target = $region25
    $region24: #{decoder_layer.9} parent=1 // pred_region
      %44 = dma.done [#allocation3], 256
    $region25: #{decoder_layer.9} parent=1 // pred_fallthru
      _
    // Predicated region
    $region26: #{decoder_layer.9} parent=1 // pred_check
      _
    $region27: #{decoder_layer.9} parent=1 // pred_check_branch
      %46 = sbr.rel (0) target = $region29
    $region28: #{decoder_layer.9} parent=1 // pred_region
      %47 = dma.done [#allocation5], 16
    $region29: #{decoder_layer.9} parent=1 // pred_fallthru
      _
    %v48 = vld [vmem:[#allocation2] sm:$0xff]
    %v49 = vld [vmem:[#allocation2 + $0x8] sm:$0xff]
    %v50 = vld [vmem:[%s1] sm:$0xff]
    %v51 = vld [vmem:[%s1 + $0x8] sm:$0xff]
    %v52 = vld [vmem:[%s1 + $0x10] sm:$0xff]
    %v53 = vld [vmem:[%s1 + $0x18] sm:$0xff]
    %v54 = vld [vmem:[%s3] sm:$0x1]
    %v56 = vlaneseq
    %v57 = vshrl.u32 %v56, 7
    %v58 = vsub.s32 0, %v57
    %v59 = vrot.slane %v54, %v58
    %vm61 = vcmask 261120
    %v63 = vsel %vm61, %v48, 0
    %v66 = vsel %vm61, %v49, 0
    %68 = vmatprep.subr.mxu0 0.0
    %69 = vmatpush1.msra.mxu0 0.0
    %70 = vmatprep.subr.mxu0 0.0
    %71 = vmatpush1.msra.mxu0 0.0
    %72 = vmatprep.subr.mxu0 0.0
    %73 = vmatpush1.msra.mxu0 0.0
    %74 = vmatprep.subr.mxu0 0.0
    %75 = vmatpush1.msra.mxu0 0.0
    %76 = vmatprep.subr.mxu0 0.0
    %77 = vmatpush1.msra.mxu0 0.0
    %78 = vmatprep.subr.mxu0 0.0
    %79 = vmatpush1.msra.mxu0 0.0
    %80 = vmatprep.subr.mxu0 0.0
    %81 = vmatpush1.msra.mxu0 0.0
    %82 = vmatprep.subr.mxu0 0.0
    %83 = vmatpush1.msra.mxu0 0.0
    %84 = vmatprep.subr.mxu0 0.0
    %85 = vmatpush1.msra.mxu0 0.0
    %86 = vmatprep.subr.mxu0 0.0
    %87 = vmatpush1.msra.mxu0 0.0
    %88 = vmatprep.subr.mxu0 0.0
    %89 = vmatpush1.msra.mxu0 0.0
    %90 = vmatprep.subr.mxu0 0.0
    %91 = vmatpush1.msra.mxu0 0.0
    %92 = vmatprep.subr.mxu0 0.0
    %93 = vmatpush1.msra.mxu0 %v53
    %94 = vmatprep.subr.mxu0 0.0
    %95 = vmatpush1.msra.mxu0 %v52
    %96 = vmatprep.subr.mxu0 0.0
    %97 = vmatpush1.msra.mxu0 %v51
    %98 = vmatprep.subr.mxu0 0.0
    %99 = vmatpush1.msra.mxu0 %v50
    %100 = vmatprep.subr.mxu0 0.0
    %101 = vmatpush2.msra.mxu0 0.0
    %102 = vmatprep.subr.mxu0 0.0
    %103 = vmatpush2.msra.mxu0 0.0
    %104 = vmatprep.subr.mxu0 0.0
    %105 = vmatpush2.msra.mxu0 0.0
    %106 = vmatprep.subr.mxu0 0.0
    %107 = vmatpush2.msra.mxu0 0.0
    %108 = vmatprep.subr.mxu0 0.0
    %109 = vmatpush2.msra.mxu0 0.0
    %110 = vmatprep.subr.mxu0 0.0
    %111 = vmatpush2.msra.mxu0 0.0
    %112 = vmatprep.subr.mxu0 0.0
    %113 = vmatpush2.msra.mxu0 0.0
    %114 = vmatprep.subr.mxu0 0.0
    %115 = vmatpush2.msra.mxu0 0.0
    %116 = vmatprep.subr.mxu0 0.0
    %117 = vmatpush2.msra.mxu0 0.0
    %118 = vmatprep.subr.mxu0 0.0
    %119 = vmatpush2.msra.mxu0 0.0
    %120 = vmatprep.subr.mxu0 0.0
    %121 = vmatpush2.msra.mxu0 0.0
    %122 = vmatprep.subr.mxu0 0.0
    %123 = vmatpush2.msra.mxu0 0.0
    %124 = vmatprep.subr.mxu0 0.0
    %125 = vmatpush2.msra.mxu0 0.0
    %126 = vmatprep.subr.mxu0 0.0
    %127 = vmatpush2.msra.mxu0 0.0
    %128 = vmatprep.subr.mxu0 0.0
    %129 = vmatpush2.msra.mxu0 0.0
    %130 = vmatprep.subr.mxu0 0.0
    %131 = vmatpush2.msra.mxu0 0.0
    %132 = vmatprep.mubr.f32.mxu0 0.0
    %133 = vmatmul.mubr.f32.gmra.mxu0 %v63
    %v134 = vpop.f32.mrf.mxu0
    %v135 = vadd.f32 %v59, %v134
    %v136 = vpop.f32.mrf.mxu0
    %137 = vmatprep.mubr.f32.mxu0 0.0
    %138 = vmatmul.mubr.f32.gmra.mxu0 %v66
    %v139 = vpop.f32.mrf.mxu0
    %v140 = vadd.f32 %v59, %v139
    %v141 = vpop.f32.mrf.mxu0
    %142 = vdwg.mxu0
    %143 = vst.msk [vmem:[%s5] sm:$0xff] %vm61, %v135
    %144 = vst.msk [vmem:[%s5 + $0x8] sm:$0xff] %vm61, %v140
    %v145 = vld [vmem:[%s2] sm:$0xff]
    %v146 = vld [vmem:[%s2 + $0x8] sm:$0xff]
    %v147 = vld [vmem:[%s2 + $0x10] sm:$0xff]
    %v148 = vld [vmem:[%s2 + $0x18] sm:$0xff]
    %v149 = vld [vmem:[#allocation4] sm:$0x1]
    %v151 = vlaneseq
    %v152 = vshrl.u32 %v151, 7
    %v153 = vsub.s32 0, %v152
    %v154 = vrot.slane %v149, %v153
    %156 = vmatprep.subr.mxu0 0.0
    %157 = vmatpush1.msra.mxu0 0.0
    %158 = vmatprep.subr.mxu0 0.0
    %159 = vmatpush1.msra.mxu0 0.0
    %160 = vmatprep.subr.mxu0 0.0
    %161 = vmatpush1.msra.mxu0 0.0
    %162 = vmatprep.subr.mxu0 0.0
    %163 = vmatpush1.msra.mxu0 0.0
    %164 = vmatprep.subr.mxu0 0.0
    %165 = vmatpush1.msra.mxu0 0.0
    %166 = vmatprep.subr.mxu0 0.0
    %167 = vmatpush1.msra.mxu0 0.0
    %168 = vmatprep.subr.mxu0 0.0
    %169 = vmatpush1.msra.mxu0 0.0
    %170 = vmatprep.subr.mxu0 0.0
    %171 = vmatpush1.msra.mxu0 0.0
    %172 = vmatprep.subr.mxu0 0.0
    %173 = vmatpush1.msra.mxu0 0.0
    %174 = vmatprep.subr.mxu0 0.0
    %175 = vmatpush1.msra.mxu0 0.0
    %176 = vmatprep.subr.mxu0 0.0
    %177 = vmatpush1.msra.mxu0 0.0
    %178 = vmatprep.subr.mxu0 0.0
    %179 = vmatpush1.msra.mxu0 0.0
    %180 = vmatprep.subr.mxu0 0.0
    %181 = vmatpush1.msra.mxu0 %v148
    %182 = vmatprep.subr.mxu0 0.0
    %183 = vmatpush1.msra.mxu0 %v147
    %184 = vmatprep.subr.mxu0 0.0
    %185 = vmatpush1.msra.mxu0 %v146
    %186 = vmatprep.subr.mxu0 0.0
    %187 = vmatpush1.msra.mxu0 %v145
    %188 = vmatprep.subr.mxu0 0.0
    %189 = vmatpush2.msra.mxu0 0.0
    %190 = vmatprep.subr.mxu0 0.0
    %191 = vmatpush2.msra.mxu0 0.0
    %192 = vmatprep.subr.mxu0 0.0
    %193 = vmatpush2.msra.mxu0 0.0
    %194 = vmatprep.subr.mxu0 0.0
    %195 = vmatpush2.msra.mxu0 0.0
    %196 = vmatprep.subr.mxu0 0.0
    %197 = vmatpush2.msra.mxu0 0.0
    %198 = vmatprep.subr.mxu0 0.0
    %199 = vmatpush2.msra.mxu0 0.0
    %200 = vmatprep.subr.mxu0 0.0
    %201 = vmatpush2.msra.mxu0 0.0
    %202 = vmatprep.subr.mxu0 0.0
    %203 = vmatpush2.msra.mxu0 0.0
    %204 = vmatprep.subr.mxu0 0.0
    %205 = vmatpush2.msra.mxu0 0.0
    %206 = vmatprep.subr.mxu0 0.0
    %207 = vmatpush2.msra.mxu0 0.0
    %208 = vmatprep.subr.mxu0 0.0
    %209 = vmatpush2.msra.mxu0 0.0
    %210 = vmatprep.subr.mxu0 0.0
    %211 = vmatpush2.msra.mxu0 0.0
    %212 = vmatprep.subr.mxu0 0.0
    %213 = vmatpush2.msra.mxu0 0.0
    %214 = vmatprep.subr.mxu0 0.0
    %215 = vmatpush2.msra.mxu0 0.0
    %216 = vmatprep.subr.mxu0 0.0
    %217 = vmatpush2.msra.mxu0 0.0
    %218 = vmatprep.subr.mxu0 0.0
    %219 = vmatpush2.msra.mxu0 0.0
    %220 = vmatprep.mubr.f32.mxu0 0.0
    %221 = vmatmul.mubr.f32.gmra.mxu0 %v63
    %v222 = vpop.f32.mrf.mxu0
    %v223 = vadd.f32 %v154, %v222
    %v224 = vpop.f32.mrf.mxu0
    %225 = vmatprep.mubr.f32.mxu0 0.0
    %226 = vmatmul.mubr.f32.gmra.mxu0 %v66
    %v227 = vpop.f32.mrf.mxu0
    %v228 = vadd.f32 %v154, %v227
    %v229 = vpop.f32.mrf.mxu0
    %230 = vdwg.mxu0
    %231 = vst.msk [vmem:[%s6] sm:$0xff] %vm61, %v223
    %232 = vst.msk [vmem:[%s6 + $0x8] sm:$0xff] %vm61, %v228
    // Predicated region
    $region30: #{decoder_layer.9} parent=1 // pred_check
      _
    $region31: #{decoder_layer.9} parent=1 // pred_check_branch
      %234 = sbr.rel (0) target = $region33
    $region32: #{decoder_layer.9} parent=1 // pred_region
      _
    $region33: #{decoder_layer.9} parent=1 // pred_fallthru
      _
    // Predicated region
    $region34: #{decoder_layer.9} parent=1 // pred_check
      _
    $region35: #{decoder_layer.9} parent=1 // pred_check_branch
      %236 = sbr.rel (0) target = $region37
    $region36: #{decoder_layer.9} parent=1 // pred_region
      _
    $region37: #{decoder_layer.9} parent=1 // pred_fallthru
      _
    // Predicated region
    $region38: #{decoder_layer.9} parent=1 // pred_check
      _
    $region39: #{decoder_layer.9} parent=1 // pred_check_branch
      %238 = sbr.rel (0) target = $region41
    $region40: #{decoder_layer.9} parent=1 // pred_region
      _
    $region41: #{decoder_layer.9} parent=1 // pred_fallthru
      _
    // Predicated region
    $region42: #{decoder_layer.9} parent=1 // pred_check
      _
    $region43: #{decoder_layer.9} parent=1 // pred_check_branch
      %240 = sbr.rel (0) target = $region45
    $region44: #{decoder_layer.9} parent=1 // pred_region
      _
    $region45: #{decoder_layer.9} parent=1 // pred_fallthru
      _
    %241 = vsyncpa [#allocation3], 1
    %242 = vsyncpa [#allocation5], 1

// kernel: decoder_layer.6
$region0: #{decoder_layer.6}
  #allocation0 [shape = 'u32[]', space=smem, size = 0x4, offset = 0x4, fixed_abs, tag = 'smem constant byte address 0x4 - core index']
  #allocation1 [shape = 'u32[144,128]{1,0:T(1,128)}', space=vmem, size = 0x12000, scoped, tag = 'internal scratch']
  %s0 = inlined_call_operand.vmem [shape: f32[16,32], index: 0, kind: input, shape index: {}]
  %s1 = inlined_call_operand.vmem [shape: f32[1,32], index: 1, kind: input, shape index: {}]
  %s2 = inlined_call_operand.vmem [shape: f32[1,32], index: 2, kind: input, shape index: {}]
  %s3 = inlined_call_operand.vmem [shape: f32[32,32], index: 3, kind: input, shape index: {}]
  %s4 = inlined_call_operand.vmem [shape: f32[32,32], index: 4, kind: input, shape index: {}]
  %s5 = inlined_call_operand.hbm [shape: f32[32,32], index: 5, kind: input, shape index: {}]
  %s6 = inlined_call_operand.vmem [shape: f32[1,32], index: 6, kind: input, shape index: {}]
  %s7 = inlined_call_operand.vmem [shape: f32[1,32], index: 7, kind: input, shape index: {}]
  %s8 = inlined_call_operand.vmem [shape: f32[1,32], index: 8, kind: input, shape index: {}]
  %s9 = inlined_call_operand.vmem [shape: f32[16,32], index: 9, kind: output, shape index: {0}]
  %s10 = inlined_call_operand.vmem [shape: f32[16,32], index: 10, kind: output, shape index: {1}]
  %s11 = inlined_call_operand.vmem [shape: f32[16,32], index: 11, kind: output, shape index: {2}]
  %12 = xla_tuple %s9, %s10, %s11
  %s13 = sld [smem:[#allocation0]]
  $region66: #{decoder_layer.6} parent=0
    _
  %s15 = ssub.s32 1, %s13
  %s16 = scalar_select 0, %s15, %s13
  $region1: #{decoder_layer.6} parent=0
    #allocation2 [shape = 'u8[16384]{0}', space=vmem, size = 0x4000, scoped, tag = 'input window, operand 5, single buffered']
    #allocation3 [shape = 's32[1]{0}', space=sflag, size = 0x4, scoped, tag = 'scoped memory for decoder_layer.6']
    %17 = vsyncpa [#allocation3], 0
    // Predicated region
    $region2: #{decoder_layer.6} parent=1 // pred_check
      _
    $region3: #{decoder_layer.6} parent=1 // pred_check_branch
      %19 = sbr.rel (0) target = $region5
    $region4: #{decoder_layer.6} parent=1 // pred_region
      _
    $region5: #{decoder_layer.6} parent=1 // pred_fallthru
      _
    // Predicated region
    $region6: #{decoder_layer.6} parent=1 // pred_check
      _
    $region7: #{decoder_layer.6} parent=1 // pred_check_branch
      %21 = sbr.rel (0) target = $region9
    $region8: #{decoder_layer.6} parent=1 // pred_region
      _
    $region9: #{decoder_layer.6} parent=1 // pred_fallthru
      _
    // Predicated region
    $region10: #{decoder_layer.6} parent=1 // pred_check
      _
    $region11: #{decoder_layer.6} parent=1 // pred_check_branch
      %23 = sbr.rel (0) target = $region13
    $region12: #{decoder_layer.6} parent=1 // pred_region
      _
    $region13: #{decoder_layer.6} parent=1 // pred_fallthru
      _
    // Predicated region
    $region14: #{decoder_layer.6} parent=1 // pred_check
      _
    $region15: #{decoder_layer.6} parent=1 // pred_check_branch
      %25 = sbr.rel (0) target = $region17
    $region16: #{decoder_layer.6} parent=1 // pred_region
      _
    $region17: #{decoder_layer.6} parent=1 // pred_fallthru
      _
    // Predicated region
    $region18: #{decoder_layer.6} parent=1 // pred_check
      _
    $region19: #{decoder_layer.6} parent=1 // pred_check_branch
      %27 = sbr.rel (0) target = $region21
    $region20: #{decoder_layer.6} parent=1 // pred_region
      _
    $region21: #{decoder_layer.6} parent=1 // pred_fallthru
      _
    // Predicated region
    $region22: #{decoder_layer.6} parent=1 // pred_check
      _
    $region23: #{decoder_layer.6} parent=1 // pred_check_branch
      %29 = sbr.rel (0) target = $region25
    $region24: #{decoder_layer.6} parent=1 // pred_region
      %s31 = ssub.s32 512, 512
      %32 = vsyncadd [#allocation3], %s31
      %s33 = sshll.u32 [#allocation2], 4
      %s34 = int_to_ptr.vmem [resolvable:$true] %s33
      %39 = dma.hbm_to_vmem [thread:$0]  %s5, 512, %s34, [#allocation3], 128, 128, 8
    $region25: #{decoder_layer.6} parent=1 // pred_fallthru
      _
    // Predicated region
    $region26: #{decoder_layer.6} parent=1 // pred_check
      _
    $region27: #{decoder_layer.6} parent=1 // pred_check_branch
      %41 = sbr.rel (0) target = $region29
    $region28: #{decoder_layer.6} parent=1 // pred_region
      _
    $region29: #{decoder_layer.6} parent=1 // pred_fallthru
      _
    // Predicated region
    $region30: #{decoder_layer.6} parent=1 // pred_check
      _
    $region31: #{decoder_layer.6} parent=1 // pred_check_branch
      %43 = sbr.rel (0) target = $region33
    $region32: #{decoder_layer.6} parent=1 // pred_region
      _
    $region33: #{decoder_layer.6} parent=1 // pred_fallthru
      _
    // Predicated region
    $region34: #{decoder_layer.6} parent=1 // pred_check
      _
    $region35: #{decoder_layer.6} parent=1 // pred_check_branch
      %45 = sbr.rel (0) target = $region37
    $region36: #{decoder_layer.6} parent=1 // pred_region
      _
    $region37: #{decoder_layer.6} parent=1 // pred_fallthru
      _
    // Predicated region
    $region38: #{decoder_layer.6} parent=1 // pred_check
      _
    $region39: #{decoder_layer.6} parent=1 // pred_check_branch
      %47 = sbr.rel (0) target = $region41
    $region40: #{decoder_layer.6} parent=1 // pred_region
      %48 = dma.done [#allocation3], 512
    $region41: #{decoder_layer.6} parent=1 // pred_fallthru
      _
    %v49 = vld [vmem:[%s0] sm:$0xff]
    %v50 = vld [vmem:[%s0 + $0x8] sm:$0xff]
    %v51 = vld [vmem:[%s1] sm:$0x1]
    %v52 = vld [vmem:[%s2] sm:$0x1]
    %vm53 = vcmask 261120
    %v54 = vsel %vm53, %v49, 0.0
    %55 = vadd.xlane.f32.xlu0 %v54
    %v56 = vpop.xlane.xlu0 %55
    %v57 = vsel %vm53, %v50, 0.0
    %58 = vadd.xlane.f32.xlu0 %v57
    %v59 = vpop.xlane.xlu0 %58
    %v60 = vrcp.pop 32.0
    %v61 = vmul.f32 %v56, %v60
    %v62 = vmul.f32 %v59, %v60
    %v63 = vsub.f32 %v49, %v61
    %v64 = vsub.f32 %v50, %v62
    %v65 = vmul.f32 %v63, %v63
    %v66 = vmul.f32 %v64, %v64
    %v67 = vsel %vm53, %v65, 0.0
    %68 = vadd.xlane.f32.xlu0 %v67
    %v69 = vpop.xlane.xlu0 %68
    %v70 = vsel %vm53, %v66, 0.0
    %71 = vadd.xlane.f32.xlu0 %v70
    %v72 = vpop.xlane.xlu0 %71
    %v73 = vrcp.pop 31.0
    %v74 = vmul.f32 %v69, %v73
    %v75 = vmul.f32 %v72, %v73
    %v76 = vrsqrt.pop %v74
    %v77 = vmul.f32 %v74, %v76
    %vm78 = vcmp.eq.f32.partialorder %v74, inf
    %v79 = vsel %vm78, %v74, %v77
    %vm80 = vcmp.eq.f32.partialorder %v74, 0.0
    %v81 = vand.u32 %v74, 2147483648
    %v82 = vsel %vm80, %v81, %v79
    %v83 = vrsqrt.pop %v75
    %v84 = vmul.f32 %v75, %v83
    %vm85 = vcmp.eq.f32.partialorder %v75, inf
    %v86 = vsel %vm85, %v75, %v84
    %vm87 = vcmp.eq.f32.partialorder %v75, 0.0
    %v88 = vand.u32 %v75, 2147483648
    %v89 = vsel %vm87, %v88, %v86
    %v90 = vadd.f32 %v82, 1e-06
    %v91 = vadd.f32 %v89, 1e-06
    %v92 = vrcp.pop %v90
    %v93 = vrcp.pop %v91
    %v95 = vlaneseq
    %v96 = vshrl.u32 %v95, 7
    %v97 = vsub.s32 0, %v96
    %v98 = vrot.slane %v51, %v97
    %v100 = vmul.f32 %v98, %v63
    %v101 = vmul.f32 %v98, %v64
    %v102 = vmul.f32 %v100, %v92
    %v103 = vmul.f32 %v101, %v93
    %v105 = vlaneseq
    %v106 = vshrl.u32 %v105, 7
    %v107 = vsub.s32 0, %v106
    %v108 = vrot.slane %v52, %v107
    %v110 = vadd.f32 %v102, %v108
    %v111 = vadd.f32 %v103, %v108
    %v112 = vld [vmem:[%s3] sm:$0xff]
    %v113 = vld [vmem:[%s3 + $0x8] sm:$0xff]
    %v114 = vld [vmem:[%s3 + $0x10] sm:$0xff]
    %v115 = vld [vmem:[%s3 + $0x18] sm:$0xff]
    %v116 = vld [vmem:[%s6] sm:$0x1]
    %v118 = vlaneseq
    %v119 = vshrl.u32 %v118, 7
    %v120 = vsub.s32 0, %v119
    %v121 = vrot.slane %v116, %v120
    %v124 = vsel %vm53, %v110, 0
    %v127 = vsel %vm53, %v111, 0
    %129 = vmatprep.subr.mxu0 0.0
    %130 = vmatpush1.msra.mxu0 0.0
    %131 = vmatprep.subr.mxu0 0.0
    %132 = vmatpush1.msra.mxu0 0.0
    %133 = vmatprep.subr.mxu0 0.0
    %134 = vmatpush1.msra.mxu0 0.0
    %135 = vmatprep.subr.mxu0 0.0
    %136 = vmatpush1.msra.mxu0 0.0
    %137 = vmatprep.subr.mxu0 0.0
    %138 = vmatpush1.msra.mxu0 0.0
    %139 = vmatprep.subr.mxu0 0.0
    %140 = vmatpush1.msra.mxu0 0.0
    %141 = vmatprep.subr.mxu0 0.0
    %142 = vmatpush1.msra.mxu0 0.0
    %143 = vmatprep.subr.mxu0 0.0
    %144 = vmatpush1.msra.mxu0 0.0
    %145 = vmatprep.subr.mxu0 0.0
    %146 = vmatpush1.msra.mxu0 0.0
    %147 = vmatprep.subr.mxu0 0.0
    %148 = vmatpush1.msra.mxu0 0.0
    %149 = vmatprep.subr.mxu0 0.0
    %150 = vmatpush1.msra.mxu0 0.0
    %151 = vmatprep.subr.mxu0 0.0
    %152 = vmatpush1.msra.mxu0 0.0
    %153 = vmatprep.subr.mxu0 0.0
    %154 = vmatpush1.msra.mxu0 %v115
    %155 = vmatprep.subr.mxu0 0.0
    %156 = vmatpush1.msra.mxu0 %v114
    %157 = vmatprep.subr.mxu0 0.0
    %158 = vmatpush1.msra.mxu0 %v113
    %159 = vmatprep.subr.mxu0 0.0
    %160 = vmatpush1.msra.mxu0 %v112
    %161 = vmatprep.subr.mxu0 0.0
    %162 = vmatpush2.msra.mxu0 0.0
    %163 = vmatprep.subr.mxu0 0.0
    %164 = vmatpush2.msra.mxu0 0.0
    %165 = vmatprep.subr.mxu0 0.0
    %166 = vmatpush2.msra.mxu0 0.0
    %167 = vmatprep.subr.mxu0 0.0
    %168 = vmatpush2.msra.mxu0 0.0
    %169 = vmatprep.subr.mxu0 0.0
    %170 = vmatpush2.msra.mxu0 0.0
    %171 = vmatprep.subr.mxu0 0.0
    %172 = vmatpush2.msra.mxu0 0.0
    %173 = vmatprep.subr.mxu0 0.0
    %174 = vmatpush2.msra.mxu0 0.0
    %175 = vmatprep.subr.mxu0 0.0
    %176 = vmatpush2.msra.mxu0 0.0
    %177 = vmatprep.subr.mxu0 0.0
    %178 = vmatpush2.msra.mxu0 0.0
    %179 = vmatprep.subr.mxu0 0.0
    %180 = vmatpush2.msra.mxu0 0.0
    %181 = vmatprep.subr.mxu0 0.0
    %182 = vmatpush2.msra.mxu0 0.0
    %183 = vmatprep.subr.mxu0 0.0
    %184 = vmatpush2.msra.mxu0 0.0
    %185 = vmatprep.subr.mxu0 0.0
    %186 = vmatpush2.msra.mxu0 0.0
    %187 = vmatprep.subr.mxu0 0.0
    %188 = vmatpush2.msra.mxu0 0.0
    %189 = vmatprep.subr.mxu0 0.0
    %190 = vmatpush2.msra.mxu0 0.0
    %191 = vmatprep.subr.mxu0 0.0
    %192 = vmatpush2.msra.mxu0 0.0
    %193 = vmatprep.mubr.f32.mxu0 0.0
    %194 = vmatmul.mubr.f32.gmra.mxu0 %v124
    %v195 = vpop.f32.mrf.mxu0
    %v196 = vadd.f32 %v121, %v195
    %v197 = vpop.f32.mrf.mxu0
    %198 = vmatprep.mubr.f32.mxu0 0.0
    %199 = vmatmul.mubr.f32.gmra.mxu0 %v127
    %v200 = vpop.f32.mrf.mxu0
    %v201 = vadd.f32 %v121, %v200
    %v202 = vpop.f32.mrf.mxu0
    %203 = vdwg.mxu0
    %204 = vst.msk [vmem:[%s9] sm:$0xff] %vm53, %v196
    %205 = vst.msk [vmem:[%s9 + $0x8] sm:$0xff] %vm53, %v201
    %v206 = vld [vmem:[%s4] sm:$0xff]
    %v207 = vld [vmem:[%s4 + $0x8] sm:$0xff]
    %v208 = vld [vmem:[%s4 + $0x10] sm:$0xff]
    %v209 = vld [vmem:[%s4 + $0x18] sm:$0xff]
    %v210 = vld [vmem:[%s7] sm:$0x1]
    %v212 = vlaneseq
    %v213 = vshrl.u32 %v212, 7
    %v214 = vsub.s32 0, %v213
    %v215 = vrot.slane %v210, %v214
    %217 = vmatprep.subr.mxu0 0.0
    %218 = vmatpush1.msra.mxu0 0.0
    %219 = vmatprep.subr.mxu0 0.0
    %220 = vmatpush1.msra.mxu0 0.0
    %221 = vmatprep.subr.mxu0 0.0
    %222 = vmatpush1.msra.mxu0 0.0
    %223 = vmatprep.subr.mxu0 0.0
    %224 = vmatpush1.msra.mxu0 0.0
    %225 = vmatprep.subr.mxu0 0.0
    %226 = vmatpush1.msra.mxu0 0.0
    %227 = vmatprep.subr.mxu0 0.0
    %228 = vmatpush1.msra.mxu0 0.0
    %229 = vmatprep.subr.mxu0 0.0
    %230 = vmatpush1.msra.mxu0 0.0
    %231 = vmatprep.subr.mxu0 0.0
    %232 = vmatpush1.msra.mxu0 0.0
    %233 = vmatprep.subr.mxu0 0.0
    %234 = vmatpush1.msra.mxu0 0.0
    %235 = vmatprep.subr.mxu0 0.0
    %236 = vmatpush1.msra.mxu0 0.0
    %237 = vmatprep.subr.mxu0 0.0
    %238 = vmatpush1.msra.mxu0 0.0
    %239 = vmatprep.subr.mxu0 0.0
    %240 = vmatpush1.msra.mxu0 0.0
    %241 = vmatprep.subr.mxu0 0.0
    %242 = vmatpush1.msra.mxu0 %v209
    %243 = vmatprep.subr.mxu0 0.0
    %244 = vmatpush1.msra.mxu0 %v208
    %245 = vmatprep.subr.mxu0 0.0
    %246 = vmatpush1.msra.mxu0 %v207
    %247 = vmatprep.subr.mxu0 0.0
    %248 = vmatpush1.msra.mxu0 %v206
    %249 = vmatprep.subr.mxu0 0.0
    %250 = vmatpush2.msra.mxu0 0.0
    %251 = vmatprep.subr.mxu0 0.0
    %252 = vmatpush2.msra.mxu0 0.0
    %253 = vmatprep.subr.mxu0 0.0
    %254 = vmatpush2.msra.mxu0 0.0
    %255 = vmatprep.subr.mxu0 0.0
    %256 = vmatpush2.msra.mxu0 0.0
    %257 = vmatprep.subr.mxu0 0.0
    %258 = vmatpush2.msra.mxu0 0.0
    %259 = vmatprep.subr.mxu0 0.0
    %260 = vmatpush2.msra.mxu0 0.0
    %261 = vmatprep.subr.mxu0 0.0
    %262 = vmatpush2.msra.mxu0 0.0
    %263 = vmatprep.subr.mxu0 0.0
    %264 = vmatpush2.msra.mxu0 0.0
    %265 = vmatprep.subr.mxu0 0.0
    %266 = vmatpush2.msra.mxu0 0.0
    %267 = vmatprep.subr.mxu0 0.0
    %268 = vmatpush2.msra.mxu0 0.0
    %269 = vmatprep.subr.mxu0 0.0
    %270 = vmatpush2.msra.mxu0 0.0
    %271 = vmatprep.subr.mxu0 0.0
    %272 = vmatpush2.msra.mxu0 0.0
    %273 = vmatprep.subr.mxu0 0.0
    %274 = vmatpush2.msra.mxu0 0.0
    %275 = vmatprep.subr.mxu0 0.0
    %276 = vmatpush2.msra.mxu0 0.0
    %277 = vmatprep.subr.mxu0 0.0
    %278 = vmatpush2.msra.mxu0 0.0
    %279 = vmatprep.subr.mxu0 0.0
    %280 = vmatpush2.msra.mxu0 0.0
    %281 = vmatprep.mubr.f32.mxu0 0.0
    %282 = vmatmul.mubr.f32.gmra.mxu0 %v124
    %v283 = vpop.f32.mrf.mxu0
    %v284 = vadd.f32 %v215, %v283
    %v285 = vpop.f32.mrf.mxu0
    %286 = vmatprep.mubr.f32.mxu0 0.0
    %287 = vmatmul.mubr.f32.gmra.mxu0 %v127
    %v288 = vpop.f32.mrf.mxu0
    %v289 = vadd.f32 %v215, %v288
    %v290 = vpop.f32.mrf.mxu0
    %291 = vdwg.mxu0
    %292 = vst.msk [vmem:[%s10] sm:$0xff] %vm53, %v284
    %293 = vst.msk [vmem:[%s10 + $0x8] sm:$0xff] %vm53, %v289
    %v294 = vld [vmem:[#allocation2] sm:$0xff]
    %v295 = vld [vmem:[#allocation2 + $0x8] sm:$0xff]
    %v296 = vld [vmem:[#allocation2 + $0x10] sm:$0xff]
    %v297 = vld [vmem:[#allocation2 + $0x18] sm:$0xff]
    %v298 = vld [vmem:[%s8] sm:$0x1]
    %v300 = vlaneseq
    %v301 = vshrl.u32 %v300, 7
    %v302 = vsub.s32 0, %v301
    %v303 = vrot.slane %v298, %v302
    %305 = vmatprep.subr.mxu0 0.0
    %306 = vmatpush1.msra.mxu0 0.0
    %307 = vmatprep.subr.mxu0 0.0
    %308 = vmatpush1.msra.mxu0 0.0
    %309 = vmatprep.subr.mxu0 0.0
    %310 = vmatpush1.msra.mxu0 0.0
    %311 = vmatprep.subr.mxu0 0.0
    %312 = vmatpush1.msra.mxu0 0.0
    %313 = vmatprep.subr.mxu0 0.0
    %314 = vmatpush1.msra.mxu0 0.0
    %315 = vmatprep.subr.mxu0 0.0
    %316 = vmatpush1.msra.mxu0 0.0
    %317 = vmatprep.subr.mxu0 0.0
    %318 = vmatpush1.msra.mxu0 0.0
    %319 = vmatprep.subr.mxu0 0.0
    %320 = vmatpush1.msra.mxu0 0.0
    %321 = vmatprep.subr.mxu0 0.0
    %322 = vmatpush1.msra.mxu0 0.0
    %323 = vmatprep.subr.mxu0 0.0
    %324 = vmatpush1.msra.mxu0 0.0
    %325 = vmatprep.subr.mxu0 0.0
    %326 = vmatpush1.msra.mxu0 0.0
    %327 = vmatprep.subr.mxu0 0.0
    %328 = vmatpush1.msra.mxu0 0.0
    %329 = vmatprep.subr.mxu0 0.0
    %330 = vmatpush1.msra.mxu0 %v297
    %331 = vmatprep.subr.mxu0 0.0
    %332 = vmatpush1.msra.mxu0 %v296
    %333 = vmatprep.subr.mxu0 0.0
    %334 = vmatpush1.msra.mxu0 %v295
    %335 = vmatprep.subr.mxu0 0.0
    %336 = vmatpush1.msra.mxu0 %v294
    %337 = vmatprep.subr.mxu0 0.0
    %338 = vmatpush2.msra.mxu0 0.0
    %339 = vmatprep.subr.mxu0 0.0
    %340 = vmatpush2.msra.mxu0 0.0
    %341 = vmatprep.subr.mxu0 0.0
    %342 = vmatpush2.msra.mxu0 0.0
    %343 = vmatprep.subr.mxu0 0.0
    %344 = vmatpush2.msra.mxu0 0.0
    %345 = vmatprep.subr.mxu0 0.0
    %346 = vmatpush2.msra.mxu0 0.0
    %347 = vmatprep.subr.mxu0 0.0
    %348 = vmatpush2.msra.mxu0 0.0
    %349 = vmatprep.subr.mxu0 0.0
    %350 = vmatpush2.msra.mxu0 0.0
    %351 = vmatprep.subr.mxu0 0.0
    %352 = vmatpush2.msra.mxu0 0.0
    %353 = vmatprep.subr.mxu0 0.0
    %354 = vmatpush2.msra.mxu0 0.0
    %355 = vmatprep.subr.mxu0 0.0
    %356 = vmatpush2.msra.mxu0 0.0
    %357 = vmatprep.subr.mxu0 0.0
    %358 = vmatpush2.msra.mxu0 0.0
    %359 = vmatprep.subr.mxu0 0.0
    %360 = vmatpush2.msra.mxu0 0.0
    %361 = vmatprep.subr.mxu0 0.0
    %362 = vmatpush2.msra.mxu0 0.0
    %363 = vmatprep.subr.mxu0 0.0
    %364 = vmatpush2.msra.mxu0 0.0
    %365 = vmatprep.subr.mxu0 0.0
    %366 = vmatpush2.msra.mxu0 0.0
    %367 = vmatprep.subr.mxu0 0.0
    %368 = vmatpush2.msra.mxu0 0.0
    %369 = vmatprep.mubr.f32.mxu0 0.0
    %370 = vmatmul.mubr.f32.gmra.mxu0 %v124
    %v371 = vpop.f32.mrf.mxu0
    %v372 = vadd.f32 %v303, %v371
    %v373 = vpop.f32.mrf.mxu0
    %374 = vmatprep.mubr.f32.mxu0 0.0
    %375 = vmatmul.mubr.f32.gmra.mxu0 %v127
    %v376 = vpop.f32.mrf.mxu0
    %v377 = vadd.f32 %v303, %v376
    %v378 = vpop.f32.mrf.mxu0
    %379 = vdwg.mxu0
    %380 = vst.msk [vmem:[%s11] sm:$0xff] %vm53, %v372
    %381 = vst.msk [vmem:[%s11 + $0x8] sm:$0xff] %vm53, %v377
    // Predicated region
    $region42: #{decoder_layer.6} parent=1 // pred_check
      _
    $region43: #{decoder_layer.6} parent=1 // pred_check_branch
      %383 = sbr.rel (0) target = $region45
    $region44: #{decoder_layer.6} parent=1 // pred_region
      _
    $region45: #{decoder_layer.6} parent=1 // pred_fallthru
      _
    // Predicated region
    $region46: #{decoder_layer.6} parent=1 // pred_check
      _
    $region47: #{decoder_layer.6} parent=1 // pred_check_branch
      %385 = sbr.rel (0) target = $region49
    $region48: #{decoder_layer.6} parent=1 // pred_region
      _
    $region49: #{decoder_layer.6} parent=1 // pred_fallthru
      _
    // Predicated region
    $region50: #{decoder_layer.6} parent=1 // pred_check
      _
    $region51: #{decoder_layer.6} parent=1 // pred_check_branch
      %387 = sbr.rel (0) target = $region53
    $region52: #{decoder_layer.6} parent=1 // pred_region
      _
    $region53: #{decoder_layer.6} parent=1 // pred_fallthru
      _
    // Predicated region
    $region54: #{decoder_layer.6} parent=1 // pred_check
      _
    $region55: #{decoder_layer.6} parent=1 // pred_check_branch
      %389 = sbr.rel (0) target = $region57
    $region56: #{decoder_layer.6} parent=1 // pred_region
      _
    $region57: #{decoder_layer.6} parent=1 // pred_fallthru
      _
    // Predicated region
    $region58: #{decoder_layer.6} parent=1 // pred_check
      _
    $region59: #{decoder_layer.6} parent=1 // pred_check_branch
      %391 = sbr.rel (0) target = $region61
    $region60: #{decoder_layer.6} parent=1 // pred_region
      _
    $region61: #{decoder_layer.6} parent=1 // pred_fallthru
      _
    // Predicated region
    $region62: #{decoder_layer.6} parent=1 // pred_check
      _
    $region63: #{decoder_layer.6} parent=1 // pred_check_branch
      %393 = sbr.rel (0) target = $region65
    $region64: #{decoder_layer.6} parent=1 // pred_region
      _
    $region65: #{decoder_layer.6} parent=1 // pred_fallthru
      _
    %394 = vsyncpa [#allocation3], 1

// kernel: decoder_layer.7
$region0: #{decoder_layer.7}
  #allocation0 [shape = 'u32[]', space=smem, size = 0x4, offset = 0x4, fixed_abs, tag = 'smem constant byte address 0x4 - core index']
  #allocation1 [shape = 'u32[144,128]{1,0:T(1,128)}', space=vmem, size = 0x12000, scoped, tag = 'internal scratch']
  #allocation2 [shape = 'f32[4,8,1]{2,1,0:T(8,128)}', space=vmem, size = 0x4000, scoped, tag = 'scratch operand']
  #allocation3 [shape = 'f32[4,8,1]{2,1,0:T(8,128)}', space=vmem, size = 0x4000, scoped, tag = 'scratch operand']
  #allocation4 [shape = 'f32[4,8,8]{2,1,0:T(8,128)}', space=vmem, size = 0x4000, scoped, tag = 'scratch operand']
  %s0 = inlined_call_operand.vmem [shape: f32[2,8,32], index: 0, kind: input, shape index: {}]
  %s1 = inlined_call_operand.vmem [shape: f32[2,8,32], index: 1, kind: input, shape index: {}]
  %s2 = inlined_call_operand.vmem [shape: f32[2,8,32], index: 2, kind: input, shape index: {}]
  %s3 = inlined_call_operand.vmem [shape: f32[2,8,8], index: 3, kind: input, shape index: {}]
  %s4 = inlined_call_operand.vmem [shape: f32[2,8,32], index: 4, kind: input, shape index: {}]
  %s5 = inlined_call_operand.vmem [shape: f32[32,32], index: 5, kind: input, shape index: {}]
  %s6 = inlined_call_operand.vmem [shape: f32[1,32], index: 6, kind: input, shape index: {}]
  %s7 = inlined_call_operand.vmem [shape: f32[2,8,32], index: 7, kind: output, shape index: {}]
  %s8 = sld [smem:[#allocation0]]
  $region69: #{decoder_layer.7} parent=0
    _
  %s10 = ssub.s32 1, %s8
  %s11 = scalar_select 0, %s10, %s8
  loop: start=0, step=1, limit=4
  $region2: #{decoder_layer.7} parent=0 // loop_pre_header
    _
  $region3: #{decoder_layer.7} parent=0 // loop_header
    %s13 = sphi 0, %s17
    %p14 = scmp.ge.s32.totalorder %s13, 4
    %s20 = sphi 0, %s39
    %s21 = sphi 0, %s35
    %s22 = sphi 0, %s31
    %s23 = sphi 0, %s20
    %s24 = sphi 0, %s21
    %s25 = sphi 0, %s22
    %s26 = sphi 0, %s23
    %s27 = sphi 0, %s24
    %s28 = sphi 0, %s25
    %s44 = sphi 0, %s46
    %s47 = sphi 0, %s44
    %s48 = sphi 0, %s47
    %s64 = sphi 0, %s48
    %s72 = sphi 0, %s74
    %s75 = sphi 0, %s72
    %s76 = sphi 0, %s75
    %s92 = sphi 0, %s76
    %s100 = sphi 0, %s102
    %s103 = sphi 0, %s100
    %s104 = sphi 0, %s103
    %s120 = sphi 0, %s104
    %s130 = sphi 0, %s132
    %s133 = sphi 0, %s130
    %s134 = sphi 0, %s133
    %s150 = sphi 0, %s134
    %s158 = sphi 0, %s160
    %s161 = sphi 0, %s158
    %s162 = sphi 0, %s161
    %s178 = sphi 0, %s162
    %s182 = sphi 0, %s182
    %s184 = sphi 0, %s182
    %s185 = sphi 0, %s184
    %s199 = sphi 0, %s185
    %s203 = sphi 0, %s203
    %s205 = sphi 0, %s203
    %s206 = sphi 0, %s205
    %s220 = sphi 0, %s206
    %s228 = sphi 0, %s230
    %s231 = sphi 0, %s228
    %s232 = sphi 0, %s231
    %s248 = sphi 0, %s232
  $region4: #{decoder_layer.7} parent=0 // loop_header_branch
    %16 = sbr.rel (%p14) target = $region8
  $region5: #{decoder_layer.7} parent=0 // loop_body
    %s18 = ssub.s32 %s13, 1
    %s19 = ssub.s32 %s13, 2
    %s29 = sadd.s32 1, %s22
    %p30 = scmp.ge.s32.totalorder %s29, 1
    %s31 = scalar_select %p30, 0, %s29
    %s32 = sadd.s32 1, %s21
    %s33 = scalar_select %p30, %s32, %s21
    %p34 = scmp.ge.s32.totalorder %s33, 1
    %s35 = scalar_select %p34, 0, %s33
    %s36 = sadd.s32 1, %s20
    %s37 = scalar_select %p34, %s36, %s20
    %p38 = scmp.ge.s32.totalorder %s37, 2
    %s39 = scalar_select %p38, 0, %s37
    %s40 = ssub.s32 %s20, %s39
    %s41 = ssub.s32 %s21, %s35
    %s42 = sor.u32 %s40, %s41
    %p43 = scmp.eq.s32.totalorder %s42, 0
    %s45 = sadd.s32 %s44, 1
    %s46 = scalar_select %p43, %s44, %s45
    %p49 = pneg %p43
    %p50 = scmp.eq.s32.totalorder %s13, 1
    %p51 = por %p49, %p50
    %p52 = scmp.ne.s32.totalorder %s44, %s47
    %p53 = scmp.eq.s32.totalorder %s13, 0
    %p54 = por %p52, %p53
    %p55 = scmp.ne.s32.totalorder %s44, %s47
    %p56 = scmp.eq.s32.totalorder %s18, 1
    %p57 = por %p55, %p56
    %p58 = scmp.ne.s32.totalorder %s47, %s48
    %p59 = scmp.eq.s32.totalorder %s18, 0
    %p60 = por %p58, %p59
    %p61 = scmp.ne.s32.totalorder %s47, %s48
    %p62 = scmp.eq.s32.totalorder %s19, 1
    %p63 = por %p61, %p62
    %p65 = scmp.ne.s32.totalorder %s48, %s64
    %p66 = scmp.eq.s32.totalorder %s19, 0
    %p67 = por %p65, %p66
    %s68 = ssub.s32 %s20, %s39
    %s69 = ssub.s32 %s22, %s31
    %s70 = sor.u32 %s68, %s69
    %p71 = scmp.eq.s32.totalorder %s70, 0
    %s73 = sadd.s32 %s72, 1
    %s74 = scalar_select %p71, %s72, %s73
    %p77 = pneg %p71
    %p78 = scmp.eq.s32.totalorder %s13, 1
    %p79 = por %p77, %p78
    %p80 = scmp.ne.s32.totalorder %s72, %s75
    %p81 = scmp.eq.s32.totalorder %s13, 0
    %p82 = por %p80, %p81
    %p83 = scmp.ne.s32.totalorder %s72, %s75
    %p84 = scmp.eq.s32.totalorder %s18, 1
    %p85 = por %p83, %p84
    %p86 = scmp.ne.s32.totalorder %s75, %s76
    %p87 = scmp.eq.s32.totalorder %s18, 0
    %p88 = por %p86, %p87
    %p89 = scmp.ne.s32.totalorder %s75, %s76
    %p90 = scmp.eq.s32.totalorder %s19, 1
    %p91 = por %p89, %p90
    %p93 = scmp.ne.s32.totalorder %s76, %s92
    %p94 = scmp.eq.s32.totalorder %s19, 0
    %p95 = por %p93, %p94
    %s96 = ssub.s32 %s20, %s39
    %s97 = ssub.s32 %s22, %s31
    %s98 = sor.u32 %s96, %s97
    %p99 = scmp.eq.s32.totalorder %s98, 0
    %s101 = sadd.s32 %s100, 1
    %s102 = scalar_select %p99, %s100, %s101
    %p105 = pneg %p99
    %p106 = scmp.eq.s32.totalorder %s13, 1
    %p107 = por %p105, %p106
    %p108 = scmp.ne.s32.totalorder %s100, %s103
    %p109 = scmp.eq.s32.totalorder %s13, 0
    %p110 = por %p108, %p109
    %p111 = scmp.ne.s32.totalorder %s100, %s103
    %p112 = scmp.eq.s32.totalorder %s18, 1
    %p113 = por %p111, %p112
    %p114 = scmp.ne.s32.totalorder %s103, %s104
    %p115 = scmp.eq.s32.totalorder %s18, 0
    %p116 = por %p114, %p115
    %p117 = scmp.ne.s32.totalorder %s103, %s104
    %p118 = scmp.eq.s32.totalorder %s19, 1
    %p119 = por %p117, %p118
    %p121 = scmp.ne.s32.totalorder %s104, %s120
    %p122 = scmp.eq.s32.totalorder %s19, 0
    %p123 = por %p121, %p122
    %s124 = ssub.s32 %s20, %s39
    %s125 = ssub.s32 %s21, %s35
    %s126 = sor.u32 %s124, %s125
    %s127 = ssub.s32 %s22, %s31
    %s128 = sor.u32 %s126, %s127
    %p129 = scmp.eq.s32.totalorder %s128, 0
    %s131 = sadd.s32 %s130, 1
    %s132 = scalar_select %p129, %s130, %s131
    %p135 = pneg %p129
    %p136 = scmp.eq.s32.totalorder %s13, 1
    %p137 = por %p135, %p136
    %p138 = scmp.ne.s32.totalorder %s130, %s133
    %p139 = scmp.eq.s32.totalorder %s13, 0
    %p140 = por %p138, %p139
    %p141 = scmp.ne.s32.totalorder %s130, %s133
    %p142 = scmp.eq.s32.totalorder %s18, 1
    %p143 = por %p141, %p142
    %p144 = scmp.ne.s32.totalorder %s133, %s134
    %p145 = scmp.eq.s32.totalorder %s18, 0
    %p146 = por %p144, %p145
    %p147 = scmp.ne.s32.totalorder %s133, %s134
    %p148 = scmp.eq.s32.totalorder %s19, 1
    %p149 = por %p147, %p148
    %p151 = scmp.ne.s32.totalorder %s134, %s150
    %p152 = scmp.eq.s32.totalorder %s19, 0
    %p153 = por %p151, %p152
    %s154 = ssub.s32 %s20, %s39
    %s155 = ssub.s32 %s21, %s35
    %s156 = sor.u32 %s154, %s155
    %p157 = scmp.eq.s32.totalorder %s156, 0
    %s159 = sadd.s32 %s158, 1
    %s160 = scalar_select %p157, %s158, %s159
    %p163 = pneg %p157
    %p164 = scmp.eq.s32.totalorder %s13, 1
    %p165 = por %p163, %p164
    %p166 = scmp.ne.s32.totalorder %s158, %s161
    %p167 = scmp.eq.s32.totalorder %s13, 0
    %p168 = por %p166, %p167
    %p169 = scmp.ne.s32.totalorder %s158, %s161
    %p170 = scmp.eq.s32.totalorder %s18, 1
    %p171 = por %p169, %p170
    %p172 = scmp.ne.s32.totalorder %s161, %s162
    %p173 = scmp.eq.s32.totalorder %s18, 0
    %p174 = por %p172, %p173
    %p175 = scmp.ne.s32.totalorder %s161, %s162
    %p176 = scmp.eq.s32.totalorder %s19, 1
    %p177 = por %p175, %p176
    %p179 = scmp.ne.s32.totalorder %s162, %s178
    %p180 = scmp.eq.s32.totalorder %s19, 0
    %p181 = por %p179, %p180
    %s183 = sadd.s32 %s182, 1
    %p186 = scmp.eq.s32.totalorder %s13, 1
    %p187 = scmp.ne.s32.totalorder %s182, %s184
    %p188 = scmp.eq.s32.totalorder %s13, 0
    %p189 = por %p187, %p188
    %p190 = scmp.ne.s32.totalorder %s182, %s184
    %p191 = scmp.eq.s32.totalorder %s18, 1
    %p192 = por %p190, %p191
    %p193 = scmp.ne.s32.totalorder %s184, %s185
    %p194 = scmp.eq.s32.totalorder %s18, 0
    %p195 = por %p193, %p194
    %p196 = scmp.ne.s32.totalorder %s184, %s185
    %p197 = scmp.eq.s32.totalorder %s19, 1
    %p198 = por %p196, %p197
    %p200 = scmp.ne.s32.totalorder %s185, %s199
    %p201 = scmp.eq.s32.totalorder %s19, 0
    %p202 = por %p200, %p201
    %s204 = sadd.s32 %s203, 1
    %p207 = scmp.eq.s32.totalorder %s13, 1
    %p208 = scmp.ne.s32.totalorder %s203, %s205
    %p209 = scmp.eq.s32.totalorder %s13, 0
    %p210 = por %p208, %p209
    %p211 = scmp.ne.s32.totalorder %s203, %s205
    %p212 = scmp.eq.s32.totalorder %s18, 1
    %p213 = por %p211, %p212
    %p214 = scmp.ne.s32.totalorder %s205, %s206
    %p215 = scmp.eq.s32.totalorder %s18, 0
    %p216 = por %p214, %p215
    %p217 = scmp.ne.s32.totalorder %s205, %s206
    %p218 = scmp.eq.s32.totalorder %s19, 1
    %p219 = por %p217, %p218
    %p221 = scmp.ne.s32.totalorder %s206, %s220
    %p222 = scmp.eq.s32.totalorder %s19, 0
    %p223 = por %p221, %p222
    %s224 = ssub.s32 %s20, %s39
    %s225 = ssub.s32 %s21, %s35
    %s226 = sor.u32 %s224, %s225
    %p227 = scmp.eq.s32.totalorder %s226, 0
    %s229 = sadd.s32 %s228, 1
    %s230 = scalar_select %p227, %s228, %s229
    %p233 = pneg %p227
    %p234 = scmp.eq.s32.totalorder %s13, 1
    %p235 = por %p233, %p234
    %p236 = scmp.ne.s32.totalorder %s228, %s231
    %p237 = scmp.eq.s32.totalorder %s13, 0
    %p238 = por %p236, %p237
    %p239 = scmp.ne.s32.totalorder %s228, %s231
    %p240 = scmp.eq.s32.totalorder %s18, 1
    %p241 = por %p239, %p240
    %p242 = scmp.ne.s32.totalorder %s231, %s232
    %p243 = scmp.eq.s32.totalorder %s18, 0
    %p244 = por %p242, %p243
    %p245 = scmp.ne.s32.totalorder %s231, %s232
    %p246 = scmp.eq.s32.totalorder %s19, 1
    %p247 = por %p245, %p246
    %p249 = scmp.ne.s32.totalorder %s232, %s248
    %p250 = scmp.eq.s32.totalorder %s19, 0
    %p251 = por %p249, %p250
    %p252 = scmp.le.s32.totalorder 1, %s13
    %p253 = scmp.lt.s32.totalorder %s13, 3
    %p254 = pnand %p252, %p253
    %p255 = pneg %p254
    // Predicated region
    $region9: #{decoder_layer.7} parent=5 // pred_check
      _
    $region10: #{decoder_layer.7} parent=5 // pred_check_branch
      %257 = sbr.rel (%p254) target = $region12
    $region11: #{decoder_layer.7} parent=5 // pred_region
      %s258 = ssub.s32 %s13, 1
      // Predicated region
      $region13: #{decoder_layer.7} parent=11 // pred_check
        %p259 = pneg %p195
      $region14: #{decoder_layer.7} parent=11 // pred_check_branch
        %261 = sbr.rel (%p259) target = $region16
      $region15: #{decoder_layer.7} parent=11 // pred_region
        _
      $region16: #{decoder_layer.7} parent=11 // pred_fallthru
        _
      // Predicated region
      $region17: #{decoder_layer.7} parent=11 // pred_check
        %p262 = pneg %p216
      $region18: #{decoder_layer.7} parent=11 // pred_check_branch
        %264 = sbr.rel (%p262) target = $region20
      $region19: #{decoder_layer.7} parent=11 // pred_region
        _
      $region20: #{decoder_layer.7} parent=11 // pred_fallthru
        _
    $region12: #{decoder_layer.7} parent=5 // pred_fallthru
      _
    %p265 = scmp.lt.s32.totalorder %s13, 2
    // Predicated region
    $region21: #{decoder_layer.7} parent=5 // pred_check
      %p266 = pneg %p265
    $region22: #{decoder_layer.7} parent=5 // pred_check_branch
      %268 = sbr.rel (%p266) target = $region24
    $region23: #{decoder_layer.7} parent=5 // pred_region
      // Predicated region
      $region25: #{decoder_layer.7} parent=23 // pred_check
        %p269 = pneg %p54
      $region26: #{decoder_layer.7} parent=23 // pred_check_branch
        %271 = sbr.rel (%p269) target = $region28
      $region27: #{decoder_layer.7} parent=23 // pred_region
        %p272 = scmp.lt.s32.totalorder %s20, 1
        %s273 = scalar_select %p272, %s20, 1
        %p274 = scmp.lt.s32.totalorder %s21, 0
        %s275 = scalar_select %p274, %s21, 0
        %s276 = sadd.s32 %s275, %s273
        %s277 = smul.addr %s276, 8
        %s278 = scalar_lea.vmem %s0, %s277
      $region28: #{decoder_layer.7} parent=23 // pred_fallthru
        _
      // Predicated region
      $region29: #{decoder_layer.7} parent=23 // pred_check
        %p279 = pneg %p82
      $region30: #{decoder_layer.7} parent=23 // pred_check_branch
        %281 = sbr.rel (%p279) target = $region32
      $region31: #{decoder_layer.7} parent=23 // pred_region
        %p282 = scmp.lt.s32.totalorder %s20, 1
        %s283 = scalar_select %p282, %s20, 1
        %p284 = scmp.lt.s32.totalorder %s22, 0
        %s285 = scalar_select %p284, %s22, 0
        %s286 = sadd.s32 %s285, %s283
        %s287 = smul.addr %s286, 8
        %s288 = scalar_lea.vmem %s1, %s287
      $region32: #{decoder_layer.7} parent=23 // pred_fallthru
        _
      // Predicated region
      $region33: #{decoder_layer.7} parent=23 // pred_check
        %p289 = pneg %p110
      $region34: #{decoder_layer.7} parent=23 // pred_check_branch
        %291 = sbr.rel (%p289) target = $region36
      $region35: #{decoder_layer.7} parent=23 // pred_region
        %p292 = scmp.lt.s32.totalorder %s20, 1
        %s293 = scalar_select %p292, %s20, 1
        %p294 = scmp.lt.s32.totalorder %s22, 0
        %s295 = scalar_select %p294, %s22, 0
        %s296 = sadd.s32 %s295, %s293
        %s297 = smul.addr %s296, 8
        %s298 = scalar_lea.vmem %s2, %s297
      $region36: #{decoder_layer.7} parent=23 // pred_fallthru
        _
      // Predicated region
      $region37: #{decoder_layer.7} parent=23 // pred_check
        %p299 = pneg %p140
      $region38: #{decoder_layer.7} parent=23 // pred_check_branch
        %301 = sbr.rel (%p299) target = $region40
      $region39: #{decoder_layer.7} parent=23 // pred_region
        %p302 = scmp.lt.s32.totalorder %s20, 1
        %s303 = scalar_select %p302, %s20, 1
        %p304 = scmp.lt.s32.totalorder %s21, 0
        %s305 = scalar_select %p304, %s21, 0
        %p306 = scmp.lt.s32.totalorder %s22, 0
        %s307 = scalar_select %p306, %s22, 0
        %s308 = sadd.s32 %s307, %s305
        %s309 = sadd.s32 %s308, %s303
        %s310 = smul.addr %s309, 8
        %s311 = scalar_lea.vmem %s3, %s310
      $region40: #{decoder_layer.7} parent=23 // pred_fallthru
        _
      // Predicated region
      $region41: #{decoder_layer.7} parent=23 // pred_check
        %p312 = pneg %p168
      $region42: #{decoder_layer.7} parent=23 // pred_check_branch
        %314 = sbr.rel (%p312) target = $region44
      $region43: #{decoder_layer.7} parent=23 // pred_region
        %p315 = scmp.lt.s32.totalorder %s20, 1
        %s316 = scalar_select %p315, %s20, 1
        %p317 = scmp.lt.s32.totalorder %s21, 0
        %s318 = scalar_select %p317, %s21, 0
        %s319 = sadd.s32 %s318, %s316
        %s320 = smul.addr %s319, 8
        %s321 = scalar_lea.vmem %s4, %s320
      $region44: #{decoder_layer.7} parent=23 // pred_fallthru
        _
    $region24: #{decoder_layer.7} parent=5 // pred_fallthru
      _
    %p322 = scmp.le.s32.totalorder 1, %s13
    %p323 = scmp.lt.s32.totalorder %s13, 3
    %p324 = pnand %p322, %p323
    %p325 = pneg %p324
    // Predicated region
    $region45: #{decoder_layer.7} parent=5 // pred_check
      _
    $region46: #{decoder_layer.7} parent=5 // pred_check_branch
      %327 = sbr.rel (%p324) target = $region48
    $region47: #{decoder_layer.7} parent=5 // pred_region
      %s328 = ssub.s32 %s13, 1
      %p329 = scmp.lt.s32.totalorder %s23, 1
      %s330 = scalar_select %p329, %s23, 1
      %p331 = scmp.lt.s32.totalorder %s24, 0
      %s332 = scalar_select %p331, %s24, 0
      %s333 = sadd.s32 %s332, %s330
      %s334 = smul.addr %s333, 8
      %s335 = scalar_lea.vmem %s0, %s334
      %p336 = pneg %p60
      %p337 = pneg %p57
      %p338 = scmp.lt.s32.totalorder %s23, 1
      %s339 = scalar_select %p338, %s23, 1
      %p340 = scmp.lt.s32.totalorder %s25, 0
      %s341 = scalar_select %p340, %s25, 0
      %s342 = sadd.s32 %s341, %s339
      %s343 = smul.addr %s342, 8
      %s344 = scalar_lea.vmem %s1, %s343
      %p345 = pneg %p88
      %p346 = pneg %p85
      %p347 = scmp.lt.s32.totalorder %s23, 1
      %s348 = scalar_select %p347, %s23, 1
      %p349 = scmp.lt.s32.totalorder %s25, 0
      %s350 = scalar_select %p349, %s25, 0
      %s351 = sadd.s32 %s350, %s348
      %s352 = smul.addr %s351, 8
      %s353 = scalar_lea.vmem %s2, %s352
      %p354 = pneg %p116
      %p355 = pneg %p113
      %p356 = scmp.lt.s32.totalorder %s23, 1
      %s357 = scalar_select %p356, %s23, 1
      %p358 = scmp.lt.s32.totalorder %s24, 0
      %s359 = scalar_select %p358, %s24, 0
      %p360 = scmp.lt.s32.totalorder %s25, 0
      %s361 = scalar_select %p360, %s25, 0
      %s362 = sadd.s32 %s361, %s359
      %s363 = sadd.s32 %s362, %s357
      %s364 = smul.addr %s363, 8
      %s365 = scalar_lea.vmem %s3, %s364
      %p366 = pneg %p146
      %p367 = pneg %p143
      %p368 = scmp.lt.s32.totalorder %s23, 1
      %s369 = scalar_select %p368, %s23, 1
      %p370 = scmp.lt.s32.totalorder %s24, 0
      %s371 = scalar_select %p370, %s24, 0
      %s372 = sadd.s32 %s371, %s369
      %s373 = smul.addr %s372, 8
      %s374 = scalar_lea.vmem %s4, %s373
      %p375 = pneg %p174
      %p376 = pneg %p171
      %p377 = pneg %p195
      %p378 = pneg %p192
      %p379 = pneg %p216
      %p380 = pneg %p213
      %p381 = pneg %p244
      %p382 = pneg %p241
      %p383 = scmp.lt.s32.totalorder %s23, 1
      %s384 = scalar_select %p383, %s23, 1
      %p385 = scmp.lt.s32.totalorder %s24, 0
      %s386 = scalar_select %p385, %s24, 0
      %s387 = sadd.s32 %s386, %s384
      %s388 = smul.addr %s387, 8
      %s389 = scalar_lea.vmem %s7, %s388
      %p390 = scmp.lt.s32.totalorder %s23, 1
      %s391 = scalar_select %p390, %s23, 1
      %p392 = scmp.lt.s32.totalorder %s24, 0
      %s393 = scalar_select %p392, %s24, 0
      %s394 = sadd.s32 %s393, %s391
      %s395 = smul.addr %s394, 8
      %s396 = scalar_lea.vmem %s0, %s395
      %p397 = scmp.lt.s32.totalorder %s23, 1
      %s398 = scalar_select %p397, %s23, 1
      %p399 = scmp.lt.s32.totalorder %s25, 0
      %s400 = scalar_select %p399, %s25, 0
      %s401 = sadd.s32 %s400, %s398
      %s402 = smul.addr %s401, 8
      %s403 = scalar_lea.vmem %s1, %s402
      %p404 = scmp.lt.s32.totalorder %s23, 1
      %s405 = scalar_select %p404, %s23, 1
      %p406 = scmp.lt.s32.totalorder %s25, 0
      %s407 = scalar_select %p406, %s25, 0
      %s408 = sadd.s32 %s407, %s405
      %s409 = smul.addr %s408, 8
      %s410 = scalar_lea.vmem %s2, %s409
      %p411 = scmp.lt.s32.totalorder %s23, 1
      %s412 = scalar_select %p411, %s23, 1
      %p413 = scmp.lt.s32.totalorder %s24, 0
      %s414 = scalar_select %p413, %s24, 0
      %p415 = scmp.lt.s32.totalorder %s25, 0
      %s416 = scalar_select %p415, %s25, 0
      %s417 = sadd.s32 %s416, %s414
      %s418 = sadd.s32 %s417, %s412
      %s419 = smul.addr %s418, 8
      %s420 = scalar_lea.vmem %s3, %s419
      %p421 = scmp.lt.s32.totalorder %s23, 1
      %s422 = scalar_select %p421, %s23, 1
      %p423 = scmp.lt.s32.totalorder %s24, 0
      %s424 = scalar_select %p423, %s24, 0
      %s425 = sadd.s32 %s424, %s422
      %s426 = smul.addr %s425, 8
      %s427 = scalar_lea.vmem %s4, %s426
      %p428 = scmp.lt.s32.totalorder %s23, 1
      %s429 = scalar_select %p428, %s23, 1
      %p430 = scmp.lt.s32.totalorder %s24, 0
      %s431 = scalar_select %p430, %s24, 0
      %s432 = sadd.s32 %s431, %s429
      %s433 = smul.addr %s432, 8
      %s434 = scalar_lea.vmem %s7, %s433
      %p435 = scmp.eq.s32.totalorder %s25, 0
      // Predicated region
      $region49: #{decoder_layer.7} parent=47 // pred_check
        %p436 = pneg %p435
      $region50: #{decoder_layer.7} parent=47 // pred_check_branch
        %438 = sbr.rel (%p436) target = $region52
      $region51: #{decoder_layer.7} parent=47 // pred_region
        %vm439 = vcmask 7168
        %440 = vst.msk [vmem:[#allocation2] sm:$0xff] %vm439, -inf
        %441 = vst.msk [vmem:[#allocation2 + $0x8] sm:$0xff] %vm439, -inf
        %442 = vst.msk [vmem:[#allocation2 + $0x10] sm:$0xff] %vm439, -inf
        %443 = vst.msk [vmem:[#allocation2 + $0x18] sm:$0xff] %vm439, -inf
        %444 = vst.msk [vmem:[#allocation3] sm:$0xff] %vm439, 0.0
        %445 = vst.msk [vmem:[#allocation3 + $0x8] sm:$0xff] %vm439, 0.0
        %446 = vst.msk [vmem:[#allocation3 + $0x10] sm:$0xff] %vm439, 0.0
        %447 = vst.msk [vmem:[#allocation3 + $0x18] sm:$0xff] %vm439, 0.0
        %vm448 = vcmask 64512
        %449 = vst.msk [vmem:[#allocation4] sm:$0xff] %vm448, 0.0
        %450 = vst.msk [vmem:[#allocation4 + $0x8] sm:$0xff] %vm448, 0.0
        %451 = vst.msk [vmem:[#allocation4 + $0x10] sm:$0xff] %vm448, 0.0
        %452 = vst.msk [vmem:[#allocation4 + $0x18] sm:$0xff] %vm448, 0.0
      $region52: #{decoder_layer.7} parent=47 // pred_fallthru
        _
      %v453 = vld [vmem:[%s396] sm:$0xff]
      %v454 = vld [vmem:[%s403] sm:$0xff]
      %v455 = vld [vmem:[%s410] sm:$0xff]
      %v456 = vld [vmem:[%s420] sm:$0xff]
      %vm457 = vcmp.eq.f32.partialorder %v456, 0.0
      %v458 = vsel %vm457, -1e+09, 0.0
      %vm459 = vcmask 64512
      %v461 = vsel %vm459, %v453, 0
      %v464 = vsel %vm459, %v454, 0
      %466 = vmatprep.subr.mxu0 0.0
      %467 = vmatpush1.xpose.msra.mxu0 0.0
      %468 = vmatprep.subr.mxu0 0.0
      %469 = vmatpush1.xpose.msra.mxu0 0.0
      %470 = vmatprep.subr.mxu0 0.0
      %471 = vmatpush1.xpose.msra.mxu0 0.0
      %472 = vmatprep.subr.mxu0 0.0
      %473 = vmatpush1.xpose.msra.mxu0 0.0
      %474 = vmatprep.subr.mxu0 0.0
      %475 = vmatpush1.xpose.msra.mxu0 0.0
      %476 = vmatprep.subr.mxu0 0.0
      %477 = vmatpush1.xpose.msra.mxu0 0.0
      %478 = vmatprep.subr.mxu0 0.0
      %479 = vmatpush1.xpose.msra.mxu0 0.0
      %480 = vmatprep.subr.mxu0 0.0
      %481 = vmatpush1.xpose.msra.mxu0 0.0
      %482 = vmatprep.subr.mxu0 0.0
      %483 = vmatpush1.xpose.msra.mxu0 0.0
      %484 = vmatprep.subr.mxu0 0.0
      %485 = vmatpush1.xpose.msra.mxu0 0.0
      %486 = vmatprep.subr.mxu0 0.0
      %487 = vmatpush1.xpose.msra.mxu0 0.0
      %488 = vmatprep.subr.mxu0 0.0
      %489 = vmatpush1.xpose.msra.mxu0 0.0
      %490 = vmatprep.subr.mxu0 0.0
      %491 = vmatpush1.xpose.msra.mxu0 0.0
      %492 = vmatprep.subr.mxu0 0.0
      %493 = vmatpush1.xpose.msra.mxu0 0.0
      %494 = vmatprep.subr.mxu0 0.0
      %495 = vmatpush1.xpose.msra.mxu0 0.0
      %496 = vmatprep.subr.mxu0 0.0
      %497 = vmatpush1.xpose.msra.mxu0 %v464
      %498 = vmatprep.subr.mxu0 0.0
      %499 = vmatpush2.xpose.msra.mxu0 0.0
      %500 = vmatprep.subr.mxu0 0.0
      %501 = vmatpush2.xpose.msra.mxu0 0.0
      %502 = vmatprep.subr.mxu0 0.0
      %503 = vmatpush2.xpose.msra.mxu0 0.0
      %504 = vmatprep.subr.mxu0 0.0
      %505 = vmatpush2.xpose.msra.mxu0 0.0
      %506 = vmatprep.subr.mxu0 0.0
      %507 = vmatpush2.xpose.msra.mxu0 0.0
      %508 = vmatprep.subr.mxu0 0.0
      %509 = vmatpush2.xpose.msra.mxu0 0.0
      %510 = vmatprep.subr.mxu0 0.0
      %511 = vmatpush2.xpose.msra.mxu0 0.0
      %512 = vmatprep.subr.mxu0 0.0
      %513 = vmatpush2.xpose.msra.mxu0 0.0
      %514 = vmatprep.subr.mxu0 0.0
      %515 = vmatpush2.xpose.msra.mxu0 0.0
      %516 = vmatprep.subr.mxu0 0.0
      %517 = vmatpush2.xpose.msra.mxu0 0.0
      %518 = vmatprep.subr.mxu0 0.0
      %519 = vmatpush2.xpose.msra.mxu0 0.0
      %520 = vmatprep.subr.mxu0 0.0
      %521 = vmatpush2.xpose.msra.mxu0 0.0
      %522 = vmatprep.subr.mxu0 0.0
      %523 = vmatpush2.xpose.msra.mxu0 0.0
      %524 = vmatprep.subr.mxu0 0.0
      %525 = vmatpush2.xpose.msra.mxu0 0.0
      %526 = vmatprep.subr.mxu0 0.0
      %527 = vmatpush2.xpose.msra.mxu0 0.0
      %528 = vmatprep.subr.mxu0 0.0
      %529 = vmatpush2.xpose.msra.mxu0 0.0
      %530 = vmatprep.mubr.f32.mxu0 0.0
      %531 = vmatmul.mubr.f32.gmra.mxu0 %v461
      %v532 = vpop.f32.mrf.mxu0
      %v533 = vadd.f32 0.0, %v532
      %v534 = vpop.f32.mrf.mxu0
      %535 = vdwg.mxu0
      %v536 = vmul.f32 %v533, 0.35355338
      %v537 = vadd.f32 %v536, %v458
      %v538 = vld [vmem:[#allocation2] sm:$0xff]
      %v539 = vsel %vm459, %v537, -inf
      %540 = vmax.xlane.f32.xlu0 %v539
      %v541 = vpop.xlane.xlu0 %540
      %v542 = vmax.f32 %v538, %v541
      %v543 = vsub.f32 %v538, %v542
      %v544 = vmul.f32 %v543, 1.442695
      %v545 = vpow.pop %v544
      %547 = vset.pattern.permute.xlu0 0
      %548 = vperm.xlu0 %547, %v542
      %v549 = vpop.permute.xlu0 %548
      %v551 = vsub.f32 %v537, %v549
      %v552 = vmul.f32 %v551, 1.442695
      %v553 = vpow.pop %v552
      %v554 = vld [vmem:[#allocation3] sm:$0xff]
      %v555 = vmul.f32 %v545, %v554
      %v556 = vsel %vm459, %v553, 0.0
      %557 = vadd.xlane.f32.xlu0 %v556
      %v558 = vpop.xlane.xlu0 %557
      %v559 = vadd.f32 %v555, %v558
      %vm560 = vcmask 7168
      %561 = vst.msk [vmem:[#allocation3] sm:$0xff] %vm560, %v559
      %v562 = vld [vmem:[#allocation4] sm:$0xff]
      %564 = vset.pattern.permute.xlu0 0
      %565 = vperm.xlu0 %564, %v545
      %v566 = vpop.permute.xlu0 %565
      %v568 = vmul.f32 %v566, %v562
      %v570 = vsel %vm459, %v553, 0
      %572 = vmatprep.subr.mxu0 0.0
      %573 = vmatpush1.msra.mxu0 0.0
      %574 = vmatprep.subr.mxu0 0.0
      %575 = vmatpush1.msra.mxu0 0.0
      %576 = vmatprep.subr.mxu0 0.0
      %577 = vmatpush1.msra.mxu0 0.0
      %578 = vmatprep.subr.mxu0 0.0
      %579 = vmatpush1.msra.mxu0 0.0
      %580 = vmatprep.subr.mxu0 0.0
      %581 = vmatpush1.msra.mxu0 0.0
      %582 = vmatprep.subr.mxu0 0.0
      %583 = vmatpush1.msra.mxu0 0.0
      %584 = vmatprep.subr.mxu0 0.0
      %585 = vmatpush1.msra.mxu0 0.0
      %586 = vmatprep.subr.mxu0 0.0
      %587 = vmatpush1.msra.mxu0 0.0
      %588 = vmatprep.subr.mxu0 0.0
      %589 = vmatpush1.msra.mxu0 0.0
      %590 = vmatprep.subr.mxu0 0.0
      %591 = vmatpush1.msra.mxu0 0.0
      %592 = vmatprep.subr.mxu0 0.0
      %593 = vmatpush1.msra.mxu0 0.0
      %594 = vmatprep.subr.mxu0 0.0
      %595 = vmatpush1.msra.mxu0 0.0
      %596 = vmatprep.subr.mxu0 0.0
      %597 = vmatpush1.msra.mxu0 0.0
      %598 = vmatprep.subr.mxu0 0.0
      %599 = vmatpush1.msra.mxu0 0.0
      %600 = vmatprep.subr.mxu0 0.0
      %601 = vmatpush1.msra.mxu0 0.0
      %602 = vmatprep.subr.mxu0 0.0
      %603 = vmatpush1.msra.mxu0 %v455
      %604 = vmatprep.subr.mxu0 0.0
      %605 = vmatpush2.msra.mxu0 0.0
      %606 = vmatprep.subr.mxu0 0.0
      %607 = vmatpush2.msra.mxu0 0.0
      %608 = vmatprep.subr.mxu0 0.0
      %609 = vmatpush2.msra.mxu0 0.0
      %610 = vmatprep.subr.mxu0 0.0
      %611 = vmatpush2.msra.mxu0 0.0
      %612 = vmatprep.subr.mxu0 0.0
      %613 = vmatpush2.msra.mxu0 0.0
      %614 = vmatprep.subr.mxu0 0.0
      %615 = vmatpush2.msra.mxu0 0.0
      %616 = vmatprep.subr.mxu0 0.0
      %617 = vmatpush2.msra.mxu0 0.0
      %618 = vmatprep.subr.mxu0 0.0
      %619 = vmatpush2.msra.mxu0 0.0
      %620 = vmatprep.subr.mxu0 0.0
      %621 = vmatpush2.msra.mxu0 0.0
      %622 = vmatprep.subr.mxu0 0.0
      %623 = vmatpush2.msra.mxu0 0.0
      %624 = vmatprep.subr.mxu0 0.0
      %625 = vmatpush2.msra.mxu0 0.0
      %626 = vmatprep.subr.mxu0 0.0
      %627 = vmatpush2.msra.mxu0 0.0
      %628 = vmatprep.subr.mxu0 0.0
      %629 = vmatpush2.msra.mxu0 0.0
      %630 = vmatprep.subr.mxu0 0.0
      %631 = vmatpush2.msra.mxu0 0.0
      %632 = vmatprep.subr.mxu0 0.0
      %633 = vmatpush2.msra.mxu0 0.0
      %634 = vmatprep.subr.mxu0 0.0
      %635 = vmatpush2.msra.mxu0 0.0
      %636 = vmatprep.mubr.f32.mxu0 0.0
      %637 = vmatmul.mubr.f32.gmra.mxu0 %v570
      %v638 = vpop.f32.mrf.mxu0
      %v639 = vadd.f32 0.0, %v638
      %v640 = vpop.f32.mrf.mxu0
      %641 = vdwg.mxu0
      %v642 = vadd.f32 %v568, %v639
      %643 = vst.msk [vmem:[#allocation4] sm:$0xff] %vm459, %v642
      %644 = vst.msk [vmem:[#allocation2] sm:$0xff] %vm560, %v542
      %645 = vrot.lane.b32.xlu0 %v453, 120
      %v646 = vpop.permute.xlu0 %645
      %647 = vrot.lane.b32.xlu0 %v454, 120
      %v648 = vpop.permute.xlu0 %647
      %v649 = vsel %vm459, %v646, 0
      %v651 = vsel %vm459, %v648, 0
      %653 = vmatprep.subr.mxu0 0.0
      %654 = vmatpush1.xpose.msra.mxu0 0.0
      %655 = vmatprep.subr.mxu0 0.0
      %656 = vmatpush1.xpose.msra.mxu0 0.0
      %657 = vmatprep.subr.mxu0 0.0
      %658 = vmatpush1.xpose.msra.mxu0 0.0
      %659 = vmatprep.subr.mxu0 0.0
      %660 = vmatpush1.xpose.msra.mxu0 0.0
      %661 = vmatprep.subr.mxu0 0.0
      %662 = vmatpush1.xpose.msra.mxu0 0.0
      %663 = vmatprep.subr.mxu0 0.0
      %664 = vmatpush1.xpose.msra.mxu0 0.0
      %665 = vmatprep.subr.mxu0 0.0
      %666 = vmatpush1.xpose.msra.mxu0 0.0
      %667 = vmatprep.subr.mxu0 0.0
      %668 = vmatpush1.xpose.msra.mxu0 0.0
      %669 = vmatprep.subr.mxu0 0.0
      %670 = vmatpush1.xpose.msra.mxu0 0.0
      %671 = vmatprep.subr.mxu0 0.0
      %672 = vmatpush1.xpose.msra.mxu0 0.0
      %673 = vmatprep.subr.mxu0 0.0
      %674 = vmatpush1.xpose.msra.mxu0 0.0
      %675 = vmatprep.subr.mxu0 0.0
      %676 = vmatpush1.xpose.msra.mxu0 0.0
      %677 = vmatprep.subr.mxu0 0.0
      %678 = vmatpush1.xpose.msra.mxu0 0.0
      %679 = vmatprep.subr.mxu0 0.0
      %680 = vmatpush1.xpose.msra.mxu0 0.0
      %681 = vmatprep.subr.mxu0 0.0
      %682 = vmatpush1.xpose.msra.mxu0 0.0
      %683 = vmatprep.subr.mxu0 0.0
      %684 = vmatpush1.xpose.msra.mxu0 %v651
      %685 = vmatprep.subr.mxu0 0.0
      %686 = vmatpush2.xpose.msra.mxu0 0.0
      %687 = vmatprep.subr.mxu0 0.0
      %688 = vmatpush2.xpose.msra.mxu0 0.0
      %689 = vmatprep.subr.mxu0 0.0
      %690 = vmatpush2.xpose.msra.mxu0 0.0
      %691 = vmatprep.subr.mxu0 0.0
      %692 = vmatpush2.xpose.msra.mxu0 0.0
      %693 = vmatprep.subr.mxu0 0.0
      %694 = vmatpush2.xpose.msra.mxu0 0.0
      %695 = vmatprep.subr.mxu0 0.0
      %696 = vmatpush2.xpose.msra.mxu0 0.0
      %697 = vmatprep.subr.mxu0 0.0
      %698 = vmatpush2.xpose.msra.mxu0 0.0
      %699 = vmatprep.subr.mxu0 0.0
      %700 = vmatpush2.xpose.msra.mxu0 0.0
      %701 = vmatprep.subr.mxu0 0.0
      %702 = vmatpush2.xpose.msra.mxu0 0.0
      %703 = vmatprep.subr.mxu0 0.0
      %704 = vmatpush2.xpose.msra.mxu0 0.0
      %705 = vmatprep.subr.mxu0 0.0
      %706 = vmatpush2.xpose.msra.mxu0 0.0
      %707 = vmatprep.subr.mxu0 0.0
      %708 = vmatpush2.xpose.msra.mxu0 0.0
      %709 = vmatprep.subr.mxu0 0.0
      %710 = vmatpush2.xpose.msra.mxu0 0.0
      %711 = vmatprep.subr.mxu0 0.0
      %712 = vmatpush2.xpose.msra.mxu0 0.0
      %713 = vmatprep.subr.mxu0 0.0
      %714 = vmatpush2.xpose.msra.mxu0 0.0
      %715 = vmatprep.subr.mxu0 0.0
      %716 = vmatpush2.xpose.msra.mxu0 0.0
      %717 = vmatprep.mubr.f32.mxu0 0.0
      %718 = vmatmul.mubr.f32.gmra.mxu0 %v649
      %v719 = vpop.f32.mrf.mxu0
      %v720 = vadd.f32 0.0, %v719
      %v721 = vpop.f32.mrf.mxu0
      %722 = vdwg.mxu0
      %v723 = vmul.f32 %v720, 0.35355338
      %v724 = vadd.f32 %v723, %v458
      %s725 = scalar_lea.vmem [#allocation2], 8
      %v726 = vld [vmem:[%s725] sm:$0xff]
      %v727 = vsel %vm459, %v724, -inf
      %728 = vmax.xlane.f32.xlu0 %v727
      %v729 = vpop.xlane.xlu0 %728
      %v730 = vmax.f32 %v726, %v729
      %v731 = vsub.f32 %v726, %v730
      %v732 = vmul.f32 %v731, 1.442695
      %v733 = vpow.pop %v732
      %735 = vset.pattern.permute.xlu0 0
      %736 = vperm.xlu0 %735, %v730
      %v737 = vpop.permute.xlu0 %736
      %v739 = vsub.f32 %v724, %v737
      %v740 = vmul.f32 %v739, 1.442695
      %v741 = vpow.pop %v740
      %s742 = scalar_lea.vmem [#allocation3], 8
      %v743 = vld [vmem:[%s742] sm:$0xff]
      %v744 = vmul.f32 %v733, %v743
      %v745 = vsel %vm459, %v741, 0.0
      %746 = vadd.xlane.f32.xlu0 %v745
      %v747 = vpop.xlane.xlu0 %746
      %v748 = vadd.f32 %v744, %v747
      %749 = vst.msk [vmem:[%s742] sm:$0xff] %vm560, %v748
      %s750 = scalar_lea.vmem [#allocation4], 8
      %v751 = vld [vmem:[%s750] sm:$0xff]
      %753 = vset.pattern.permute.xlu0 0
      %754 = vperm.xlu0 %753, %v733
      %v755 = vpop.permute.xlu0 %754
      %v757 = vmul.f32 %v755, %v751
      %759 = vrot.lane.b32.xlu0 %v455, 120
      %v760 = vpop.permute.xlu0 %759
      %v763 = vsel %vm459, %v741, 0
      %765 = vmatprep.subr.mxu0 0.0
      %766 = vmatpush1.msra.mxu0 0.0
      %767 = vmatprep.subr.mxu0 0.0
      %768 = vmatpush1.msra.mxu0 0.0
      %769 = vmatprep.subr.mxu0 0.0
      %770 = vmatpush1.msra.mxu0 0.0
      %771 = vmatprep.subr.mxu0 0.0
      %772 = vmatpush1.msra.mxu0 0.0
      %773 = vmatprep.subr.mxu0 0.0
      %774 = vmatpush1.msra.mxu0 0.0
      %775 = vmatprep.subr.mxu0 0.0
      %776 = vmatpush1.msra.mxu0 0.0
      %777 = vmatprep.subr.mxu0 0.0
      %778 = vmatpush1.msra.mxu0 0.0
      %779 = vmatprep.subr.mxu0 0.0
      %780 = vmatpush1.msra.mxu0 0.0
      %781 = vmatprep.subr.mxu0 0.0
      %782 = vmatpush1.msra.mxu0 0.0
      %783 = vmatprep.subr.mxu0 0.0
      %784 = vmatpush1.msra.mxu0 0.0
      %785 = vmatprep.subr.mxu0 0.0
      %786 = vmatpush1.msra.mxu0 0.0
      %787 = vmatprep.subr.mxu0 0.0
      %788 = vmatpush1.msra.mxu0 0.0
      %789 = vmatprep.subr.mxu0 0.0
      %790 = vmatpush1.msra.mxu0 0.0
      %791 = vmatprep.subr.mxu0 0.0
      %792 = vmatpush1.msra.mxu0 0.0
      %793 = vmatprep.subr.mxu0 0.0
      %794 = vmatpush1.msra.mxu0 0.0
      %795 = vmatprep.subr.mxu0 0.0
      %796 = vmatpush1.msra.mxu0 %v760
      %797 = vmatprep.subr.mxu0 0.0
      %798 = vmatpush2.msra.mxu0 0.0
      %799 = vmatprep.subr.mxu0 0.0
      %800 = vmatpush2.msra.mxu0 0.0
      %801 = vmatprep.subr.mxu0 0.0
      %802 = vmatpush2.msra.mxu0 0.0
      %803 = vmatprep.subr.mxu0 0.0
      %804 = vmatpush2.msra.mxu0 0.0
      %805 = vmatprep.subr.mxu0 0.0
      %806 = vmatpush2.msra.mxu0 0.0
      %807 = vmatprep.subr.mxu0 0.0
      %808 = vmatpush2.msra.mxu0 0.0
      %809 = vmatprep.subr.mxu0 0.0
      %810 = vmatpush2.msra.mxu0 0.0
      %811 = vmatprep.subr.mxu0 0.0
      %812 = vmatpush2.msra.mxu0 0.0
      %813 = vmatprep.subr.mxu0 0.0
      %814 = vmatpush2.msra.mxu0 0.0
      %815 = vmatprep.subr.mxu0 0.0
      %816 = vmatpush2.msra.mxu0 0.0
      %817 = vmatprep.subr.mxu0 0.0
      %818 = vmatpush2.msra.mxu0 0.0
      %819 = vmatprep.subr.mxu0 0.0
      %820 = vmatpush2.msra.mxu0 0.0
      %821 = vmatprep.subr.mxu0 0.0
      %822 = vmatpush2.msra.mxu0 0.0
      %823 = vmatprep.subr.mxu0 0.0
      %824 = vmatpush2.msra.mxu0 0.0
      %825 = vmatprep.subr.mxu0 0.0
      %826 = vmatpush2.msra.mxu0 0.0
      %827 = vmatprep.subr.mxu0 0.0
      %828 = vmatpush2.msra.mxu0 0.0
      %829 = vmatprep.mubr.f32.mxu0 0.0
      %830 = vmatmul.mubr.f32.gmra.mxu0 %v763
      %v831 = vpop.f32.mrf.mxu0
      %v832 = vadd.f32 0.0, %v831
      %v833 = vpop.f32.mrf.mxu0
      %834 = vdwg.mxu0
      %v835 = vadd.f32 %v757, %v832
      %836 = vst.msk [vmem:[%s750] sm:$0xff] %vm459, %v835
      %837 = vst.msk [vmem:[%s725] sm:$0xff] %vm560, %v730
      %838 = vrot.lane.b32.xlu0 %v453, 112
      %v839 = vpop.permute.xlu0 %838
      %840 = vrot.lane.b32.xlu0 %v454, 112
      %v841 = vpop.permute.xlu0 %840
      %v842 = vsel %vm459, %v839, 0
      %v844 = vsel %vm459, %v841, 0
      %846 = vmatprep.subr.mxu0 0.0
      %847 = vmatpush1.xpose.msra.mxu0 0.0
      %848 = vmatprep.subr.mxu0 0.0
      %849 = vmatpush1.xpose.msra.mxu0 0.0
      %850 = vmatprep.subr.mxu0 0.0
      %851 = vmatpush1.xpose.msra.mxu0 0.0
      %852 = vmatprep.subr.mxu0 0.0
      %853 = vmatpush1.xpose.msra.mxu0 0.0
      %854 = vmatprep.subr.mxu0 0.0
      %855 = vmatpush1.xpose.msra.mxu0 0.0
      %856 = vmatprep.subr.mxu0 0.0
      %857 = vmatpush1.xpose.msra.mxu0 0.0
      %858 = vmatprep.subr.mxu0 0.0
      %859 = vmatpush1.xpose.msra.mxu0 0.0
      %860 = vmatprep.subr.mxu0 0.0
      %861 = vmatpush1.xpose.msra.mxu0 0.0
      %862 = vmatprep.subr.mxu0 0.0
      %863 = vmatpush1.xpose.msra.mxu0 0.0
      %864 = vmatprep.subr.mxu0 0.0
      %865 = vmatpush1.xpose.msra.mxu0 0.0
      %866 = vmatprep.subr.mxu0 0.0
      %867 = vmatpush1.xpose.msra.mxu0 0.0
      %868 = vmatprep.subr.mxu0 0.0
      %869 = vmatpush1.xpose.msra.mxu0 0.0
      %870 = vmatprep.subr.mxu0 0.0
      %871 = vmatpush1.xpose.msra.mxu0 0.0
      %872 = vmatprep.subr.mxu0 0.0
      %873 = vmatpush1.xpose.msra.mxu0 0.0
      %874 = vmatprep.subr.mxu0 0.0
      %875 = vmatpush1.xpose.msra.mxu0 0.0
      %876 = vmatprep.subr.mxu0 0.0
      %877 = vmatpush1.xpose.msra.mxu0 %v844
      %878 = vmatprep.subr.mxu0 0.0
      %879 = vmatpush2.xpose.msra.mxu0 0.0
      %880 = vmatprep.subr.mxu0 0.0
      %881 = vmatpush2.xpose.msra.mxu0 0.0
      %882 = vmatprep.subr.mxu0 0.0
      %883 = vmatpush2.xpose.msra.mxu0 0.0
      %884 = vmatprep.subr.mxu0 0.0
      %885 = vmatpush2.xpose.msra.mxu0 0.0
      %886 = vmatprep.subr.mxu0 0.0
      %887 = vmatpush2.xpose.msra.mxu0 0.0
      %888 = vmatprep.subr.mxu0 0.0
      %889 = vmatpush2.xpose.msra.mxu0 0.0
      %890 = vmatprep.subr.mxu0 0.0
      %891 = vmatpush2.xpose.msra.mxu0 0.0
      %892 = vmatprep.subr.mxu0 0.0
      %893 = vmatpush2.xpose.msra.mxu0 0.0
      %894 = vmatprep.subr.mxu0 0.0
      %895 = vmatpush2.xpose.msra.mxu0 0.0
      %896 = vmatprep.subr.mxu0 0.0
      %897 = vmatpush2.xpose.msra.mxu0 0.0
      %898 = vmatprep.subr.mxu0 0.0
      %899 = vmatpush2.xpose.msra.mxu0 0.0
      %900 = vmatprep.subr.mxu0 0.0
      %901 = vmatpush2.xpose.msra.mxu0 0.0
      %902 = vmatprep.subr.mxu0 0.0
      %903 = vmatpush2.xpose.msra.mxu0 0.0
      %904 = vmatprep.subr.mxu0 0.0
      %905 = vmatpush2.xpose.msra.mxu0 0.0
      %906 = vmatprep.subr.mxu0 0.0
      %907 = vmatpush2.xpose.msra.mxu0 0.0
      %908 = vmatprep.subr.mxu0 0.0
      %909 = vmatpush2.xpose.msra.mxu0 0.0
      %910 = vmatprep.mubr.f32.mxu0 0.0
      %911 = vmatmul.mubr.f32.gmra.mxu0 %v842
      %v912 = vpop.f32.mrf.mxu0
      %v913 = vadd.f32 0.0, %v912
      %v914 = vpop.f32.mrf.mxu0
      %915 = vdwg.mxu0
      %v916 = vmul.f32 %v913, 0.35355338
      %v917 = vadd.f32 %v916, %v458
      %s918 = scalar_lea.vmem [#allocation2], 16
      %v919 = vld [vmem:[%s918] sm:$0xff]
      %v920 = vsel %vm459, %v917, -inf
      %921 = vmax.xlane.f32.xlu0 %v920
      %v922 = vpop.xlane.xlu0 %921
      %v923 = vmax.f32 %v919, %v922
      %v924 = vsub.f32 %v919, %v923
      %v925 = vmul.f32 %v924, 1.442695
      %v926 = vpow.pop %v925
      %928 = vset.pattern.permute.xlu0 0
      %929 = vperm.xlu0 %928, %v923
      %v930 = vpop.permute.xlu0 %929
      %v932 = vsub.f32 %v917, %v930
      %v933 = vmul.f32 %v932, 1.442695
      %v934 = vpow.pop %v933
      %s935 = scalar_lea.vmem [#allocation3], 16
      %v936 = vld [vmem:[%s935] sm:$0xff]
      %v937 = vmul.f32 %v926, %v936
      %v938 = vsel %vm459, %v934, 0.0
      %939 = vadd.xlane.f32.xlu0 %v938
      %v940 = vpop.xlane.xlu0 %939
      %v941 = vadd.f32 %v937, %v940
      %942 = vst.msk [vmem:[%s935] sm:$0xff] %vm560, %v941
      %s943 = scalar_lea.vmem [#allocation4], 16
      %v944 = vld [vmem:[%s943] sm:$0xff]
      %946 = vset.pattern.permute.xlu0 0
      %947 = vperm.xlu0 %946, %v926
      %v948 = vpop.permute.xlu0 %947
      %v950 = vmul.f32 %v948, %v944
      %951 = vrot.lane.b32.xlu0 %v455, 112
      %v952 = vpop.permute.xlu0 %951
      %v955 = vsel %vm459, %v934, 0
      %957 = vmatprep.subr.mxu0 0.0
      %958 = vmatpush1.msra.mxu0 0.0
      %959 = vmatprep.subr.mxu0 0.0
      %960 = vmatpush1.msra.mxu0 0.0
      %961 = vmatprep.subr.mxu0 0.0
      %962 = vmatpush1.msra.mxu0 0.0
      %963 = vmatprep.subr.mxu0 0.0
      %964 = vmatpush1.msra.mxu0 0.0
      %965 = vmatprep.subr.mxu0 0.0
      %966 = vmatpush1.msra.mxu0 0.0
      %967 = vmatprep.subr.mxu0 0.0
      %968 = vmatpush1.msra.mxu0 0.0
      %969 = vmatprep.subr.mxu0 0.0
      %970 = vmatpush1.msra.mxu0 0.0
      %971 = vmatprep.subr.mxu0 0.0
      %972 = vmatpush1.msra.mxu0 0.0
      %973 = vmatprep.subr.mxu0 0.0
      %974 = vmatpush1.msra.mxu0 0.0
      %975 = vmatprep.subr.mxu0 0.0
      %976 = vmatpush1.msra.mxu0 0.0
      %977 = vmatprep.subr.mxu0 0.0
      %978 = vmatpush1.msra.mxu0 0.0
      %979 = vmatprep.subr.mxu0 0.0
      %980 = vmatpush1.msra.mxu0 0.0
      %981 = vmatprep.subr.mxu0 0.0
      %982 = vmatpush1.msra.mxu0 0.0
      %983 = vmatprep.subr.mxu0 0.0
      %984 = vmatpush1.msra.mxu0 0.0
      %985 = vmatprep.subr.mxu0 0.0
      %986 = vmatpush1.msra.mxu0 0.0
      %987 = vmatprep.subr.mxu0 0.0
      %988 = vmatpush1.msra.mxu0 %v952
      %989 = vmatprep.subr.mxu0 0.0
      %990 = vmatpush2.msra.mxu0 0.0
      %991 = vmatprep.subr.mxu0 0.0
      %992 = vmatpush2.msra.mxu0 0.0
      %993 = vmatprep.subr.mxu0 0.0
      %994 = vmatpush2.msra.mxu0 0.0
      %995 = vmatprep.subr.mxu0 0.0
      %996 = vmatpush2.msra.mxu0 0.0
      %997 = vmatprep.subr.mxu0 0.0
      %998 = vmatpush2.msra.mxu0 0.0
      %999 = vmatprep.subr.mxu0 0.0
      %1000 = vmatpush2.msra.mxu0 0.0
      %1001 = vmatprep.subr.mxu0 0.0
      %1002 = vmatpush2.msra.mxu0 0.0
      %1003 = vmatprep.subr.mxu0 0.0
      %1004 = vmatpush2.msra.mxu0 0.0
      %1005 = vmatprep.subr.mxu0 0.0
      %1006 = vmatpush2.msra.mxu0 0.0
      %1007 = vmatprep.subr.mxu0 0.0
      %1008 = vmatpush2.msra.mxu0 0.0
      %1009 = vmatprep.subr.mxu0 0.0
      %1010 = vmatpush2.msra.mxu0 0.0
      %1011 = vmatprep.subr.mxu0 0.0
      %1012 = vmatpush2.msra.mxu0 0.0
      %1013 = vmatprep.subr.mxu0 0.0
      %1014 = vmatpush2.msra.mxu0 0.0
      %1015 = vmatprep.subr.mxu0 0.0
      %1016 = vmatpush2.msra.mxu0 0.0
      %1017 = vmatprep.subr.mxu0 0.0
      %1018 = vmatpush2.msra.mxu0 0.0
      %1019 = vmatprep.subr.mxu0 0.0
      %1020 = vmatpush2.msra.mxu0 0.0
      %1021 = vmatprep.mubr.f32.mxu0 0.0
      %1022 = vmatmul.mubr.f32.gmra.mxu0 %v955
      %v1023 = vpop.f32.mrf.mxu0
      %v1024 = vadd.f32 0.0, %v1023
      %v1025 = vpop.f32.mrf.mxu0
      %1026 = vdwg.mxu0
      %v1027 = vadd.f32 %v950, %v1024
      %1028 = vst.msk [vmem:[%s943] sm:$0xff] %vm459, %v1027
      %1029 = vst.msk [vmem:[%s918] sm:$0xff] %vm560, %v923
      %1030 = vrot.lane.b32.xlu0 %v453, 104
      %v1031 = vpop.permute.xlu0 %1030
      %1032 = vrot.lane.b32.xlu0 %v454, 104
      %v1033 = vpop.permute.xlu0 %1032
      %v1034 = vsel %vm459, %v1031, 0
      %v1036 = vsel %vm459, %v1033, 0
      %1038 = vmatprep.subr.mxu0 0.0
      %1039 = vmatpush1.xpose.msra.mxu0 0.0
      %1040 = vmatprep.subr.mxu0 0.0
      %1041 = vmatpush1.xpose.msra.mxu0 0.0
      %1042 = vmatprep.subr.mxu0 0.0
      %1043 = vmatpush1.xpose.msra.mxu0 0.0
      %1044 = vmatprep.subr.mxu0 0.0
      %1045 = vmatpush1.xpose.msra.mxu0 0.0
      %1046 = vmatprep.subr.mxu0 0.0
      %1047 = vmatpush1.xpose.msra.mxu0 0.0
      %1048 = vmatprep.subr.mxu0 0.0
      %1049 = vmatpush1.xpose.msra.mxu0 0.0
      %1050 = vmatprep.subr.mxu0 0.0
      %1051 = vmatpush1.xpose.msra.mxu0 0.0
      %1052 = vmatprep.subr.mxu0 0.0
      %1053 = vmatpush1.xpose.msra.mxu0 0.0
      %1054 = vmatprep.subr.mxu0 0.0
      %1055 = vmatpush1.xpose.msra.mxu0 0.0
      %1056 = vmatprep.subr.mxu0 0.0
      %1057 = vmatpush1.xpose.msra.mxu0 0.0
      %1058 = vmatprep.subr.mxu0 0.0
      %1059 = vmatpush1.xpose.msra.mxu0 0.0
      %1060 = vmatprep.subr.mxu0 0.0
      %1061 = vmatpush1.xpose.msra.mxu0 0.0
      %1062 = vmatprep.subr.mxu0 0.0
      %1063 = vmatpush1.xpose.msra.mxu0 0.0
      %1064 = vmatprep.subr.mxu0 0.0
      %1065 = vmatpush1.xpose.msra.mxu0 0.0
      %1066 = vmatprep.subr.mxu0 0.0
      %1067 = vmatpush1.xpose.msra.mxu0 0.0
      %1068 = vmatprep.subr.mxu0 0.0
      %1069 = vmatpush1.xpose.msra.mxu0 %v1036
      %1070 = vmatprep.subr.mxu0 0.0
      %1071 = vmatpush2.xpose.msra.mxu0 0.0
      %1072 = vmatprep.subr.mxu0 0.0
      %1073 = vmatpush2.xpose.msra.mxu0 0.0
      %1074 = vmatprep.subr.mxu0 0.0
      %1075 = vmatpush2.xpose.msra.mxu0 0.0
      %1076 = vmatprep.subr.mxu0 0.0
      %1077 = vmatpush2.xpose.msra.mxu0 0.0
      %1078 = vmatprep.subr.mxu0 0.0
      %1079 = vmatpush2.xpose.msra.mxu0 0.0
      %1080 = vmatprep.subr.mxu0 0.0
      %1081 = vmatpush2.xpose.msra.mxu0 0.0
      %1082 = vmatprep.subr.mxu0 0.0
      %1083 = vmatpush2.xpose.msra.mxu0 0.0
      %1084 = vmatprep.subr.mxu0 0.0
      %1085 = vmatpush2.xpose.msra.mxu0 0.0
      %1086 = vmatprep.subr.mxu0 0.0
      %1087 = vmatpush2.xpose.msra.mxu0 0.0
      %1088 = vmatprep.subr.mxu0 0.0
      %1089 = vmatpush2.xpose.msra.mxu0 0.0
      %1090 = vmatprep.subr.mxu0 0.0
      %1091 = vmatpush2.xpose.msra.mxu0 0.0
      %1092 = vmatprep.subr.mxu0 0.0
      %1093 = vmatpush2.xpose.msra.mxu0 0.0
      %1094 = vmatprep.subr.mxu0 0.0
      %1095 = vmatpush2.xpose.msra.mxu0 0.0
      %1096 = vmatprep.subr.mxu0 0.0
      %1097 = vmatpush2.xpose.msra.mxu0 0.0
      %1098 = vmatprep.subr.mxu0 0.0
      %1099 = vmatpush2.xpose.msra.mxu0 0.0
      %1100 = vmatprep.subr.mxu0 0.0
      %1101 = vmatpush2.xpose.msra.mxu0 0.0
      %1102 = vmatprep.mubr.f32.mxu0 0.0
      %1103 = vmatmul.mubr.f32.gmra.mxu0 %v1034
      %v1104 = vpop.f32.mrf.mxu0
      %v1105 = vadd.f32 0.0, %v1104
      %v1106 = vpop.f32.mrf.mxu0
      %1107 = vdwg.mxu0
      %v1108 = vmul.f32 %v1105, 0.35355338
      %v1109 = vadd.f32 %v1108, %v458
      %s1110 = scalar_lea.vmem [#allocation2], 24
      %v1111 = vld [vmem:[%s1110] sm:$0xff]
      %v1112 = vsel %vm459, %v1109, -inf
      %1113 = vmax.xlane.f32.xlu0 %v1112
      %v1114 = vpop.xlane.xlu0 %1113
      %v1115 = vmax.f32 %v1111, %v1114
      %v1116 = vsub.f32 %v1111, %v1115
      %v1117 = vmul.f32 %v1116, 1.442695
      %v1118 = vpow.pop %v1117
      %1120 = vset.pattern.permute.xlu0 0
      %1121 = vperm.xlu0 %1120, %v1115
      %v1122 = vpop.permute.xlu0 %1121
      %v1124 = vsub.f32 %v1109, %v1122
      %v1125 = vmul.f32 %v1124, 1.442695
      %v1126 = vpow.pop %v1125
      %s1127 = scalar_lea.vmem [#allocation3], 24
      %v1128 = vld [vmem:[%s1127] sm:$0xff]
      %v1129 = vmul.f32 %v1118, %v1128
      %v1130 = vsel %vm459, %v1126, 0.0
      %1131 = vadd.xlane.f32.xlu0 %v1130
      %v1132 = vpop.xlane.xlu0 %1131
      %v1133 = vadd.f32 %v1129, %v1132
      %1134 = vst.msk [vmem:[%s1127] sm:$0xff] %vm560, %v1133
      %s1135 = scalar_lea.vmem [#allocation4], 24
      %v1136 = vld [vmem:[%s1135] sm:$0xff]
      %1138 = vset.pattern.permute.xlu0 0
      %1139 = vperm.xlu0 %1138, %v1118
      %v1140 = vpop.permute.xlu0 %1139
      %v1142 = vmul.f32 %v1140, %v1136
      %1143 = vrot.lane.b32.xlu0 %v455, 104
      %v1144 = vpop.permute.xlu0 %1143
      %v1147 = vsel %vm459, %v1126, 0
      %1149 = vmatprep.subr.mxu0 0.0
      %1150 = vmatpush1.msra.mxu0 0.0
      %1151 = vmatprep.subr.mxu0 0.0
      %1152 = vmatpush1.msra.mxu0 0.0
      %1153 = vmatprep.subr.mxu0 0.0
      %1154 = vmatpush1.msra.mxu0 0.0
      %1155 = vmatprep.subr.mxu0 0.0
      %1156 = vmatpush1.msra.mxu0 0.0
      %1157 = vmatprep.subr.mxu0 0.0
      %1158 = vmatpush1.msra.mxu0 0.0
      %1159 = vmatprep.subr.mxu0 0.0
      %1160 = vmatpush1.msra.mxu0 0.0
      %1161 = vmatprep.subr.mxu0 0.0
      %1162 = vmatpush1.msra.mxu0 0.0
      %1163 = vmatprep.subr.mxu0 0.0
      %1164 = vmatpush1.msra.mxu0 0.0
      %1165 = vmatprep.subr.mxu0 0.0
      %1166 = vmatpush1.msra.mxu0 0.0
      %1167 = vmatprep.subr.mxu0 0.0
      %1168 = vmatpush1.msra.mxu0 0.0
      %1169 = vmatprep.subr.mxu0 0.0
      %1170 = vmatpush1.msra.mxu0 0.0
      %1171 = vmatprep.subr.mxu0 0.0
      %1172 = vmatpush1.msra.mxu0 0.0
      %1173 = vmatprep.subr.mxu0 0.0
      %1174 = vmatpush1.msra.mxu0 0.0
      %1175 = vmatprep.subr.mxu0 0.0
      %1176 = vmatpush1.msra.mxu0 0.0
      %1177 = vmatprep.subr.mxu0 0.0
      %1178 = vmatpush1.msra.mxu0 0.0
      %1179 = vmatprep.subr.mxu0 0.0
      %1180 = vmatpush1.msra.mxu0 %v1144
      %1181 = vmatprep.subr.mxu0 0.0
      %1182 = vmatpush2.msra.mxu0 0.0
      %1183 = vmatprep.subr.mxu0 0.0
      %1184 = vmatpush2.msra.mxu0 0.0
      %1185 = vmatprep.subr.mxu0 0.0
      %1186 = vmatpush2.msra.mxu0 0.0
      %1187 = vmatprep.subr.mxu0 0.0
      %1188 = vmatpush2.msra.mxu0 0.0
      %1189 = vmatprep.subr.mxu0 0.0
      %1190 = vmatpush2.msra.mxu0 0.0
      %1191 = vmatprep.subr.mxu0 0.0
      %1192 = vmatpush2.msra.mxu0 0.0
      %1193 = vmatprep.subr.mxu0 0.0
      %1194 = vmatpush2.msra.mxu0 0.0
      %1195 = vmatprep.subr.mxu0 0.0
      %1196 = vmatpush2.msra.mxu0 0.0
      %1197 = vmatprep.subr.mxu0 0.0
      %1198 = vmatpush2.msra.mxu0 0.0
      %1199 = vmatprep.subr.mxu0 0.0
      %1200 = vmatpush2.msra.mxu0 0.0
      %1201 = vmatprep.subr.mxu0 0.0
      %1202 = vmatpush2.msra.mxu0 0.0
      %1203 = vmatprep.subr.mxu0 0.0
      %1204 = vmatpush2.msra.mxu0 0.0
      %1205 = vmatprep.subr.mxu0 0.0
      %1206 = vmatpush2.msra.mxu0 0.0
      %1207 = vmatprep.subr.mxu0 0.0
      %1208 = vmatpush2.msra.mxu0 0.0
      %1209 = vmatprep.subr.mxu0 0.0
      %1210 = vmatpush2.msra.mxu0 0.0
      %1211 = vmatprep.subr.mxu0 0.0
      %1212 = vmatpush2.msra.mxu0 0.0
      %1213 = vmatprep.mubr.f32.mxu0 0.0
      %1214 = vmatmul.mubr.f32.gmra.mxu0 %v1147
      %v1215 = vpop.f32.mrf.mxu0
      %v1216 = vadd.f32 0.0, %v1215
      %v1217 = vpop.f32.mrf.mxu0
      %1218 = vdwg.mxu0
      %v1219 = vadd.f32 %v1142, %v1216
      %1220 = vst.msk [vmem:[%s1135] sm:$0xff] %vm459, %v1219
      %1221 = vst.msk [vmem:[%s1110] sm:$0xff] %vm560, %v1115
      // Predicated region
      $region53: #{decoder_layer.7} parent=47 // pred_check
        %p1222 = pneg %p435
      $region54: #{decoder_layer.7} parent=47 // pred_check_branch
        %1224 = sbr.rel (%p1222) target = $region56
      $region55: #{decoder_layer.7} parent=47 // pred_region
        %v1225 = vld [vmem:[#allocation3] sm:$0xff]
        %v1226 = vrcp.pop %v1225
        %v1227 = vld [vmem:[#allocation4] sm:$0xff]
        %1229 = vset.pattern.permute.xlu0 0
        %1230 = vperm.xlu0 %1229, %v1226
        %v1231 = vpop.permute.xlu0 %1230
        %v1233 = vmul.f32 %v1227, %v1231
        %v1234 = vld [vmem:[%s742] sm:$0xff]
        %v1235 = vrcp.pop %v1234
        %v1236 = vld [vmem:[%s750] sm:$0xff]
        %1238 = vset.pattern.permute.xlu0 0
        %1239 = vperm.xlu0 %1238, %v1235
        %v1240 = vpop.permute.xlu0 %1239
        %v1242 = vmul.f32 %v1236, %v1240
        %v1243 = vld [vmem:[%s935] sm:$0xff]
        %v1244 = vrcp.pop %v1243
        %v1245 = vld [vmem:[%s943] sm:$0xff]
        %1247 = vset.pattern.permute.xlu0 0
        %1248 = vperm.xlu0 %1247, %v1244
        %v1249 = vpop.permute.xlu0 %1248
        %v1251 = vmul.f32 %v1245, %v1249
        %v1252 = vld [vmem:[%s1127] sm:$0xff]
        %v1253 = vrcp.pop %v1252
        %v1254 = vld [vmem:[%s1135] sm:$0xff]
        %1256 = vset.pattern.permute.xlu0 0
        %1257 = vperm.xlu0 %1256, %v1253
        %v1258 = vpop.permute.xlu0 %1257
        %v1260 = vmul.f32 %v1254, %v1258
        %1262 = vrot.lane.b32.xlu0 %v1242, 8
        %v1263 = vpop.permute.xlu0 %1262
        %1266 = vrot.lane.b32.xlu0 %v1251, 16
        %v1267 = vpop.permute.xlu0 %1266
        %1270 = vrot.lane.b32.xlu0 %v1260, 24
        %v1271 = vpop.permute.xlu0 %1270
        %v1273 = vsel %vm459, %v1233, %v1263
        %vm1274 = vcmask 130048
        %v1275 = vsel %vm1274, %v1273, %v1267
        %vm1276 = vcmask 195584
        %v1277 = vsel %vm1276, %v1275, %v1271
        %v1278 = vld [vmem:[%s5] sm:$0xff]
        %v1279 = vld [vmem:[%s5 + $0x8] sm:$0xff]
        %v1280 = vld [vmem:[%s5 + $0x10] sm:$0xff]
        %v1281 = vld [vmem:[%s5 + $0x18] sm:$0xff]
        %v1282 = vld [vmem:[%s6] sm:$0x1]
        %v1284 = vlaneseq
        %v1285 = vshrl.u32 %v1284, 7
        %v1286 = vsub.s32 0, %v1285
        %v1287 = vrot.slane %v1282, %v1286
        %vm1289 = vcmask 261120
        %v1291 = vsel %vm1289, %v1277, 0
        %1293 = vmatprep.subr.mxu0 0.0
        %1294 = vmatpush1.msra.mxu0 0.0
        %1295 = vmatprep.subr.mxu0 0.0
        %1296 = vmatpush1.msra.mxu0 0.0
        %1297 = vmatprep.subr.mxu0 0.0
        %1298 = vmatpush1.msra.mxu0 0.0
        %1299 = vmatprep.subr.mxu0 0.0
        %1300 = vmatpush1.msra.mxu0 0.0
        %1301 = vmatprep.subr.mxu0 0.0
        %1302 = vmatpush1.msra.mxu0 0.0
        %1303 = vmatprep.subr.mxu0 0.0
        %1304 = vmatpush1.msra.mxu0 0.0
        %1305 = vmatprep.subr.mxu0 0.0
        %1306 = vmatpush1.msra.mxu0 0.0
        %1307 = vmatprep.subr.mxu0 0.0
        %1308 = vmatpush1.msra.mxu0 0.0
        %1309 = vmatprep.subr.mxu0 0.0
        %1310 = vmatpush1.msra.mxu0 0.0
        %1311 = vmatprep.subr.mxu0 0.0
        %1312 = vmatpush1.msra.mxu0 0.0
        %1313 = vmatprep.subr.mxu0 0.0
        %1314 = vmatpush1.msra.mxu0 0.0
        %1315 = vmatprep.subr.mxu0 0.0
        %1316 = vmatpush1.msra.mxu0 0.0
        %1317 = vmatprep.subr.mxu0 0.0
        %1318 = vmatpush1.msra.mxu0 %v1281
        %1319 = vmatprep.subr.mxu0 0.0
        %1320 = vmatpush1.msra.mxu0 %v1280
        %1321 = vmatprep.subr.mxu0 0.0
        %1322 = vmatpush1.msra.mxu0 %v1279
        %1323 = vmatprep.subr.mxu0 0.0
        %1324 = vmatpush1.msra.mxu0 %v1278
        %1325 = vmatprep.subr.mxu0 0.0
        %1326 = vmatpush2.msra.mxu0 0.0
        %1327 = vmatprep.subr.mxu0 0.0
        %1328 = vmatpush2.msra.mxu0 0.0
        %1329 = vmatprep.subr.mxu0 0.0
        %1330 = vmatpush2.msra.mxu0 0.0
        %1331 = vmatprep.subr.mxu0 0.0
        %1332 = vmatpush2.msra.mxu0 0.0
        %1333 = vmatprep.subr.mxu0 0.0
        %1334 = vmatpush2.msra.mxu0 0.0
        %1335 = vmatprep.subr.mxu0 0.0
        %1336 = vmatpush2.msra.mxu0 0.0
        %1337 = vmatprep.subr.mxu0 0.0
        %1338 = vmatpush2.msra.mxu0 0.0
        %1339 = vmatprep.subr.mxu0 0.0
        %1340 = vmatpush2.msra.mxu0 0.0
        %1341 = vmatprep.subr.mxu0 0.0
        %1342 = vmatpush2.msra.mxu0 0.0
        %1343 = vmatprep.subr.mxu0 0.0
        %1344 = vmatpush2.msra.mxu0 0.0
        %1345 = vmatprep.subr.mxu0 0.0
        %1346 = vmatpush2.msra.mxu0 0.0
        %1347 = vmatprep.subr.mxu0 0.0
        %1348 = vmatpush2.msra.mxu0 0.0
        %1349 = vmatprep.subr.mxu0 0.0
        %1350 = vmatpush2.msra.mxu0 0.0
        %1351 = vmatprep.subr.mxu0 0.0
        %1352 = vmatpush2.msra.mxu0 0.0
        %1353 = vmatprep.subr.mxu0 0.0
        %1354 = vmatpush2.msra.mxu0 0.0
        %1355 = vmatprep.subr.mxu0 0.0
        %1356 = vmatpush2.msra.mxu0 0.0
        %1357 = vmatprep.mubr.f32.mxu0 0.0
        %1358 = vmatmul.mubr.f32.gmra.mxu0 %v1291
        %v1359 = vpop.f32.mrf.mxu0
        %v1360 = vadd.f32 %v1287, %v1359
        %v1361 = vpop.f32.mrf.mxu0
        %1362 = vdwg.mxu0
        %v1363 = vld [vmem:[%s427] sm:$0xff]
        %v1364 = vadd.f32 %v1360, %v1363
        %1365 = vst.msk [vmem:[%s434] sm:$0xff] %vm1289, %v1364
      $region56: #{decoder_layer.7} parent=47 // pred_fallthru
        _
      %p1366 = scmp.lt.s32.totalorder %s23, 1
      %s1367 = scalar_select %p1366, %s23, 1
      %p1368 = scmp.lt.s32.totalorder %s24, 0
      %s1369 = scalar_select %p1368, %s24, 0
      %s1370 = sadd.s32 %s1369, %s1367
      %s1371 = smul.addr %s1370, 8
      %s1372 = scalar_lea.vmem %s7, %s1371
      // Predicated region
      $region57: #{decoder_layer.7} parent=47 // pred_check
        %p1373 = pneg %p241
      $region58: #{decoder_layer.7} parent=47 // pred_check_branch
        %1375 = sbr.rel (%p1373) target = $region60
      $region59: #{decoder_layer.7} parent=47 // pred_region
        _
      $region60: #{decoder_layer.7} parent=47 // pred_fallthru
        _
    $region48: #{decoder_layer.7} parent=5 // pred_fallthru
      _
    %p1376 = scmp.le.s32.totalorder 2, %s13
    // Predicated region
    $region61: #{decoder_layer.7} parent=5 // pred_check
      %p1377 = pneg %p1376
    $region62: #{decoder_layer.7} parent=5 // pred_check_branch
      %1379 = sbr.rel (%p1377) target = $region64
    $region63: #{decoder_layer.7} parent=5 // pred_region
      %s1380 = ssub.s32 %s13, 2
      // Predicated region
      $region65: #{decoder_layer.7} parent=63 // pred_check
        %p1381 = pneg %p247
      $region66: #{decoder_layer.7} parent=63 // pred_check_branch
        %1383 = sbr.rel (%p1381) target = $region68
      $region67: #{decoder_layer.7} parent=63 // pred_region
        %p1384 = scmp.lt.s32.totalorder %s26, 1
        %s1385 = scalar_select %p1384, %s26, 1
        %p1386 = scmp.lt.s32.totalorder %s27, 0
        %s1387 = scalar_select %p1386, %s27, 0
        %s1388 = sadd.s32 %s1387, %s1385
        %s1389 = smul.addr %s1388, 8
        %s1390 = scalar_lea.vmem %s7, %s1389
      $region68: #{decoder_layer.7} parent=63 // pred_fallthru
        _
    $region64: #{decoder_layer.7} parent=5 // pred_fallthru
      _
  $region6: #{decoder_layer.7} parent=0 // loop_footer
    %s17 = sadd.s32 1, %s13
  $region7: #{decoder_layer.7} parent=0 // loop_footer_branch
    %12 = sbr.rel target = $region3
  $region8: #{decoder_layer.7} parent=0 // loop_exit
    _

// kernel: decoder_layer.11
$region0: #{decoder_layer.11}
  #allocation0 [shape = 'u32[]', space=smem, size = 0x4, offset = 0x4, fixed_abs, tag = 'smem constant byte address 0x4 - core index']
  #allocation1 [shape = 'u32[144,128]{1,0:T(1,128)}', space=vmem, size = 0x12000, scoped, tag = 'internal scratch']
  #allocation2 [shape = 'f32[16,32]{1,0:T(8,128)}', space=vmem, size = 0x2000, scoped, tag = 'scratch operand']
  #allocation3 [shape = 'f32[16,32]{1,0:T(8,128)}', space=vmem, size = 0x2000, scoped, tag = 'scratch operand']
  %s0 = inlined_call_operand.vmem [shape: f32[16,32], index: 0, kind: input, shape index: {}, may-alias: {0,7}]
  %s1 = inlined_call_operand.vmem [shape: f32[1,32], index: 1, kind: input, shape index: {}]
  %s2 = inlined_call_operand.vmem [shape: f32[1,32], index: 2, kind: input, shape index: {}]
  %s3 = inlined_call_operand.vmem [shape: f32[32,128], index: 3, kind: input, shape index: {}]
  %s4 = inlined_call_operand.vmem [shape: f32[1,128], index: 4, kind: input, shape index: {}]
  %s5 = inlined_call_operand.vmem [shape: f32[128,32], index: 5, kind: input, shape index: {}]
  %s6 = inlined_call_operand.vmem [shape: f32[1,32], index: 6, kind: input, shape index: {}]
  %s7 = inlined_call_operand.vmem [shape: f32[16,32], index: 7, kind: input, shape index: {}, may-alias: {0,7}]
  %s8 = inlined_call_operand.hbm [shape: f32[16,32], index: 8, kind: output, shape index: {}]
  %s9 = sld [smem:[#allocation0]]
  $region50: #{decoder_layer.11} parent=0
    _
  %s11 = ssub.s32 1, %s9
  %s12 = scalar_select 0, %s11, %s9
  $region1: #{decoder_layer.11} parent=0
    #allocation4 [shape = 'u8[8192]{0}', space=vmem, size = 0x2000, scoped, tag = 'output window, operand 0, single buffered']
    #allocation5 [shape = 's32[1]{0}', space=sflag, size = 0x4, scoped, tag = 'scoped memory for decoder_layer.11']
    %13 = vsyncpa [#allocation5], 0
    // Predicated region
    $region2: #{decoder_layer.11} parent=1 // pred_check
      _
    $region3: #{decoder_layer.11} parent=1 // pred_check_branch
      %15 = sbr.rel (0) target = $region5
    $region4: #{decoder_layer.11} parent=1 // pred_region
      _
    $region5: #{decoder_layer.11} parent=1 // pred_fallthru
      _
    // Predicated region
    $region6: #{decoder_layer.11} parent=1 // pred_check
      _
    $region7: #{decoder_layer.11} parent=1 // pred_check_branch
      %17 = sbr.rel (0) target = $region9
    $region8: #{decoder_layer.11} parent=1 // pred_region
      _
    $region9: #{decoder_layer.11} parent=1 // pred_fallthru
      _
    // Predicated region
    $region10: #{decoder_layer.11} parent=1 // pred_check
      _
    $region11: #{decoder_layer.11} parent=1 // pred_check_branch
      %19 = sbr.rel (0) target = $region13
    $region12: #{decoder_layer.11} parent=1 // pred_region
      _
    $region13: #{decoder_layer.11} parent=1 // pred_fallthru
      _
    // Predicated region
    $region14: #{decoder_layer.11} parent=1 // pred_check
      _
    $region15: #{decoder_layer.11} parent=1 // pred_check_branch
      %21 = sbr.rel (0) target = $region17
    $region16: #{decoder_layer.11} parent=1 // pred_region
      _
    $region17: #{decoder_layer.11} parent=1 // pred_fallthru
      _
    // Predicated region
    $region18: #{decoder_layer.11} parent=1 // pred_check
      _
    $region19: #{decoder_layer.11} parent=1 // pred_check_branch
      %23 = sbr.rel (0) target = $region21
    $region20: #{decoder_layer.11} parent=1 // pred_region
      _
    $region21: #{decoder_layer.11} parent=1 // pred_fallthru
      _
    // Predicated region
    $region22: #{decoder_layer.11} parent=1 // pred_check
      _
    $region23: #{decoder_layer.11} parent=1 // pred_check_branch
      %25 = sbr.rel (0) target = $region25
    $region24: #{decoder_layer.11} parent=1 // pred_region
      _
    $region25: #{decoder_layer.11} parent=1 // pred_fallthru
      _
    // Predicated region
    $region26: #{decoder_layer.11} parent=1 // pred_check
      _
    $region27: #{decoder_layer.11} parent=1 // pred_check_branch
      %27 = sbr.rel (0) target = $region29
    $region28: #{decoder_layer.11} parent=1 // pred_region
      _
    $region29: #{decoder_layer.11} parent=1 // pred_fallthru
      _
    // Predicated region
    $region30: #{decoder_layer.11} parent=1 // pred_check
      _
    $region31: #{decoder_layer.11} parent=1 // pred_check_branch
      %29 = sbr.rel (0) target = $region33
    $region32: #{decoder_layer.11} parent=1 // pred_region
      _
    $region33: #{decoder_layer.11} parent=1 // pred_fallthru
      _
    %p30 = scmp.eq.s32.totalorder 0, 0
    // Predicated region
    $region34: #{decoder_layer.11} parent=1 // pred_check
      %p31 = pneg %p30
    $region35: #{decoder_layer.11} parent=1 // pred_check_branch
      %33 = sbr.rel (%p31) target = $region37
    $region36: #{decoder_layer.11} parent=1 // pred_region
      %vm34 = vcmask 261120
      %35 = vst.msk [vmem:[#allocation2] sm:$0xff] %vm34, 0.0
      %36 = vst.msk [vmem:[#allocation2 + $0x8] sm:$0xff] %vm34, 0.0
      %v37 = vld [vmem:[%s0] sm:$0xff]
      %v38 = vld [vmem:[%s0 + $0x8] sm:$0xff]
      %v39 = vld [vmem:[%s1] sm:$0x1]
      %v40 = vld [vmem:[%s2] sm:$0x1]
      %v41 = vsel %vm34, %v37, 0.0
      %42 = vadd.xlane.f32.xlu0 %v41
      %v43 = vpop.xlane.xlu0 %42
      %v44 = vsel %vm34, %v38, 0.0
      %45 = vadd.xlane.f32.xlu0 %v44
      %v46 = vpop.xlane.xlu0 %45
      %v47 = vrcp.pop 32.0
      %v48 = vmul.f32 %v43, %v47
      %v49 = vmul.f32 %v46, %v47
      %v50 = vsub.f32 %v37, %v48
      %v51 = vsub.f32 %v38, %v49
      %v52 = vmul.f32 %v50, %v50
      %v53 = vmul.f32 %v51, %v51
      %v54 = vsel %vm34, %v52, 0.0
      %55 = vadd.xlane.f32.xlu0 %v54
      %v56 = vpop.xlane.xlu0 %55
      %v57 = vsel %vm34, %v53, 0.0
      %58 = vadd.xlane.f32.xlu0 %v57
      %v59 = vpop.xlane.xlu0 %58
      %v60 = vrcp.pop 31.0
      %v61 = vmul.f32 %v56, %v60
      %v62 = vmul.f32 %v59, %v60
      %v63 = vrsqrt.pop %v61
      %v64 = vmul.f32 %v61, %v63
      %vm65 = vcmp.eq.f32.partialorder %v61, inf
      %v66 = vsel %vm65, %v61, %v64
      %vm67 = vcmp.eq.f32.partialorder %v61, 0.0
      %v68 = vand.u32 %v61, 2147483648
      %v69 = vsel %vm67, %v68, %v66
      %v70 = vrsqrt.pop %v62
      %v71 = vmul.f32 %v62, %v70
      %vm72 = vcmp.eq.f32.partialorder %v62, inf
      %v73 = vsel %vm72, %v62, %v71
      %vm74 = vcmp.eq.f32.partialorder %v62, 0.0
      %v75 = vand.u32 %v62, 2147483648
      %v76 = vsel %vm74, %v75, %v73
      %v77 = vadd.f32 %v69, 1e-06
      %v78 = vadd.f32 %v76, 1e-06
      %v79 = vrcp.pop %v77
      %v80 = vrcp.pop %v78
      %v82 = vlaneseq
      %v83 = vshrl.u32 %v82, 7
      %v84 = vsub.s32 0, %v83
      %v85 = vrot.slane %v39, %v84
      %v87 = vmul.f32 %v85, %v50
      %v88 = vmul.f32 %v85, %v51
      %v89 = vmul.f32 %v87, %v79
      %v90 = vmul.f32 %v88, %v80
      %v92 = vlaneseq
      %v93 = vshrl.u32 %v92, 7
      %v94 = vsub.s32 0, %v93
      %v95 = vrot.slane %v40, %v94
      %v97 = vadd.f32 %v89, %v95
      %v98 = vadd.f32 %v90, %v95
      %99 = vst.msk [vmem:[#allocation3] sm:$0xff] %vm34, %v97
      %100 = vst.msk [vmem:[#allocation3 + $0x8] sm:$0xff] %vm34, %v98
    $region37: #{decoder_layer.11} parent=1 // pred_fallthru
      _
    %v101 = vld [vmem:[#allocation3] sm:$0xff]
    %v102 = vld [vmem:[#allocation3 + $0x8] sm:$0xff]
    %v103 = vld [vmem:[%s3] sm:$0xff]
    %v104 = vld [vmem:[%s3 + $0x8] sm:$0xff]
    %v105 = vld [vmem:[%s3 + $0x10] sm:$0xff]
    %v106 = vld [vmem:[%s3 + $0x18] sm:$0xff]
    %v107 = vld [vmem:[%s4] sm:$0x1]
    %v109 = vlaneseq
    %v110 = vshrl.u32 %v109, 7
    %v111 = vsub.s32 0, %v110
    %v112 = vrot.slane %v107, %v111
    %vm114 = vcmask 261120
    %v116 = vsel %vm114, %v101, 0
    %v119 = vsel %vm114, %v102, 0
    %121 = vmatprep.subr.mxu0 0.0
    %122 = vmatpush1.msra.mxu0 0.0
    %123 = vmatprep.subr.mxu0 0.0
    %124 = vmatpush1.msra.mxu0 0.0
    %125 = vmatprep.subr.mxu0 0.0
    %126 = vmatpush1.msra.mxu0 0.0
    %127 = vmatprep.subr.mxu0 0.0
    %128 = vmatpush1.msra.mxu0 0.0
    %129 = vmatprep.subr.mxu0 0.0
    %130 = vmatpush1.msra.mxu0 0.0
    %131 = vmatprep.subr.mxu0 0.0
    %132 = vmatpush1.msra.mxu0 0.0
    %133 = vmatprep.subr.mxu0 0.0
    %134 = vmatpush1.msra.mxu0 0.0
    %135 = vmatprep.subr.mxu0 0.0
    %136 = vmatpush1.msra.mxu0 0.0
    %137 = vmatprep.subr.mxu0 0.0
    %138 = vmatpush1.msra.mxu0 0.0
    %139 = vmatprep.subr.mxu0 0.0
    %140 = vmatpush1.msra.mxu0 0.0
    %141 = vmatprep.subr.mxu0 0.0
    %142 = vmatpush1.msra.mxu0 0.0
    %143 = vmatprep.subr.mxu0 0.0
    %144 = vmatpush1.msra.mxu0 0.0
    %145 = vmatprep.subr.mxu0 0.0
    %146 = vmatpush1.msra.mxu0 %v106
    %147 = vmatprep.subr.mxu0 0.0
    %148 = vmatpush1.msra.mxu0 %v105
    %149 = vmatprep.subr.mxu0 0.0
    %150 = vmatpush1.msra.mxu0 %v104
    %151 = vmatprep.subr.mxu0 0.0
    %152 = vmatpush1.msra.mxu0 %v103
    %153 = vmatprep.subr.mxu0 0.0
    %154 = vmatpush2.msra.mxu0 0.0
    %155 = vmatprep.subr.mxu0 0.0
    %156 = vmatpush2.msra.mxu0 0.0
    %157 = vmatprep.subr.mxu0 0.0
    %158 = vmatpush2.msra.mxu0 0.0
    %159 = vmatprep.subr.mxu0 0.0
    %160 = vmatpush2.msra.mxu0 0.0
    %161 = vmatprep.subr.mxu0 0.0
    %162 = vmatpush2.msra.mxu0 0.0
    %163 = vmatprep.subr.mxu0 0.0
    %164 = vmatpush2.msra.mxu0 0.0
    %165 = vmatprep.subr.mxu0 0.0
    %166 = vmatpush2.msra.mxu0 0.0
    %167 = vmatprep.subr.mxu0 0.0
    %168 = vmatpush2.msra.mxu0 0.0
    %169 = vmatprep.subr.mxu0 0.0
    %170 = vmatpush2.msra.mxu0 0.0
    %171 = vmatprep.subr.mxu0 0.0
    %172 = vmatpush2.msra.mxu0 0.0
    %173 = vmatprep.subr.mxu0 0.0
    %174 = vmatpush2.msra.mxu0 0.0
    %175 = vmatprep.subr.mxu0 0.0
    %176 = vmatpush2.msra.mxu0 0.0
    %177 = vmatprep.subr.mxu0 0.0
    %178 = vmatpush2.msra.mxu0 0.0
    %179 = vmatprep.subr.mxu0 0.0
    %180 = vmatpush2.msra.mxu0 0.0
    %181 = vmatprep.subr.mxu0 0.0
    %182 = vmatpush2.msra.mxu0 0.0
    %183 = vmatprep.subr.mxu0 0.0
    %184 = vmatpush2.msra.mxu0 0.0
    %185 = vmatprep.mubr.f32.mxu0 0.0
    %186 = vmatmul.mubr.f32.gmra.mxu0 %v116
    %v187 = vpop.f32.mrf.mxu0
    %v188 = vadd.f32 %v112, %v187
    %v189 = vpop.f32.mrf.mxu0
    %190 = vmatprep.mubr.f32.mxu0 0.0
    %191 = vmatmul.mubr.f32.gmra.mxu0 %v119
    %v192 = vpop.f32.mrf.mxu0
    %v193 = vadd.f32 %v112, %v192
    %v194 = vpop.f32.mrf.mxu0
    %195 = vdwg.mxu0
    %v196 = vmax.f32 %v188, 0.0
    %v197 = vmax.f32 %v193, 0.0
    %v198 = vld [vmem:[#allocation2] sm:$0xff]
    %v199 = vld [vmem:[#allocation2 + $0x8] sm:$0xff]
    %v200 = vld [vmem:[%s5] sm:$0xff]
    %v201 = vld [vmem:[%s5 + $0x8] sm:$0xff]
    %v202 = vld [vmem:[%s5 + $0x10] sm:$0xff]
    %v203 = vld [vmem:[%s5 + $0x18] sm:$0xff]
    %v204 = vld [vmem:[%s5 + $0x20] sm:$0xff]
    %v205 = vld [vmem:[%s5 + $0x28] sm:$0xff]
    %v206 = vld [vmem:[%s5 + $0x30] sm:$0xff]
    %v207 = vld [vmem:[%s5 + $0x38] sm:$0xff]
    %v208 = vld [vmem:[%s5 + $0x40] sm:$0xff]
    %v209 = vld [vmem:[%s5 + $0x48] sm:$0xff]
    %v210 = vld [vmem:[%s5 + $0x50] sm:$0xff]
    %v211 = vld [vmem:[%s5 + $0x58] sm:$0xff]
    %v212 = vld [vmem:[%s5 + $0x60] sm:$0xff]
    %v213 = vld [vmem:[%s5 + $0x68] sm:$0xff]
    %v214 = vld [vmem:[%s5 + $0x70] sm:$0xff]
    %v215 = vld [vmem:[%s5 + $0x78] sm:$0xff]
    %216 = vmatprep.subr.mxu0 0.0
    %217 = vmatpush1.msra.mxu0 %v215
    %218 = vmatprep.subr.mxu0 0.0
    %219 = vmatpush1.msra.mxu0 %v214
    %220 = vmatprep.subr.mxu0 0.0
    %221 = vmatpush1.msra.mxu0 %v213
    %222 = vmatprep.subr.mxu0 0.0
    %223 = vmatpush1.msra.mxu0 %v212
    %224 = vmatprep.subr.mxu0 0.0
    %225 = vmatpush1.msra.mxu0 %v211
    %226 = vmatprep.subr.mxu0 0.0
    %227 = vmatpush1.msra.mxu0 %v210
    %228 = vmatprep.subr.mxu0 0.0
    %229 = vmatpush1.msra.mxu0 %v209
    %230 = vmatprep.subr.mxu0 0.0
    %231 = vmatpush1.msra.mxu0 %v208
    %232 = vmatprep.subr.mxu0 0.0
    %233 = vmatpush1.msra.mxu0 %v207
    %234 = vmatprep.subr.mxu0 0.0
    %235 = vmatpush1.msra.mxu0 %v206
    %236 = vmatprep.subr.mxu0 0.0
    %237 = vmatpush1.msra.mxu0 %v205
    %238 = vmatprep.subr.mxu0 0.0
    %239 = vmatpush1.msra.mxu0 %v204
    %240 = vmatprep.subr.mxu0 0.0
    %241 = vmatpush1.msra.mxu0 %v203
    %242 = vmatprep.subr.mxu0 0.0
    %243 = vmatpush1.msra.mxu0 %v202
    %244 = vmatprep.subr.mxu0 0.0
    %245 = vmatpush1.msra.mxu0 %v201
    %246 = vmatprep.subr.mxu0 0.0
    %247 = vmatpush1.msra.mxu0 %v200
    %248 = vmatprep.subr.mxu0 0.0
    %249 = vmatpush2.msra.mxu0 0.0
    %250 = vmatprep.subr.mxu0 0.0
    %251 = vmatpush2.msra.mxu0 0.0
    %252 = vmatprep.subr.mxu0 0.0
    %253 = vmatpush2.msra.mxu0 0.0
    %254 = vmatprep.subr.mxu0 0.0
    %255 = vmatpush2.msra.mxu0 0.0
    %256 = vmatprep.subr.mxu0 0.0
    %257 = vmatpush2.msra.mxu0 0.0
    %258 = vmatprep.subr.mxu0 0.0
    %259 = vmatpush2.msra.mxu0 0.0
    %260 = vmatprep.subr.mxu0 0.0
    %261 = vmatpush2.msra.mxu0 0.0
    %262 = vmatprep.subr.mxu0 0.0
    %263 = vmatpush2.msra.mxu0 0.0
    %264 = vmatprep.subr.mxu0 0.0
    %265 = vmatpush2.msra.mxu0 0.0
    %266 = vmatprep.subr.mxu0 0.0
    %267 = vmatpush2.msra.mxu0 0.0
    %268 = vmatprep.subr.mxu0 0.0
    %269 = vmatpush2.msra.mxu0 0.0
    %270 = vmatprep.subr.mxu0 0.0
    %271 = vmatpush2.msra.mxu0 0.0
    %272 = vmatprep.subr.mxu0 0.0
    %273 = vmatpush2.msra.mxu0 0.0
    %274 = vmatprep.subr.mxu0 0.0
    %275 = vmatpush2.msra.mxu0 0.0
    %276 = vmatprep.subr.mxu0 0.0
    %277 = vmatpush2.msra.mxu0 0.0
    %278 = vmatprep.subr.mxu0 0.0
    %279 = vmatpush2.msra.mxu0 0.0
    %280 = vmatprep.mubr.f32.mxu0 0.0
    %281 = vmatmul.mubr.f32.gmra.mxu0 %v196
    %v282 = vpop.f32.mrf.mxu0
    %v283 = vadd.f32 0.0, %v282
    %v284 = vpop.f32.mrf.mxu0
    %285 = vmatprep.mubr.f32.mxu0 0.0
    %286 = vmatmul.mubr.f32.gmra.mxu0 %v197
    %v287 = vpop.f32.mrf.mxu0
    %v288 = vadd.f32 0.0, %v287
    %v289 = vpop.f32.mrf.mxu0
    %290 = vdwg.mxu0
    %v291 = vadd.f32 %v198, %v283
    %v292 = vadd.f32 %v199, %v288
    %293 = vst.msk [vmem:[#allocation2] sm:$0xff] %vm114, %v291
    %294 = vst.msk [vmem:[#allocation2 + $0x8] sm:$0xff] %vm114, %v292
    // Predicated region
    $region38: #{decoder_layer.11} parent=1 // pred_check
      %p295 = pneg %p30
    $region39: #{decoder_layer.11} parent=1 // pred_check_branch
      %297 = sbr.rel (%p295) target = $region41
    $region40: #{decoder_layer.11} parent=1 // pred_region
      %v298 = vld [vmem:[#allocation2] sm:$0xff]
      %v299 = vld [vmem:[#allocation2 + $0x8] sm:$0xff]
      %v300 = vld [vmem:[%s6] sm:$0x1]
      %v302 = vlaneseq
      %v303 = vshrl.u32 %v302, 7
      %v304 = vsub.s32 0, %v303
      %v305 = vrot.slane %v300, %v304
      %v307 = vadd.f32 %v298, %v305
      %v308 = vadd.f32 %v299, %v305
      %v309 = vld [vmem:[%s7] sm:$0xff]
      %v310 = vld [vmem:[%s7 + $0x8] sm:$0xff]
      %v311 = vadd.f32 %v307, %v309
      %v312 = vadd.f32 %v308, %v310
      %313 = vst.msk [vmem:[#allocation4] sm:$0xff] %vm114, %v311
      %314 = vst.msk [vmem:[#allocation4 + $0x8] sm:$0xff] %vm114, %v312
    $region41: #{decoder_layer.11} parent=1 // pred_fallthru
      _
    // Predicated region
    $region42: #{decoder_layer.11} parent=1 // pred_check
      _
    $region43: #{decoder_layer.11} parent=1 // pred_check_branch
      %316 = sbr.rel (0) target = $region45
    $region44: #{decoder_layer.11} parent=1 // pred_region
      %s318 = ssub.s32 256, 256
      %319 = vsyncadd [#allocation5], %s318
      %s320 = sshll.u32 [#allocation4], 4
      %s321 = int_to_ptr.vmem [resolvable:$true] %s320
      %326 = dma.vmem_to_hbm [thread:$0]  %s321, 256, %s8, [#allocation5], 128, 128, 8
    $region45: #{decoder_layer.11} parent=1 // pred_fallthru
      _
    // Predicated region
    $region46: #{decoder_layer.11} parent=1 // pred_check
      _
    $region47: #{decoder_layer.11} parent=1 // pred_check_branch
      %328 = sbr.rel (0) target = $region49
    $region48: #{decoder_layer.11} parent=1 // pred_region
      %329 = dma.done [#allocation5], 256
    $region49: #{decoder_layer.11} parent=1 // pred_fallthru
      _
    %330 = vsyncpa [#allocation5], 1

// kernel: decoder_layer.10
$region0: #{decoder_layer.10}
  #allocation0 [shape = 'u32[]', space=smem, size = 0x4, offset = 0x4, fixed_abs, tag = 'smem constant byte address 0x4 - core index']
  #allocation1 [shape = 'u32[144,128]{1,0:T(1,128)}', space=vmem, size = 0x12000, scoped, tag = 'internal scratch']
  #allocation2 [shape = 'f32[4,8,1]{2,1,0:T(8,128)}', space=vmem, size = 0x4000, scoped, tag = 'scratch operand']
  #allocation3 [shape = 'f32[4,8,1]{2,1,0:T(8,128)}', space=vmem, size = 0x4000, scoped, tag = 'scratch operand']
  #allocation4 [shape = 'f32[4,8,8]{2,1,0:T(8,128)}', space=vmem, size = 0x4000, scoped, tag = 'scratch operand']
  %s0 = inlined_call_operand.vmem [shape: f32[2,8,32], index: 0, kind: input, shape index: {}]
  %s1 = inlined_call_operand.vmem [shape: f32[2,8,32], index: 1, kind: input, shape index: {}]
  %s2 = inlined_call_operand.vmem [shape: f32[2,8,32], index: 2, kind: input, shape index: {}]
  %s3 = inlined_call_operand.vmem [shape: f32[2,1,8], index: 3, kind: input, shape index: {}]
  %s4 = inlined_call_operand.vmem [shape: f32[2,8,32], index: 4, kind: input, shape index: {}]
  %s5 = inlined_call_operand.vmem [shape: f32[32,32], index: 5, kind: input, shape index: {}]
  %s6 = inlined_call_operand.vmem [shape: f32[1,32], index: 6, kind: input, shape index: {}]
  %s7 = inlined_call_operand.vmem [shape: f32[2,8,32], index: 7, kind: output, shape index: {}]
  %s8 = sld [smem:[#allocation0]]
  $region69: #{decoder_layer.10} parent=0
    _
  %s10 = ssub.s32 1, %s8
  %s11 = scalar_select 0, %s10, %s8
  loop: start=0, step=1, limit=4
  $region2: #{decoder_layer.10} parent=0 // loop_pre_header
    _
  $region3: #{decoder_layer.10} parent=0 // loop_header
    %s13 = sphi 0, %s17
    %p14 = scmp.ge.s32.totalorder %s13, 4
    %s20 = sphi 0, %s39
    %s21 = sphi 0, %s35
    %s22 = sphi 0, %s31
    %s23 = sphi 0, %s20
    %s24 = sphi 0, %s21
    %s25 = sphi 0, %s22
    %s26 = sphi 0, %s23
    %s27 = sphi 0, %s24
    %s28 = sphi 0, %s25
    %s44 = sphi 0, %s46
    %s47 = sphi 0, %s44
    %s48 = sphi 0, %s47
    %s64 = sphi 0, %s48
    %s72 = sphi 0, %s74
    %s75 = sphi 0, %s72
    %s76 = sphi 0, %s75
    %s92 = sphi 0, %s76
    %s100 = sphi 0, %s102
    %s103 = sphi 0, %s100
    %s104 = sphi 0, %s103
    %s120 = sphi 0, %s104
    %s128 = sphi 0, %s130
    %s131 = sphi 0, %s128
    %s132 = sphi 0, %s131
    %s148 = sphi 0, %s132
    %s156 = sphi 0, %s158
    %s159 = sphi 0, %s156
    %s160 = sphi 0, %s159
    %s176 = sphi 0, %s160
    %s180 = sphi 0, %s180
    %s182 = sphi 0, %s180
    %s183 = sphi 0, %s182
    %s197 = sphi 0, %s183
    %s201 = sphi 0, %s201
    %s203 = sphi 0, %s201
    %s204 = sphi 0, %s203
    %s218 = sphi 0, %s204
    %s226 = sphi 0, %s228
    %s229 = sphi 0, %s226
    %s230 = sphi 0, %s229
    %s246 = sphi 0, %s230
  $region4: #{decoder_layer.10} parent=0 // loop_header_branch
    %16 = sbr.rel (%p14) target = $region8
  $region5: #{decoder_layer.10} parent=0 // loop_body
    %s18 = ssub.s32 %s13, 1
    %s19 = ssub.s32 %s13, 2
    %s29 = sadd.s32 1, %s22
    %p30 = scmp.ge.s32.totalorder %s29, 1
    %s31 = scalar_select %p30, 0, %s29
    %s32 = sadd.s32 1, %s21
    %s33 = scalar_select %p30, %s32, %s21
    %p34 = scmp.ge.s32.totalorder %s33, 1
    %s35 = scalar_select %p34, 0, %s33
    %s36 = sadd.s32 1, %s20
    %s37 = scalar_select %p34, %s36, %s20
    %p38 = scmp.ge.s32.totalorder %s37, 2
    %s39 = scalar_select %p38, 0, %s37
    %s40 = ssub.s32 %s20, %s39
    %s41 = ssub.s32 %s21, %s35
    %s42 = sor.u32 %s40, %s41
    %p43 = scmp.eq.s32.totalorder %s42, 0
    %s45 = sadd.s32 %s44, 1
    %s46 = scalar_select %p43, %s44, %s45
    %p49 = pneg %p43
    %p50 = scmp.eq.s32.totalorder %s13, 1
    %p51 = por %p49, %p50
    %p52 = scmp.ne.s32.totalorder %s44, %s47
    %p53 = scmp.eq.s32.totalorder %s13, 0
    %p54 = por %p52, %p53
    %p55 = scmp.ne.s32.totalorder %s44, %s47
    %p56 = scmp.eq.s32.totalorder %s18, 1
    %p57 = por %p55, %p56
    %p58 = scmp.ne.s32.totalorder %s47, %s48
    %p59 = scmp.eq.s32.totalorder %s18, 0
    %p60 = por %p58, %p59
    %p61 = scmp.ne.s32.totalorder %s47, %s48
    %p62 = scmp.eq.s32.totalorder %s19, 1
    %p63 = por %p61, %p62
    %p65 = scmp.ne.s32.totalorder %s48, %s64
    %p66 = scmp.eq.s32.totalorder %s19, 0
    %p67 = por %p65, %p66
    %s68 = ssub.s32 %s20, %s39
    %s69 = ssub.s32 %s22, %s31
    %s70 = sor.u32 %s68, %s69
    %p71 = scmp.eq.s32.totalorder %s70, 0
    %s73 = sadd.s32 %s72, 1
    %s74 = scalar_select %p71, %s72, %s73
    %p77 = pneg %p71
    %p78 = scmp.eq.s32.totalorder %s13, 1
    %p79 = por %p77, %p78
    %p80 = scmp.ne.s32.totalorder %s72, %s75
    %p81 = scmp.eq.s32.totalorder %s13, 0
    %p82 = por %p80, %p81
    %p83 = scmp.ne.s32.totalorder %s72, %s75
    %p84 = scmp.eq.s32.totalorder %s18, 1
    %p85 = por %p83, %p84
    %p86 = scmp.ne.s32.totalorder %s75, %s76
    %p87 = scmp.eq.s32.totalorder %s18, 0
    %p88 = por %p86, %p87
    %p89 = scmp.ne.s32.totalorder %s75, %s76
    %p90 = scmp.eq.s32.totalorder %s19, 1
    %p91 = por %p89, %p90
    %p93 = scmp.ne.s32.totalorder %s76, %s92
    %p94 = scmp.eq.s32.totalorder %s19, 0
    %p95 = por %p93, %p94
    %s96 = ssub.s32 %s20, %s39
    %s97 = ssub.s32 %s22, %s31
    %s98 = sor.u32 %s96, %s97
    %p99 = scmp.eq.s32.totalorder %s98, 0
    %s101 = sadd.s32 %s100, 1
    %s102 = scalar_select %p99, %s100, %s101
    %p105 = pneg %p99
    %p106 = scmp.eq.s32.totalorder %s13, 1
    %p107 = por %p105, %p106
    %p108 = scmp.ne.s32.totalorder %s100, %s103
    %p109 = scmp.eq.s32.totalorder %s13, 0
    %p110 = por %p108, %p109
    %p111 = scmp.ne.s32.totalorder %s100, %s103
    %p112 = scmp.eq.s32.totalorder %s18, 1
    %p113 = por %p111, %p112
    %p114 = scmp.ne.s32.totalorder %s103, %s104
    %p115 = scmp.eq.s32.totalorder %s18, 0
    %p116 = por %p114, %p115
    %p117 = scmp.ne.s32.totalorder %s103, %s104
    %p118 = scmp.eq.s32.totalorder %s19, 1
    %p119 = por %p117, %p118
    %p121 = scmp.ne.s32.totalorder %s104, %s120
    %p122 = scmp.eq.s32.totalorder %s19, 0
    %p123 = por %p121, %p122
    %s124 = ssub.s32 %s20, %s39
    %s125 = ssub.s32 %s22, %s31
    %s126 = sor.u32 %s124, %s125
    %p127 = scmp.eq.s32.totalorder %s126, 0
    %s129 = sadd.s32 %s128, 1
    %s130 = scalar_select %p127, %s128, %s129
    %p133 = pneg %p127
    %p134 = scmp.eq.s32.totalorder %s13, 1
    %p135 = por %p133, %p134
    %p136 = scmp.ne.s32.totalorder %s128, %s131
    %p137 = scmp.eq.s32.totalorder %s13, 0
    %p138 = por %p136, %p137
    %p139 = scmp.ne.s32.totalorder %s128, %s131
    %p140 = scmp.eq.s32.totalorder %s18, 1
    %p141 = por %p139, %p140
    %p142 = scmp.ne.s32.totalorder %s131, %s132
    %p143 = scmp.eq.s32.totalorder %s18, 0
    %p144 = por %p142, %p143
    %p145 = scmp.ne.s32.totalorder %s131, %s132
    %p146 = scmp.eq.s32.totalorder %s19, 1
    %p147 = por %p145, %p146
    %p149 = scmp.ne.s32.totalorder %s132, %s148
    %p150 = scmp.eq.s32.totalorder %s19, 0
    %p151 = por %p149, %p150
    %s152 = ssub.s32 %s20, %s39
    %s153 = ssub.s32 %s21, %s35
    %s154 = sor.u32 %s152, %s153
    %p155 = scmp.eq.s32.totalorder %s154, 0
    %s157 = sadd.s32 %s156, 1
    %s158 = scalar_select %p155, %s156, %s157
    %p161 = pneg %p155
    %p162 = scmp.eq.s32.totalorder %s13, 1
    %p163 = por %p161, %p162
    %p164 = scmp.ne.s32.totalorder %s156, %s159
    %p165 = scmp.eq.s32.totalorder %s13, 0
    %p166 = por %p164, %p165
    %p167 = scmp.ne.s32.totalorder %s156, %s159
    %p168 = scmp.eq.s32.totalorder %s18, 1
    %p169 = por %p167, %p168
    %p170 = scmp.ne.s32.totalorder %s159, %s160
    %p171 = scmp.eq.s32.totalorder %s18, 0
    %p172 = por %p170, %p171
    %p173 = scmp.ne.s32.totalorder %s159, %s160
    %p174 = scmp.eq.s32.totalorder %s19, 1
    %p175 = por %p173, %p174
    %p177 = scmp.ne.s32.totalorder %s160, %s176
    %p178 = scmp.eq.s32.totalorder %s19, 0
    %p179 = por %p177, %p178
    %s181 = sadd.s32 %s180, 1
    %p184 = scmp.eq.s32.totalorder %s13, 1
    %p185 = scmp.ne.s32.totalorder %s180, %s182
    %p186 = scmp.eq.s32.totalorder %s13, 0
    %p187 = por %p185, %p186
    %p188 = scmp.ne.s32.totalorder %s180, %s182
    %p189 = scmp.eq.s32.totalorder %s18, 1
    %p190 = por %p188, %p189
    %p191 = scmp.ne.s32.totalorder %s182, %s183
    %p192 = scmp.eq.s32.totalorder %s18, 0
    %p193 = por %p191, %p192
    %p194 = scmp.ne.s32.totalorder %s182, %s183
    %p195 = scmp.eq.s32.totalorder %s19, 1
    %p196 = por %p194, %p195
    %p198 = scmp.ne.s32.totalorder %s183, %s197
    %p199 = scmp.eq.s32.totalorder %s19, 0
    %p200 = por %p198, %p199
    %s202 = sadd.s32 %s201, 1
    %p205 = scmp.eq.s32.totalorder %s13, 1
    %p206 = scmp.ne.s32.totalorder %s201, %s203
    %p207 = scmp.eq.s32.totalorder %s13, 0
    %p208 = por %p206, %p207
    %p209 = scmp.ne.s32.totalorder %s201, %s203
    %p210 = scmp.eq.s32.totalorder %s18, 1
    %p211 = por %p209, %p210
    %p212 = scmp.ne.s32.totalorder %s203, %s204
    %p213 = scmp.eq.s32.totalorder %s18, 0
    %p214 = por %p212, %p213
    %p215 = scmp.ne.s32.totalorder %s203, %s204
    %p216 = scmp.eq.s32.totalorder %s19, 1
    %p217 = por %p215, %p216
    %p219 = scmp.ne.s32.totalorder %s204, %s218
    %p220 = scmp.eq.s32.totalorder %s19, 0
    %p221 = por %p219, %p220
    %s222 = ssub.s32 %s20, %s39
    %s223 = ssub.s32 %s21, %s35
    %s224 = sor.u32 %s222, %s223
    %p225 = scmp.eq.s32.totalorder %s224, 0
    %s227 = sadd.s32 %s226, 1
    %s228 = scalar_select %p225, %s226, %s227
    %p231 = pneg %p225
    %p232 = scmp.eq.s32.totalorder %s13, 1
    %p233 = por %p231, %p232
    %p234 = scmp.ne.s32.totalorder %s226, %s229
    %p235 = scmp.eq.s32.totalorder %s13, 0
    %p236 = por %p234, %p235
    %p237 = scmp.ne.s32.totalorder %s226, %s229
    %p238 = scmp.eq.s32.totalorder %s18, 1
    %p239 = por %p237, %p238
    %p240 = scmp.ne.s32.totalorder %s229, %s230
    %p241 = scmp.eq.s32.totalorder %s18, 0
    %p242 = por %p240, %p241
    %p243 = scmp.ne.s32.totalorder %s229, %s230
    %p244 = scmp.eq.s32.totalorder %s19, 1
    %p245 = por %p243, %p244
    %p247 = scmp.ne.s32.totalorder %s230, %s246
    %p248 = scmp.eq.s32.totalorder %s19, 0
    %p249 = por %p247, %p248
    %p250 = scmp.le.s32.totalorder 1, %s13
    %p251 = scmp.lt.s32.totalorder %s13, 3
    %p252 = pnand %p250, %p251
    %p253 = pneg %p252
    // Predicated region
    $region9: #{decoder_layer.10} parent=5 // pred_check
      _
    $region10: #{decoder_layer.10} parent=5 // pred_check_branch
      %255 = sbr.rel (%p252) target = $region12
    $region11: #{decoder_layer.10} parent=5 // pred_region
      %s256 = ssub.s32 %s13, 1
      // Predicated region
      $region13: #{decoder_layer.10} parent=11 // pred_check
        %p257 = pneg %p193
      $region14: #{decoder_layer.10} parent=11 // pred_check_branch
        %259 = sbr.rel (%p257) target = $region16
      $region15: #{decoder_layer.10} parent=11 // pred_region
        _
      $region16: #{decoder_layer.10} parent=11 // pred_fallthru
        _
      // Predicated region
      $region17: #{decoder_layer.10} parent=11 // pred_check
        %p260 = pneg %p214
      $region18: #{decoder_layer.10} parent=11 // pred_check_branch
        %262 = sbr.rel (%p260) target = $region20
      $region19: #{decoder_layer.10} parent=11 // pred_region
        _
      $region20: #{decoder_layer.10} parent=11 // pred_fallthru
        _
    $region12: #{decoder_layer.10} parent=5 // pred_fallthru
      _
    %p263 = scmp.lt.s32.totalorder %s13, 2
    // Predicated region
    $region21: #{decoder_layer.10} parent=5 // pred_check
      %p264 = pneg %p263
    $region22: #{decoder_layer.10} parent=5 // pred_check_branch
      %266 = sbr.rel (%p264) target = $region24
    $region23: #{decoder_layer.10} parent=5 // pred_region
      // Predicated region
      $region25: #{decoder_layer.10} parent=23 // pred_check
        %p267 = pneg %p54
      $region26: #{decoder_layer.10} parent=23 // pred_check_branch
        %269 = sbr.rel (%p267) target = $region28
      $region27: #{decoder_layer.10} parent=23 // pred_region
        %p270 = scmp.lt.s32.totalorder %s20, 1
        %s271 = scalar_select %p270, %s20, 1
        %p272 = scmp.lt.s32.totalorder %s21, 0
        %s273 = scalar_select %p272, %s21, 0
        %s274 = sadd.s32 %s273, %s271
        %s275 = smul.addr %s274, 8
        %s276 = scalar_lea.vmem %s0, %s275
      $region28: #{decoder_layer.10} parent=23 // pred_fallthru
        _
      // Predicated region
      $region29: #{decoder_layer.10} parent=23 // pred_check
        %p277 = pneg %p82
      $region30: #{decoder_layer.10} parent=23 // pred_check_branch
        %279 = sbr.rel (%p277) target = $region32
      $region31: #{decoder_layer.10} parent=23 // pred_region
        %p280 = scmp.lt.s32.totalorder %s20, 1
        %s281 = scalar_select %p280, %s20, 1
        %p282 = scmp.lt.s32.totalorder %s22, 0
        %s283 = scalar_select %p282, %s22, 0
        %s284 = sadd.s32 %s283, %s281
        %s285 = smul.addr %s284, 8
        %s286 = scalar_lea.vmem %s1, %s285
      $region32: #{decoder_layer.10} parent=23 // pred_fallthru
        _
      // Predicated region
      $region33: #{decoder_layer.10} parent=23 // pred_check
        %p287 = pneg %p110
      $region34: #{decoder_layer.10} parent=23 // pred_check_branch
        %289 = sbr.rel (%p287) target = $region36
      $region35: #{decoder_layer.10} parent=23 // pred_region
        %p290 = scmp.lt.s32.totalorder %s20, 1
        %s291 = scalar_select %p290, %s20, 1
        %p292 = scmp.lt.s32.totalorder %s22, 0
        %s293 = scalar_select %p292, %s22, 0
        %s294 = sadd.s32 %s293, %s291
        %s295 = smul.addr %s294, 8
        %s296 = scalar_lea.vmem %s2, %s295
      $region36: #{decoder_layer.10} parent=23 // pred_fallthru
        _
      // Predicated region
      $region37: #{decoder_layer.10} parent=23 // pred_check
        %p297 = pneg %p138
      $region38: #{decoder_layer.10} parent=23 // pred_check_branch
        %299 = sbr.rel (%p297) target = $region40
      $region39: #{decoder_layer.10} parent=23 // pred_region
        %p300 = scmp.lt.s32.totalorder %s20, 1
        %s301 = scalar_select %p300, %s20, 1
        %p302 = scmp.lt.s32.totalorder %s22, 0
        %s303 = scalar_select %p302, %s22, 0
        %s304 = sadd.s32 %s303, %s301
        %s305 = scalar_lea.vmem %s3, %s304
      $region40: #{decoder_layer.10} parent=23 // pred_fallthru
        _
      // Predicated region
      $region41: #{decoder_layer.10} parent=23 // pred_check
        %p306 = pneg %p166
      $region42: #{decoder_layer.10} parent=23 // pred_check_branch
        %308 = sbr.rel (%p306) target = $region44
      $region43: #{decoder_layer.10} parent=23 // pred_region
        %p309 = scmp.lt.s32.totalorder %s20, 1
        %s310 = scalar_select %p309, %s20, 1
        %p311 = scmp.lt.s32.totalorder %s21, 0
        %s312 = scalar_select %p311, %s21, 0
        %s313 = sadd.s32 %s312, %s310
        %s314 = smul.addr %s313, 8
        %s315 = scalar_lea.vmem %s4, %s314
      $region44: #{decoder_layer.10} parent=23 // pred_fallthru
        _
    $region24: #{decoder_layer.10} parent=5 // pred_fallthru
      _
    %p316 = scmp.le.s32.totalorder 1, %s13
    %p317 = scmp.lt.s32.totalorder %s13, 3
    %p318 = pnand %p316, %p317
    %p319 = pneg %p318
    // Predicated region
    $region45: #{decoder_layer.10} parent=5 // pred_check
      _
    $region46: #{decoder_layer.10} parent=5 // pred_check_branch
      %321 = sbr.rel (%p318) target = $region48
    $region47: #{decoder_layer.10} parent=5 // pred_region
      %s322 = ssub.s32 %s13, 1
      %p323 = scmp.lt.s32.totalorder %s23, 1
      %s324 = scalar_select %p323, %s23, 1
      %p325 = scmp.lt.s32.totalorder %s24, 0
      %s326 = scalar_select %p325, %s24, 0
      %s327 = sadd.s32 %s326, %s324
      %s328 = smul.addr %s327, 8
      %s329 = scalar_lea.vmem %s0, %s328
      %p330 = pneg %p60
      %p331 = pneg %p57
      %p332 = scmp.lt.s32.totalorder %s23, 1
      %s333 = scalar_select %p332, %s23, 1
      %p334 = scmp.lt.s32.totalorder %s25, 0
      %s335 = scalar_select %p334, %s25, 0
      %s336 = sadd.s32 %s335, %s333
      %s337 = smul.addr %s336, 8
      %s338 = scalar_lea.vmem %s1, %s337
      %p339 = pneg %p88
      %p340 = pneg %p85
      %p341 = scmp.lt.s32.totalorder %s23, 1
      %s342 = scalar_select %p341, %s23, 1
      %p343 = scmp.lt.s32.totalorder %s25, 0
      %s344 = scalar_select %p343, %s25, 0
      %s345 = sadd.s32 %s344, %s342
      %s346 = smul.addr %s345, 8
      %s347 = scalar_lea.vmem %s2, %s346
      %p348 = pneg %p116
      %p349 = pneg %p113
      %p350 = scmp.lt.s32.totalorder %s23, 1
      %s351 = scalar_select %p350, %s23, 1
      %p352 = scmp.lt.s32.totalorder %s25, 0
      %s353 = scalar_select %p352, %s25, 0
      %s354 = sadd.s32 %s353, %s351
      %s355 = scalar_lea.vmem %s3, %s354
      %p356 = pneg %p144
      %p357 = pneg %p141
      %p358 = scmp.lt.s32.totalorder %s23, 1
      %s359 = scalar_select %p358, %s23, 1
      %p360 = scmp.lt.s32.totalorder %s24, 0
      %s361 = scalar_select %p360, %s24, 0
      %s362 = sadd.s32 %s361, %s359
      %s363 = smul.addr %s362, 8
      %s364 = scalar_lea.vmem %s4, %s363
      %p365 = pneg %p172
      %p366 = pneg %p169
      %p367 = pneg %p193
      %p368 = pneg %p190
      %p369 = pneg %p214
      %p370 = pneg %p211
      %p371 = pneg %p242
      %p372 = pneg %p239
      %p373 = scmp.lt.s32.totalorder %s23, 1
      %s374 = scalar_select %p373, %s23, 1
      %p375 = scmp.lt.s32.totalorder %s24, 0
      %s376 = scalar_select %p375, %s24, 0
      %s377 = sadd.s32 %s376, %s374
      %s378 = smul.addr %s377, 8
      %s379 = scalar_lea.vmem %s7, %s378
      %p380 = scmp.lt.s32.totalorder %s23, 1
      %s381 = scalar_select %p380, %s23, 1
      %p382 = scmp.lt.s32.totalorder %s24, 0
      %s383 = scalar_select %p382, %s24, 0
      %s384 = sadd.s32 %s383, %s381
      %s385 = smul.addr %s384, 8
      %s386 = scalar_lea.vmem %s0, %s385
      %p387 = scmp.lt.s32.totalorder %s23, 1
      %s388 = scalar_select %p387, %s23, 1
      %p389 = scmp.lt.s32.totalorder %s25, 0
      %s390 = scalar_select %p389, %s25, 0
      %s391 = sadd.s32 %s390, %s388
      %s392 = smul.addr %s391, 8
      %s393 = scalar_lea.vmem %s1, %s392
      %p394 = scmp.lt.s32.totalorder %s23, 1
      %s395 = scalar_select %p394, %s23, 1
      %p396 = scmp.lt.s32.totalorder %s25, 0
      %s397 = scalar_select %p396, %s25, 0
      %s398 = sadd.s32 %s397, %s395
      %s399 = smul.addr %s398, 8
      %s400 = scalar_lea.vmem %s2, %s399
      %p401 = scmp.lt.s32.totalorder %s23, 1
      %s402 = scalar_select %p401, %s23, 1
      %p403 = scmp.lt.s32.totalorder %s25, 0
      %s404 = scalar_select %p403, %s25, 0
      %s405 = sadd.s32 %s404, %s402
      %s406 = scalar_lea.vmem %s3, %s405
      %p407 = scmp.lt.s32.totalorder %s23, 1
      %s408 = scalar_select %p407, %s23, 1
      %p409 = scmp.lt.s32.totalorder %s24, 0
      %s410 = scalar_select %p409, %s24, 0
      %s411 = sadd.s32 %s410, %s408
      %s412 = smul.addr %s411, 8
      %s413 = scalar_lea.vmem %s4, %s412
      %p414 = scmp.lt.s32.totalorder %s23, 1
      %s415 = scalar_select %p414, %s23, 1
      %p416 = scmp.lt.s32.totalorder %s24, 0
      %s417 = scalar_select %p416, %s24, 0
      %s418 = sadd.s32 %s417, %s415
      %s419 = smul.addr %s418, 8
      %s420 = scalar_lea.vmem %s7, %s419
      %p421 = scmp.eq.s32.totalorder %s25, 0
      // Predicated region
      $region49: #{decoder_layer.10} parent=47 // pred_check
        %p422 = pneg %p421
      $region50: #{decoder_layer.10} parent=47 // pred_check_branch
        %424 = sbr.rel (%p422) target = $region52
      $region51: #{decoder_layer.10} parent=47 // pred_region
        %vm425 = vcmask 7168
        %426 = vst.msk [vmem:[#allocation2] sm:$0xff] %vm425, -inf
        %427 = vst.msk [vmem:[#allocation2 + $0x8] sm:$0xff] %vm425, -inf
        %428 = vst.msk [vmem:[#allocation2 + $0x10] sm:$0xff] %vm425, -inf
        %429 = vst.msk [vmem:[#allocation2 + $0x18] sm:$0xff] %vm425, -inf
        %430 = vst.msk [vmem:[#allocation3] sm:$0xff] %vm425, 0.0
        %431 = vst.msk [vmem:[#allocation3 + $0x8] sm:$0xff] %vm425, 0.0
        %432 = vst.msk [vmem:[#allocation3 + $0x10] sm:$0xff] %vm425, 0.0
        %433 = vst.msk [vmem:[#allocation3 + $0x18] sm:$0xff] %vm425, 0.0
        %vm434 = vcmask 64512
        %435 = vst.msk [vmem:[#allocation4] sm:$0xff] %vm434, 0.0
        %436 = vst.msk [vmem:[#allocation4 + $0x8] sm:$0xff] %vm434, 0.0
        %437 = vst.msk [vmem:[#allocation4 + $0x10] sm:$0xff] %vm434, 0.0
        %438 = vst.msk [vmem:[#allocation4 + $0x18] sm:$0xff] %vm434, 0.0
      $region52: #{decoder_layer.10} parent=47 // pred_fallthru
        _
      %v439 = vld [vmem:[%s386] sm:$0xff]
      %v440 = vld [vmem:[%s393] sm:$0xff]
      %v441 = vld [vmem:[%s400] sm:$0xff]
      %v442 = vld [vmem:[%s406] sm:$0x1]
      %vm443 = vcmp.eq.f32.partialorder %v442, 0.0
      %v444 = vsel %vm443, -1e+09, 0.0
      %vm445 = vcmask 64512
      %v447 = vsel %vm445, %v439, 0
      %v450 = vsel %vm445, %v440, 0
      %452 = vmatprep.subr.mxu0 0.0
      %453 = vmatpush1.xpose.msra.mxu0 0.0
      %454 = vmatprep.subr.mxu0 0.0
      %455 = vmatpush1.xpose.msra.mxu0 0.0
      %456 = vmatprep.subr.mxu0 0.0
      %457 = vmatpush1.xpose.msra.mxu0 0.0
      %458 = vmatprep.subr.mxu0 0.0
      %459 = vmatpush1.xpose.msra.mxu0 0.0
      %460 = vmatprep.subr.mxu0 0.0
      %461 = vmatpush1.xpose.msra.mxu0 0.0
      %462 = vmatprep.subr.mxu0 0.0
      %463 = vmatpush1.xpose.msra.mxu0 0.0
      %464 = vmatprep.subr.mxu0 0.0
      %465 = vmatpush1.xpose.msra.mxu0 0.0
      %466 = vmatprep.subr.mxu0 0.0
      %467 = vmatpush1.xpose.msra.mxu0 0.0
      %468 = vmatprep.subr.mxu0 0.0
      %469 = vmatpush1.xpose.msra.mxu0 0.0
      %470 = vmatprep.subr.mxu0 0.0
      %471 = vmatpush1.xpose.msra.mxu0 0.0
      %472 = vmatprep.subr.mxu0 0.0
      %473 = vmatpush1.xpose.msra.mxu0 0.0
      %474 = vmatprep.subr.mxu0 0.0
      %475 = vmatpush1.xpose.msra.mxu0 0.0
      %476 = vmatprep.subr.mxu0 0.0
      %477 = vmatpush1.xpose.msra.mxu0 0.0
      %478 = vmatprep.subr.mxu0 0.0
      %479 = vmatpush1.xpose.msra.mxu0 0.0
      %480 = vmatprep.subr.mxu0 0.0
      %481 = vmatpush1.xpose.msra.mxu0 0.0
      %482 = vmatprep.subr.mxu0 0.0
      %483 = vmatpush1.xpose.msra.mxu0 %v450
      %484 = vmatprep.subr.mxu0 0.0
      %485 = vmatpush2.xpose.msra.mxu0 0.0
      %486 = vmatprep.subr.mxu0 0.0
      %487 = vmatpush2.xpose.msra.mxu0 0.0
      %488 = vmatprep.subr.mxu0 0.0
      %489 = vmatpush2.xpose.msra.mxu0 0.0
      %490 = vmatprep.subr.mxu0 0.0
      %491 = vmatpush2.xpose.msra.mxu0 0.0
      %492 = vmatprep.subr.mxu0 0.0
      %493 = vmatpush2.xpose.msra.mxu0 0.0
      %494 = vmatprep.subr.mxu0 0.0
      %495 = vmatpush2.xpose.msra.mxu0 0.0
      %496 = vmatprep.subr.mxu0 0.0
      %497 = vmatpush2.xpose.msra.mxu0 0.0
      %498 = vmatprep.subr.mxu0 0.0
      %499 = vmatpush2.xpose.msra.mxu0 0.0
      %500 = vmatprep.subr.mxu0 0.0
      %501 = vmatpush2.xpose.msra.mxu0 0.0
      %502 = vmatprep.subr.mxu0 0.0
      %503 = vmatpush2.xpose.msra.mxu0 0.0
      %504 = vmatprep.subr.mxu0 0.0
      %505 = vmatpush2.xpose.msra.mxu0 0.0
      %506 = vmatprep.subr.mxu0 0.0
      %507 = vmatpush2.xpose.msra.mxu0 0.0
      %508 = vmatprep.subr.mxu0 0.0
      %509 = vmatpush2.xpose.msra.mxu0 0.0
      %510 = vmatprep.subr.mxu0 0.0
      %511 = vmatpush2.xpose.msra.mxu0 0.0
      %512 = vmatprep.subr.mxu0 0.0
      %513 = vmatpush2.xpose.msra.mxu0 0.0
      %514 = vmatprep.subr.mxu0 0.0
      %515 = vmatpush2.xpose.msra.mxu0 0.0
      %516 = vmatprep.mubr.f32.mxu0 0.0
      %517 = vmatmul.mubr.f32.gmra.mxu0 %v447
      %v518 = vpop.f32.mrf.mxu0
      %v519 = vadd.f32 0.0, %v518
      %v520 = vpop.f32.mrf.mxu0
      %521 = vdwg.mxu0
      %v522 = vmul.f32 %v519, 0.35355338
      %v524 = vlaneseq
      %v525 = vshrl.u32 %v524, 7
      %v526 = vsub.s32 0, %v525
      %v527 = vrot.slane %v444, %v526
      %v529 = vadd.f32 %v522, %v527
      %v530 = vld [vmem:[#allocation2] sm:$0xff]
      %v531 = vsel %vm445, %v529, -inf
      %532 = vmax.xlane.f32.xlu0 %v531
      %v533 = vpop.xlane.xlu0 %532
      %v534 = vmax.f32 %v530, %v533
      %v535 = vsub.f32 %v530, %v534
      %v536 = vmul.f32 %v535, 1.442695
      %v537 = vpow.pop %v536
      %539 = vset.pattern.permute.xlu0 0
      %540 = vperm.xlu0 %539, %v534
      %v541 = vpop.permute.xlu0 %540
      %v543 = vsub.f32 %v529, %v541
      %v544 = vmul.f32 %v543, 1.442695
      %v545 = vpow.pop %v544
      %v546 = vld [vmem:[#allocation3] sm:$0xff]
      %v547 = vmul.f32 %v537, %v546
      %v548 = vsel %vm445, %v545, 0.0
      %549 = vadd.xlane.f32.xlu0 %v548
      %v550 = vpop.xlane.xlu0 %549
      %v551 = vadd.f32 %v547, %v550
      %vm552 = vcmask 7168
      %553 = vst.msk [vmem:[#allocation3] sm:$0xff] %vm552, %v551
      %v554 = vld [vmem:[#allocation4] sm:$0xff]
      %556 = vset.pattern.permute.xlu0 0
      %557 = vperm.xlu0 %556, %v537
      %v558 = vpop.permute.xlu0 %557
      %v560 = vmul.f32 %v558, %v554
      %v562 = vsel %vm445, %v545, 0
      %564 = vmatprep.subr.mxu0 0.0
      %565 = vmatpush1.msra.mxu0 0.0
      %566 = vmatprep.subr.mxu0 0.0
      %567 = vmatpush1.msra.mxu0 0.0
      %568 = vmatprep.subr.mxu0 0.0
      %569 = vmatpush1.msra.mxu0 0.0
      %570 = vmatprep.subr.mxu0 0.0
      %571 = vmatpush1.msra.mxu0 0.0
      %572 = vmatprep.subr.mxu0 0.0
      %573 = vmatpush1.msra.mxu0 0.0
      %574 = vmatprep.subr.mxu0 0.0
      %575 = vmatpush1.msra.mxu0 0.0
      %576 = vmatprep.subr.mxu0 0.0
      %577 = vmatpush1.msra.mxu0 0.0
      %578 = vmatprep.subr.mxu0 0.0
      %579 = vmatpush1.msra.mxu0 0.0
      %580 = vmatprep.subr.mxu0 0.0
      %581 = vmatpush1.msra.mxu0 0.0
      %582 = vmatprep.subr.mxu0 0.0
      %583 = vmatpush1.msra.mxu0 0.0
      %584 = vmatprep.subr.mxu0 0.0
      %585 = vmatpush1.msra.mxu0 0.0
      %586 = vmatprep.subr.mxu0 0.0
      %587 = vmatpush1.msra.mxu0 0.0
      %588 = vmatprep.subr.mxu0 0.0
      %589 = vmatpush1.msra.mxu0 0.0
      %590 = vmatprep.subr.mxu0 0.0
      %591 = vmatpush1.msra.mxu0 0.0
      %592 = vmatprep.subr.mxu0 0.0
      %593 = vmatpush1.msra.mxu0 0.0
      %594 = vmatprep.subr.mxu0 0.0
      %595 = vmatpush1.msra.mxu0 %v441
      %596 = vmatprep.subr.mxu0 0.0
      %597 = vmatpush2.msra.mxu0 0.0
      %598 = vmatprep.subr.mxu0 0.0
      %599 = vmatpush2.msra.mxu0 0.0
      %600 = vmatprep.subr.mxu0 0.0
      %601 = vmatpush2.msra.mxu0 0.0
      %602 = vmatprep.subr.mxu0 0.0
      %603 = vmatpush2.msra.mxu0 0.0
      %604 = vmatprep.subr.mxu0 0.0
      %605 = vmatpush2.msra.mxu0 0.0
      %606 = vmatprep.subr.mxu0 0.0
      %607 = vmatpush2.msra.mxu0 0.0
      %608 = vmatprep.subr.mxu0 0.0
      %609 = vmatpush2.msra.mxu0 0.0
      %610 = vmatprep.subr.mxu0 0.0
      %611 = vmatpush2.msra.mxu0 0.0
      %612 = vmatprep.subr.mxu0 0.0
      %613 = vmatpush2.msra.mxu0 0.0
      %614 = vmatprep.subr.mxu0 0.0
      %615 = vmatpush2.msra.mxu0 0.0
      %616 = vmatprep.subr.mxu0 0.0
      %617 = vmatpush2.msra.mxu0 0.0
      %618 = vmatprep.subr.mxu0 0.0
      %619 = vmatpush2.msra.mxu0 0.0
      %620 = vmatprep.subr.mxu0 0.0
      %621 = vmatpush2.msra.mxu0 0.0
      %622 = vmatprep.subr.mxu0 0.0
      %623 = vmatpush2.msra.mxu0 0.0
      %624 = vmatprep.subr.mxu0 0.0
      %625 = vmatpush2.msra.mxu0 0.0
      %626 = vmatprep.subr.mxu0 0.0
      %627 = vmatpush2.msra.mxu0 0.0
      %628 = vmatprep.mubr.f32.mxu0 0.0
      %629 = vmatmul.mubr.f32.gmra.mxu0 %v562
      %v630 = vpop.f32.mrf.mxu0
      %v631 = vadd.f32 0.0, %v630
      %v632 = vpop.f32.mrf.mxu0
      %633 = vdwg.mxu0
      %v634 = vadd.f32 %v560, %v631
      %635 = vst.msk [vmem:[#allocation4] sm:$0xff] %vm445, %v634
      %636 = vst.msk [vmem:[#allocation2] sm:$0xff] %vm552, %v534
      %637 = vrot.lane.b32.xlu0 %v439, 120
      %v638 = vpop.permute.xlu0 %637
      %639 = vrot.lane.b32.xlu0 %v440, 120
      %v640 = vpop.permute.xlu0 %639
      %v641 = vsel %vm445, %v638, 0
      %v643 = vsel %vm445, %v640, 0
      %645 = vmatprep.subr.mxu0 0.0
      %646 = vmatpush1.xpose.msra.mxu0 0.0
      %647 = vmatprep.subr.mxu0 0.0
      %648 = vmatpush1.xpose.msra.mxu0 0.0
      %649 = vmatprep.subr.mxu0 0.0
      %650 = vmatpush1.xpose.msra.mxu0 0.0
      %651 = vmatprep.subr.mxu0 0.0
      %652 = vmatpush1.xpose.msra.mxu0 0.0
      %653 = vmatprep.subr.mxu0 0.0
      %654 = vmatpush1.xpose.msra.mxu0 0.0
      %655 = vmatprep.subr.mxu0 0.0
      %656 = vmatpush1.xpose.msra.mxu0 0.0
      %657 = vmatprep.subr.mxu0 0.0
      %658 = vmatpush1.xpose.msra.mxu0 0.0
      %659 = vmatprep.subr.mxu0 0.0
      %660 = vmatpush1.xpose.msra.mxu0 0.0
      %661 = vmatprep.subr.mxu0 0.0
      %662 = vmatpush1.xpose.msra.mxu0 0.0
      %663 = vmatprep.subr.mxu0 0.0
      %664 = vmatpush1.xpose.msra.mxu0 0.0
      %665 = vmatprep.subr.mxu0 0.0
      %666 = vmatpush1.xpose.msra.mxu0 0.0
      %667 = vmatprep.subr.mxu0 0.0
      %668 = vmatpush1.xpose.msra.mxu0 0.0
      %669 = vmatprep.subr.mxu0 0.0
      %670 = vmatpush1.xpose.msra.mxu0 0.0
      %671 = vmatprep.subr.mxu0 0.0
      %672 = vmatpush1.xpose.msra.mxu0 0.0
      %673 = vmatprep.subr.mxu0 0.0
      %674 = vmatpush1.xpose.msra.mxu0 0.0
      %675 = vmatprep.subr.mxu0 0.0
      %676 = vmatpush1.xpose.msra.mxu0 %v643
      %677 = vmatprep.subr.mxu0 0.0
      %678 = vmatpush2.xpose.msra.mxu0 0.0
      %679 = vmatprep.subr.mxu0 0.0
      %680 = vmatpush2.xpose.msra.mxu0 0.0
      %681 = vmatprep.subr.mxu0 0.0
      %682 = vmatpush2.xpose.msra.mxu0 0.0
      %683 = vmatprep.subr.mxu0 0.0
      %684 = vmatpush2.xpose.msra.mxu0 0.0
      %685 = vmatprep.subr.mxu0 0.0
      %686 = vmatpush2.xpose.msra.mxu0 0.0
      %687 = vmatprep.subr.mxu0 0.0
      %688 = vmatpush2.xpose.msra.mxu0 0.0
      %689 = vmatprep.subr.mxu0 0.0
      %690 = vmatpush2.xpose.msra.mxu0 0.0
      %691 = vmatprep.subr.mxu0 0.0
      %692 = vmatpush2.xpose.msra.mxu0 0.0
      %693 = vmatprep.subr.mxu0 0.0
      %694 = vmatpush2.xpose.msra.mxu0 0.0
      %695 = vmatprep.subr.mxu0 0.0
      %696 = vmatpush2.xpose.msra.mxu0 0.0
      %697 = vmatprep.subr.mxu0 0.0
      %698 = vmatpush2.xpose.msra.mxu0 0.0
      %699 = vmatprep.subr.mxu0 0.0
      %700 = vmatpush2.xpose.msra.mxu0 0.0
      %701 = vmatprep.subr.mxu0 0.0
      %702 = vmatpush2.xpose.msra.mxu0 0.0
      %703 = vmatprep.subr.mxu0 0.0
      %704 = vmatpush2.xpose.msra.mxu0 0.0
      %705 = vmatprep.subr.mxu0 0.0
      %706 = vmatpush2.xpose.msra.mxu0 0.0
      %707 = vmatprep.subr.mxu0 0.0
      %708 = vmatpush2.xpose.msra.mxu0 0.0
      %709 = vmatprep.mubr.f32.mxu0 0.0
      %710 = vmatmul.mubr.f32.gmra.mxu0 %v641
      %v711 = vpop.f32.mrf.mxu0
      %v712 = vadd.f32 0.0, %v711
      %v713 = vpop.f32.mrf.mxu0
      %714 = vdwg.mxu0
      %v715 = vmul.f32 %v712, 0.35355338
      %v716 = vadd.f32 %v715, %v527
      %s717 = scalar_lea.vmem [#allocation2], 8
      %v718 = vld [vmem:[%s717] sm:$0xff]
      %v719 = vsel %vm445, %v716, -inf
      %720 = vmax.xlane.f32.xlu0 %v719
      %v721 = vpop.xlane.xlu0 %720
      %v722 = vmax.f32 %v718, %v721
      %v723 = vsub.f32 %v718, %v722
      %v724 = vmul.f32 %v723, 1.442695
      %v725 = vpow.pop %v724
      %727 = vset.pattern.permute.xlu0 0
      %728 = vperm.xlu0 %727, %v722
      %v729 = vpop.permute.xlu0 %728
      %v731 = vsub.f32 %v716, %v729
      %v732 = vmul.f32 %v731, 1.442695
      %v733 = vpow.pop %v732
      %s734 = scalar_lea.vmem [#allocation3], 8
      %v735 = vld [vmem:[%s734] sm:$0xff]
      %v736 = vmul.f32 %v725, %v735
      %v737 = vsel %vm445, %v733, 0.0
      %738 = vadd.xlane.f32.xlu0 %v737
      %v739 = vpop.xlane.xlu0 %738
      %v740 = vadd.f32 %v736, %v739
      %741 = vst.msk [vmem:[%s734] sm:$0xff] %vm552, %v740
      %s742 = scalar_lea.vmem [#allocation4], 8
      %v743 = vld [vmem:[%s742] sm:$0xff]
      %745 = vset.pattern.permute.xlu0 0
      %746 = vperm.xlu0 %745, %v725
      %v747 = vpop.permute.xlu0 %746
      %v749 = vmul.f32 %v747, %v743
      %751 = vrot.lane.b32.xlu0 %v441, 120
      %v752 = vpop.permute.xlu0 %751
      %v755 = vsel %vm445, %v733, 0
      %757 = vmatprep.subr.mxu0 0.0
      %758 = vmatpush1.msra.mxu0 0.0
      %759 = vmatprep.subr.mxu0 0.0
      %760 = vmatpush1.msra.mxu0 0.0
      %761 = vmatprep.subr.mxu0 0.0
      %762 = vmatpush1.msra.mxu0 0.0
      %763 = vmatprep.subr.mxu0 0.0
      %764 = vmatpush1.msra.mxu0 0.0
      %765 = vmatprep.subr.mxu0 0.0
      %766 = vmatpush1.msra.mxu0 0.0
      %767 = vmatprep.subr.mxu0 0.0
      %768 = vmatpush1.msra.mxu0 0.0
      %769 = vmatprep.subr.mxu0 0.0
      %770 = vmatpush1.msra.mxu0 0.0
      %771 = vmatprep.subr.mxu0 0.0
      %772 = vmatpush1.msra.mxu0 0.0
      %773 = vmatprep.subr.mxu0 0.0
      %774 = vmatpush1.msra.mxu0 0.0
      %775 = vmatprep.subr.mxu0 0.0
      %776 = vmatpush1.msra.mxu0 0.0
      %777 = vmatprep.subr.mxu0 0.0
      %778 = vmatpush1.msra.mxu0 0.0
      %779 = vmatprep.subr.mxu0 0.0
      %780 = vmatpush1.msra.mxu0 0.0
      %781 = vmatprep.subr.mxu0 0.0
      %782 = vmatpush1.msra.mxu0 0.0
      %783 = vmatprep.subr.mxu0 0.0
      %784 = vmatpush1.msra.mxu0 0.0
      %785 = vmatprep.subr.mxu0 0.0
      %786 = vmatpush1.msra.mxu0 0.0
      %787 = vmatprep.subr.mxu0 0.0
      %788 = vmatpush1.msra.mxu0 %v752
      %789 = vmatprep.subr.mxu0 0.0
      %790 = vmatpush2.msra.mxu0 0.0
      %791 = vmatprep.subr.mxu0 0.0
      %792 = vmatpush2.msra.mxu0 0.0
      %793 = vmatprep.subr.mxu0 0.0
      %794 = vmatpush2.msra.mxu0 0.0
      %795 = vmatprep.subr.mxu0 0.0
      %796 = vmatpush2.msra.mxu0 0.0
      %797 = vmatprep.subr.mxu0 0.0
      %798 = vmatpush2.msra.mxu0 0.0
      %799 = vmatprep.subr.mxu0 0.0
      %800 = vmatpush2.msra.mxu0 0.0
      %801 = vmatprep.subr.mxu0 0.0
      %802 = vmatpush2.msra.mxu0 0.0
      %803 = vmatprep.subr.mxu0 0.0
      %804 = vmatpush2.msra.mxu0 0.0
      %805 = vmatprep.subr.mxu0 0.0
      %806 = vmatpush2.msra.mxu0 0.0
      %807 = vmatprep.subr.mxu0 0.0
      %808 = vmatpush2.msra.mxu0 0.0
      %809 = vmatprep.subr.mxu0 0.0
      %810 = vmatpush2.msra.mxu0 0.0
      %811 = vmatprep.subr.mxu0 0.0
      %812 = vmatpush2.msra.mxu0 0.0
      %813 = vmatprep.subr.mxu0 0.0
      %814 = vmatpush2.msra.mxu0 0.0
      %815 = vmatprep.subr.mxu0 0.0
      %816 = vmatpush2.msra.mxu0 0.0
      %817 = vmatprep.subr.mxu0 0.0
      %818 = vmatpush2.msra.mxu0 0.0
      %819 = vmatprep.subr.mxu0 0.0
      %820 = vmatpush2.msra.mxu0 0.0
      %821 = vmatprep.mubr.f32.mxu0 0.0
      %822 = vmatmul.mubr.f32.gmra.mxu0 %v755
      %v823 = vpop.f32.mrf.mxu0
      %v824 = vadd.f32 0.0, %v823
      %v825 = vpop.f32.mrf.mxu0
      %826 = vdwg.mxu0
      %v827 = vadd.f32 %v749, %v824
      %828 = vst.msk [vmem:[%s742] sm:$0xff] %vm445, %v827
      %829 = vst.msk [vmem:[%s717] sm:$0xff] %vm552, %v722
      %830 = vrot.lane.b32.xlu0 %v439, 112
      %v831 = vpop.permute.xlu0 %830
      %832 = vrot.lane.b32.xlu0 %v440, 112
      %v833 = vpop.permute.xlu0 %832
      %v834 = vsel %vm445, %v831, 0
      %v836 = vsel %vm445, %v833, 0
      %838 = vmatprep.subr.mxu0 0.0
      %839 = vmatpush1.xpose.msra.mxu0 0.0
      %840 = vmatprep.subr.mxu0 0.0
      %841 = vmatpush1.xpose.msra.mxu0 0.0
      %842 = vmatprep.subr.mxu0 0.0
      %843 = vmatpush1.xpose.msra.mxu0 0.0
      %844 = vmatprep.subr.mxu0 0.0
      %845 = vmatpush1.xpose.msra.mxu0 0.0
      %846 = vmatprep.subr.mxu0 0.0
      %847 = vmatpush1.xpose.msra.mxu0 0.0
      %848 = vmatprep.subr.mxu0 0.0
      %849 = vmatpush1.xpose.msra.mxu0 0.0
      %850 = vmatprep.subr.mxu0 0.0
      %851 = vmatpush1.xpose.msra.mxu0 0.0
      %852 = vmatprep.subr.mxu0 0.0
      %853 = vmatpush1.xpose.msra.mxu0 0.0
      %854 = vmatprep.subr.mxu0 0.0
      %855 = vmatpush1.xpose.msra.mxu0 0.0
      %856 = vmatprep.subr.mxu0 0.0
      %857 = vmatpush1.xpose.msra.mxu0 0.0
      %858 = vmatprep.subr.mxu0 0.0
      %859 = vmatpush1.xpose.msra.mxu0 0.0
      %860 = vmatprep.subr.mxu0 0.0
      %861 = vmatpush1.xpose.msra.mxu0 0.0
      %862 = vmatprep.subr.mxu0 0.0
      %863 = vmatpush1.xpose.msra.mxu0 0.0
      %864 = vmatprep.subr.mxu0 0.0
      %865 = vmatpush1.xpose.msra.mxu0 0.0
      %866 = vmatprep.subr.mxu0 0.0
      %867 = vmatpush1.xpose.msra.mxu0 0.0
      %868 = vmatprep.subr.mxu0 0.0
      %869 = vmatpush1.xpose.msra.mxu0 %v836
      %870 = vmatprep.subr.mxu0 0.0
      %871 = vmatpush2.xpose.msra.mxu0 0.0
      %872 = vmatprep.subr.mxu0 0.0
      %873 = vmatpush2.xpose.msra.mxu0 0.0
      %874 = vmatprep.subr.mxu0 0.0
      %875 = vmatpush2.xpose.msra.mxu0 0.0
      %876 = vmatprep.subr.mxu0 0.0
      %877 = vmatpush2.xpose.msra.mxu0 0.0
      %878 = vmatprep.subr.mxu0 0.0
      %879 = vmatpush2.xpose.msra.mxu0 0.0
      %880 = vmatprep.subr.mxu0 0.0
      %881 = vmatpush2.xpose.msra.mxu0 0.0
      %882 = vmatprep.subr.mxu0 0.0
      %883 = vmatpush2.xpose.msra.mxu0 0.0
      %884 = vmatprep.subr.mxu0 0.0
      %885 = vmatpush2.xpose.msra.mxu0 0.0
      %886 = vmatprep.subr.mxu0 0.0
      %887 = vmatpush2.xpose.msra.mxu0 0.0
      %888 = vmatprep.subr.mxu0 0.0
      %889 = vmatpush2.xpose.msra.mxu0 0.0
      %890 = vmatprep.subr.mxu0 0.0
      %891 = vmatpush2.xpose.msra.mxu0 0.0
      %892 = vmatprep.subr.mxu0 0.0
      %893 = vmatpush2.xpose.msra.mxu0 0.0
      %894 = vmatprep.subr.mxu0 0.0
      %895 = vmatpush2.xpose.msra.mxu0 0.0
      %896 = vmatprep.subr.mxu0 0.0
      %897 = vmatpush2.xpose.msra.mxu0 0.0
      %898 = vmatprep.subr.mxu0 0.0
      %899 = vmatpush2.xpose.msra.mxu0 0.0
      %900 = vmatprep.subr.mxu0 0.0
      %901 = vmatpush2.xpose.msra.mxu0 0.0
      %902 = vmatprep.mubr.f32.mxu0 0.0
      %903 = vmatmul.mubr.f32.gmra.mxu0 %v834
      %v904 = vpop.f32.mrf.mxu0
      %v905 = vadd.f32 0.0, %v904
      %v906 = vpop.f32.mrf.mxu0
      %907 = vdwg.mxu0
      %v908 = vmul.f32 %v905, 0.35355338
      %v909 = vadd.f32 %v908, %v527
      %s910 = scalar_lea.vmem [#allocation2], 16
      %v911 = vld [vmem:[%s910] sm:$0xff]
      %v912 = vsel %vm445, %v909, -inf
      %913 = vmax.xlane.f32.xlu0 %v912
      %v914 = vpop.xlane.xlu0 %913
      %v915 = vmax.f32 %v911, %v914
      %v916 = vsub.f32 %v911, %v915
      %v917 = vmul.f32 %v916, 1.442695
      %v918 = vpow.pop %v917
      %920 = vset.pattern.permute.xlu0 0
      %921 = vperm.xlu0 %920, %v915
      %v922 = vpop.permute.xlu0 %921
      %v924 = vsub.f32 %v909, %v922
      %v925 = vmul.f32 %v924, 1.442695
      %v926 = vpow.pop %v925
      %s927 = scalar_lea.vmem [#allocation3], 16
      %v928 = vld [vmem:[%s927] sm:$0xff]
      %v929 = vmul.f32 %v918, %v928
      %v930 = vsel %vm445, %v926, 0.0
      %931 = vadd.xlane.f32.xlu0 %v930
      %v932 = vpop.xlane.xlu0 %931
      %v933 = vadd.f32 %v929, %v932
      %934 = vst.msk [vmem:[%s927] sm:$0xff] %vm552, %v933
      %s935 = scalar_lea.vmem [#allocation4], 16
      %v936 = vld [vmem:[%s935] sm:$0xff]
      %938 = vset.pattern.permute.xlu0 0
      %939 = vperm.xlu0 %938, %v918
      %v940 = vpop.permute.xlu0 %939
      %v942 = vmul.f32 %v940, %v936
      %943 = vrot.lane.b32.xlu0 %v441, 112
      %v944 = vpop.permute.xlu0 %943
      %v947 = vsel %vm445, %v926, 0
      %949 = vmatprep.subr.mxu0 0.0
      %950 = vmatpush1.msra.mxu0 0.0
      %951 = vmatprep.subr.mxu0 0.0
      %952 = vmatpush1.msra.mxu0 0.0
      %953 = vmatprep.subr.mxu0 0.0
      %954 = vmatpush1.msra.mxu0 0.0
      %955 = vmatprep.subr.mxu0 0.0
      %956 = vmatpush1.msra.mxu0 0.0
      %957 = vmatprep.subr.mxu0 0.0
      %958 = vmatpush1.msra.mxu0 0.0
      %959 = vmatprep.subr.mxu0 0.0
      %960 = vmatpush1.msra.mxu0 0.0
      %961 = vmatprep.subr.mxu0 0.0
      %962 = vmatpush1.msra.mxu0 0.0
      %963 = vmatprep.subr.mxu0 0.0
      %964 = vmatpush1.msra.mxu0 0.0
      %965 = vmatprep.subr.mxu0 0.0
      %966 = vmatpush1.msra.mxu0 0.0
      %967 = vmatprep.subr.mxu0 0.0
      %968 = vmatpush1.msra.mxu0 0.0
      %969 = vmatprep.subr.mxu0 0.0
      %970 = vmatpush1.msra.mxu0 0.0
      %971 = vmatprep.subr.mxu0 0.0
      %972 = vmatpush1.msra.mxu0 0.0
      %973 = vmatprep.subr.mxu0 0.0
      %974 = vmatpush1.msra.mxu0 0.0
      %975 = vmatprep.subr.mxu0 0.0
      %976 = vmatpush1.msra.mxu0 0.0
      %977 = vmatprep.subr.mxu0 0.0
      %978 = vmatpush1.msra.mxu0 0.0
      %979 = vmatprep.subr.mxu0 0.0
      %980 = vmatpush1.msra.mxu0 %v944
      %981 = vmatprep.subr.mxu0 0.0
      %982 = vmatpush2.msra.mxu0 0.0
      %983 = vmatprep.subr.mxu0 0.0
      %984 = vmatpush2.msra.mxu0 0.0
      %985 = vmatprep.subr.mxu0 0.0
      %986 = vmatpush2.msra.mxu0 0.0
      %987 = vmatprep.subr.mxu0 0.0
      %988 = vmatpush2.msra.mxu0 0.0
      %989 = vmatprep.subr.mxu0 0.0
      %990 = vmatpush2.msra.mxu0 0.0
      %991 = vmatprep.subr.mxu0 0.0
      %992 = vmatpush2.msra.mxu0 0.0
      %993 = vmatprep.subr.mxu0 0.0
      %994 = vmatpush2.msra.mxu0 0.0
      %995 = vmatprep.subr.mxu0 0.0
      %996 = vmatpush2.msra.mxu0 0.0
      %997 = vmatprep.subr.mxu0 0.0
      %998 = vmatpush2.msra.mxu0 0.0
      %999 = vmatprep.subr.mxu0 0.0
      %1000 = vmatpush2.msra.mxu0 0.0
      %1001 = vmatprep.subr.mxu0 0.0
      %1002 = vmatpush2.msra.mxu0 0.0
      %1003 = vmatprep.subr.mxu0 0.0
      %1004 = vmatpush2.msra.mxu0 0.0
      %1005 = vmatprep.subr.mxu0 0.0
      %1006 = vmatpush2.msra.mxu0 0.0
      %1007 = vmatprep.subr.mxu0 0.0
      %1008 = vmatpush2.msra.mxu0 0.0
      %1009 = vmatprep.subr.mxu0 0.0
      %1010 = vmatpush2.msra.mxu0 0.0
      %1011 = vmatprep.subr.mxu0 0.0
      %1012 = vmatpush2.msra.mxu0 0.0
      %1013 = vmatprep.mubr.f32.mxu0 0.0
      %1014 = vmatmul.mubr.f32.gmra.mxu0 %v947
      %v1015 = vpop.f32.mrf.mxu0
      %v1016 = vadd.f32 0.0, %v1015
      %v1017 = vpop.f32.mrf.mxu0
      %1018 = vdwg.mxu0
      %v1019 = vadd.f32 %v942, %v1016
      %1020 = vst.msk [vmem:[%s935] sm:$0xff] %vm445, %v1019
      %1021 = vst.msk [vmem:[%s910] sm:$0xff] %vm552, %v915
      %1022 = vrot.lane.b32.xlu0 %v439, 104
      %v1023 = vpop.permute.xlu0 %1022
      %1024 = vrot.lane.b32.xlu0 %v440, 104
      %v1025 = vpop.permute.xlu0 %1024
      %v1026 = vsel %vm445, %v1023, 0
      %v1028 = vsel %vm445, %v1025, 0
      %1030 = vmatprep.subr.mxu0 0.0
      %1031 = vmatpush1.xpose.msra.mxu0 0.0
      %1032 = vmatprep.subr.mxu0 0.0
      %1033 = vmatpush1.xpose.msra.mxu0 0.0
      %1034 = vmatprep.subr.mxu0 0.0
      %1035 = vmatpush1.xpose.msra.mxu0 0.0
      %1036 = vmatprep.subr.mxu0 0.0
      %1037 = vmatpush1.xpose.msra.mxu0 0.0
      %1038 = vmatprep.subr.mxu0 0.0
      %1039 = vmatpush1.xpose.msra.mxu0 0.0
      %1040 = vmatprep.subr.mxu0 0.0
      %1041 = vmatpush1.xpose.msra.mxu0 0.0
      %1042 = vmatprep.subr.mxu0 0.0
      %1043 = vmatpush1.xpose.msra.mxu0 0.0
      %1044 = vmatprep.subr.mxu0 0.0
      %1045 = vmatpush1.xpose.msra.mxu0 0.0
      %1046 = vmatprep.subr.mxu0 0.0
      %1047 = vmatpush1.xpose.msra.mxu0 0.0
      %1048 = vmatprep.subr.mxu0 0.0
      %1049 = vmatpush1.xpose.msra.mxu0 0.0
      %1050 = vmatprep.subr.mxu0 0.0
      %1051 = vmatpush1.xpose.msra.mxu0 0.0
      %1052 = vmatprep.subr.mxu0 0.0
      %1053 = vmatpush1.xpose.msra.mxu0 0.0
      %1054 = vmatprep.subr.mxu0 0.0
      %1055 = vmatpush1.xpose.msra.mxu0 0.0
      %1056 = vmatprep.subr.mxu0 0.0
      %1057 = vmatpush1.xpose.msra.mxu0 0.0
      %1058 = vmatprep.subr.mxu0 0.0
      %1059 = vmatpush1.xpose.msra.mxu0 0.0
      %1060 = vmatprep.subr.mxu0 0.0
      %1061 = vmatpush1.xpose.msra.mxu0 %v1028
      %1062 = vmatprep.subr.mxu0 0.0
      %1063 = vmatpush2.xpose.msra.mxu0 0.0
      %1064 = vmatprep.subr.mxu0 0.0
      %1065 = vmatpush2.xpose.msra.mxu0 0.0
      %1066 = vmatprep.subr.mxu0 0.0
      %1067 = vmatpush2.xpose.msra.mxu0 0.0
      %1068 = vmatprep.subr.mxu0 0.0
      %1069 = vmatpush2.xpose.msra.mxu0 0.0
      %1070 = vmatprep.subr.mxu0 0.0
      %1071 = vmatpush2.xpose.msra.mxu0 0.0
      %1072 = vmatprep.subr.mxu0 0.0
      %1073 = vmatpush2.xpose.msra.mxu0 0.0
      %1074 = vmatprep.subr.mxu0 0.0
      %1075 = vmatpush2.xpose.msra.mxu0 0.0
      %1076 = vmatprep.subr.mxu0 0.0
      %1077 = vmatpush2.xpose.msra.mxu0 0.0
      %1078 = vmatprep.subr.mxu0 0.0
      %1079 = vmatpush2.xpose.msra.mxu0 0.0
      %1080 = vmatprep.subr.mxu0 0.0
      %1081 = vmatpush2.xpose.msra.mxu0 0.0
      %1082 = vmatprep.subr.mxu0 0.0
      %1083 = vmatpush2.xpose.msra.mxu0 0.0
      %1084 = vmatprep.subr.mxu0 0.0
      %1085 = vmatpush2.xpose.msra.mxu0 0.0
      %1086 = vmatprep.subr.mxu0 0.0
      %1087 = vmatpush2.xpose.msra.mxu0 0.0
      %1088 = vmatprep.subr.mxu0 0.0
      %1089 = vmatpush2.xpose.msra.mxu0 0.0
      %1090 = vmatprep.subr.mxu0 0.0
      %1091 = vmatpush2.xpose.msra.mxu0 0.0
      %1092 = vmatprep.subr.mxu0 0.0
      %1093 = vmatpush2.xpose.msra.mxu0 0.0
      %1094 = vmatprep.mubr.f32.mxu0 0.0
      %1095 = vmatmul.mubr.f32.gmra.mxu0 %v1026
      %v1096 = vpop.f32.mrf.mxu0
      %v1097 = vadd.f32 0.0, %v1096
      %v1098 = vpop.f32.mrf.mxu0
      %1099 = vdwg.mxu0
      %v1100 = vmul.f32 %v1097, 0.35355338
      %v1101 = vadd.f32 %v1100, %v527
      %s1102 = scalar_lea.vmem [#allocation2], 24
      %v1103 = vld [vmem:[%s1102] sm:$0xff]
      %v1104 = vsel %vm445, %v1101, -inf
      %1105 = vmax.xlane.f32.xlu0 %v1104
      %v1106 = vpop.xlane.xlu0 %1105
      %v1107 = vmax.f32 %v1103, %v1106
      %v1108 = vsub.f32 %v1103, %v1107
      %v1109 = vmul.f32 %v1108, 1.442695
      %v1110 = vpow.pop %v1109
      %1112 = vset.pattern.permute.xlu0 0
      %1113 = vperm.xlu0 %1112, %v1107
      %v1114 = vpop.permute.xlu0 %1113
      %v1116 = vsub.f32 %v1101, %v1114
      %v1117 = vmul.f32 %v1116, 1.442695
      %v1118 = vpow.pop %v1117
      %s1119 = scalar_lea.vmem [#allocation3], 24
      %v1120 = vld [vmem:[%s1119] sm:$0xff]
      %v1121 = vmul.f32 %v1110, %v1120
      %v1122 = vsel %vm445, %v1118, 0.0
      %1123 = vadd.xlane.f32.xlu0 %v1122
      %v1124 = vpop.xlane.xlu0 %1123
      %v1125 = vadd.f32 %v1121, %v1124
      %1126 = vst.msk [vmem:[%s1119] sm:$0xff] %vm552, %v1125
      %s1127 = scalar_lea.vmem [#allocation4], 24
      %v1128 = vld [vmem:[%s1127] sm:$0xff]
      %1130 = vset.pattern.permute.xlu0 0
      %1131 = vperm.xlu0 %1130, %v1110
      %v1132 = vpop.permute.xlu0 %1131
      %v1134 = vmul.f32 %v1132, %v1128
      %1135 = vrot.lane.b32.xlu0 %v441, 104
      %v1136 = vpop.permute.xlu0 %1135
      %v1139 = vsel %vm445, %v1118, 0
      %1141 = vmatprep.subr.mxu0 0.0
      %1142 = vmatpush1.msra.mxu0 0.0
      %1143 = vmatprep.subr.mxu0 0.0
      %1144 = vmatpush1.msra.mxu0 0.0
      %1145 = vmatprep.subr.mxu0 0.0
      %1146 = vmatpush1.msra.mxu0 0.0
      %1147 = vmatprep.subr.mxu0 0.0
      %1148 = vmatpush1.msra.mxu0 0.0
      %1149 = vmatprep.subr.mxu0 0.0
      %1150 = vmatpush1.msra.mxu0 0.0
      %1151 = vmatprep.subr.mxu0 0.0
      %1152 = vmatpush1.msra.mxu0 0.0
      %1153 = vmatprep.subr.mxu0 0.0
      %1154 = vmatpush1.msra.mxu0 0.0
      %1155 = vmatprep.subr.mxu0 0.0
      %1156 = vmatpush1.msra.mxu0 0.0
      %1157 = vmatprep.subr.mxu0 0.0
      %1158 = vmatpush1.msra.mxu0 0.0
      %1159 = vmatprep.subr.mxu0 0.0
      %1160 = vmatpush1.msra.mxu0 0.0
      %1161 = vmatprep.subr.mxu0 0.0
      %1162 = vmatpush1.msra.mxu0 0.0
      %1163 = vmatprep.subr.mxu0 0.0
      %1164 = vmatpush1.msra.mxu0 0.0
      %1165 = vmatprep.subr.mxu0 0.0
      %1166 = vmatpush1.msra.mxu0 0.0
      %1167 = vmatprep.subr.mxu0 0.0
      %1168 = vmatpush1.msra.mxu0 0.0
      %1169 = vmatprep.subr.mxu0 0.0
      %1170 = vmatpush1.msra.mxu0 0.0
      %1171 = vmatprep.subr.mxu0 0.0
      %1172 = vmatpush1.msra.mxu0 %v1136
      %1173 = vmatprep.subr.mxu0 0.0
      %1174 = vmatpush2.msra.mxu0 0.0
      %1175 = vmatprep.subr.mxu0 0.0
      %1176 = vmatpush2.msra.mxu0 0.0
      %1177 = vmatprep.subr.mxu0 0.0
      %1178 = vmatpush2.msra.mxu0 0.0
      %1179 = vmatprep.subr.mxu0 0.0
      %1180 = vmatpush2.msra.mxu0 0.0
      %1181 = vmatprep.subr.mxu0 0.0
      %1182 = vmatpush2.msra.mxu0 0.0
      %1183 = vmatprep.subr.mxu0 0.0
      %1184 = vmatpush2.msra.mxu0 0.0
      %1185 = vmatprep.subr.mxu0 0.0
      %1186 = vmatpush2.msra.mxu0 0.0
      %1187 = vmatprep.subr.mxu0 0.0
      %1188 = vmatpush2.msra.mxu0 0.0
      %1189 = vmatprep.subr.mxu0 0.0
      %1190 = vmatpush2.msra.mxu0 0.0
      %1191 = vmatprep.subr.mxu0 0.0
      %1192 = vmatpush2.msra.mxu0 0.0
      %1193 = vmatprep.subr.mxu0 0.0
      %1194 = vmatpush2.msra.mxu0 0.0
      %1195 = vmatprep.subr.mxu0 0.0
      %1196 = vmatpush2.msra.mxu0 0.0
      %1197 = vmatprep.subr.mxu0 0.0
      %1198 = vmatpush2.msra.mxu0 0.0
      %1199 = vmatprep.subr.mxu0 0.0
      %1200 = vmatpush2.msra.mxu0 0.0
      %1201 = vmatprep.subr.mxu0 0.0
      %1202 = vmatpush2.msra.mxu0 0.0
      %1203 = vmatprep.subr.mxu0 0.0
      %1204 = vmatpush2.msra.mxu0 0.0
      %1205 = vmatprep.mubr.f32.mxu0 0.0
      %1206 = vmatmul.mubr.f32.gmra.mxu0 %v1139
      %v1207 = vpop.f32.mrf.mxu0
      %v1208 = vadd.f32 0.0, %v1207
      %v1209 = vpop.f32.mrf.mxu0
      %1210 = vdwg.mxu0
      %v1211 = vadd.f32 %v1134, %v1208
      %1212 = vst.msk [vmem:[%s1127] sm:$0xff] %vm445, %v1211
      %1213 = vst.msk [vmem:[%s1102] sm:$0xff] %vm552, %v1107
      // Predicated region
      $region53: #{decoder_layer.10} parent=47 // pred_check
        %p1214 = pneg %p421
      $region54: #{decoder_layer.10} parent=47 // pred_check_branch
        %1216 = sbr.rel (%p1214) target = $region56
      $region55: #{decoder_layer.10} parent=47 // pred_region
        %v1217 = vld [vmem:[#allocation3] sm:$0xff]
        %v1218 = vrcp.pop %v1217
        %v1219 = vld [vmem:[#allocation4] sm:$0xff]
        %1221 = vset.pattern.permute.xlu0 0
        %1222 = vperm.xlu0 %1221, %v1218
        %v1223 = vpop.permute.xlu0 %1222
        %v1225 = vmul.f32 %v1219, %v1223
        %v1226 = vld [vmem:[%s734] sm:$0xff]
        %v1227 = vrcp.pop %v1226
        %v1228 = vld [vmem:[%s742] sm:$0xff]
        %1230 = vset.pattern.permute.xlu0 0
        %1231 = vperm.xlu0 %1230, %v1227
        %v1232 = vpop.permute.xlu0 %1231
        %v1234 = vmul.f32 %v1228, %v1232
        %v1235 = vld [vmem:[%s927] sm:$0xff]
        %v1236 = vrcp.pop %v1235
        %v1237 = vld [vmem:[%s935] sm:$0xff]
        %1239 = vset.pattern.permute.xlu0 0
        %1240 = vperm.xlu0 %1239, %v1236
        %v1241 = vpop.permute.xlu0 %1240
        %v1243 = vmul.f32 %v1237, %v1241
        %v1244 = vld [vmem:[%s1119] sm:$0xff]
        %v1245 = vrcp.pop %v1244
        %v1246 = vld [vmem:[%s1127] sm:$0xff]
        %1248 = vset.pattern.permute.xlu0 0
        %1249 = vperm.xlu0 %1248, %v1245
        %v1250 = vpop.permute.xlu0 %1249
        %v1252 = vmul.f32 %v1246, %v1250
        %1254 = vrot.lane.b32.xlu0 %v1234, 8
        %v1255 = vpop.permute.xlu0 %1254
        %1258 = vrot.lane.b32.xlu0 %v1243, 16
        %v1259 = vpop.permute.xlu0 %1258
        %1262 = vrot.lane.b32.xlu0 %v1252, 24
        %v1263 = vpop.permute.xlu0 %1262
        %v1265 = vsel %vm445, %v1225, %v1255
        %vm1266 = vcmask 130048
        %v1267 = vsel %vm1266, %v1265, %v1259
        %vm1268 = vcmask 195584
        %v1269 = vsel %vm1268, %v1267, %v1263
        %v1270 = vld [vmem:[%s5] sm:$0xff]
        %v1271 = vld [vmem:[%s5 + $0x8] sm:$0xff]
        %v1272 = vld [vmem:[%s5 + $0x10] sm:$0xff]
        %v1273 = vld [vmem:[%s5 + $0x18] sm:$0xff]
        %v1274 = vld [vmem:[%s6] sm:$0x1]
        %v1276 = vlaneseq
        %v1277 = vshrl.u32 %v1276, 7
        %v1278 = vsub.s32 0, %v1277
        %v1279 = vrot.slane %v1274, %v1278
        %vm1281 = vcmask 261120
        %v1283 = vsel %vm1281, %v1269, 0
        %1285 = vmatprep.subr.mxu0 0.0
        %1286 = vmatpush1.msra.mxu0 0.0
        %1287 = vmatprep.subr.mxu0 0.0
        %1288 = vmatpush1.msra.mxu0 0.0
        %1289 = vmatprep.subr.mxu0 0.0
        %1290 = vmatpush1.msra.mxu0 0.0
        %1291 = vmatprep.subr.mxu0 0.0
        %1292 = vmatpush1.msra.mxu0 0.0
        %1293 = vmatprep.subr.mxu0 0.0
        %1294 = vmatpush1.msra.mxu0 0.0
        %1295 = vmatprep.subr.mxu0 0.0
        %1296 = vmatpush1.msra.mxu0 0.0
        %1297 = vmatprep.subr.mxu0 0.0
        %1298 = vmatpush1.msra.mxu0 0.0
        %1299 = vmatprep.subr.mxu0 0.0
        %1300 = vmatpush1.msra.mxu0 0.0
        %1301 = vmatprep.subr.mxu0 0.0
        %1302 = vmatpush1.msra.mxu0 0.0
        %1303 = vmatprep.subr.mxu0 0.0
        %1304 = vmatpush1.msra.mxu0 0.0
        %1305 = vmatprep.subr.mxu0 0.0
        %1306 = vmatpush1.msra.mxu0 0.0
        %1307 = vmatprep.subr.mxu0 0.0
        %1308 = vmatpush1.msra.mxu0 0.0
        %1309 = vmatprep.subr.mxu0 0.0
        %1310 = vmatpush1.msra.mxu0 %v1273
        %1311 = vmatprep.subr.mxu0 0.0
        %1312 = vmatpush1.msra.mxu0 %v1272
        %1313 = vmatprep.subr.mxu0 0.0
        %1314 = vmatpush1.msra.mxu0 %v1271
        %1315 = vmatprep.subr.mxu0 0.0
        %1316 = vmatpush1.msra.mxu0 %v1270
        %1317 = vmatprep.subr.mxu0 0.0
        %1318 = vmatpush2.msra.mxu0 0.0
        %1319 = vmatprep.subr.mxu0 0.0
        %1320 = vmatpush2.msra.mxu0 0.0
        %1321 = vmatprep.subr.mxu0 0.0
        %1322 = vmatpush2.msra.mxu0 0.0
        %1323 = vmatprep.subr.mxu0 0.0
        %1324 = vmatpush2.msra.mxu0 0.0
        %1325 = vmatprep.subr.mxu0 0.0
        %1326 = vmatpush2.msra.mxu0 0.0
        %1327 = vmatprep.subr.mxu0 0.0
        %1328 = vmatpush2.msra.mxu0 0.0
        %1329 = vmatprep.subr.mxu0 0.0
        %1330 = vmatpush2.msra.mxu0 0.0
        %1331 = vmatprep.subr.mxu0 0.0
        %1332 = vmatpush2.msra.mxu0 0.0
        %1333 = vmatprep.subr.mxu0 0.0
        %1334 = vmatpush2.msra.mxu0 0.0
        %1335 = vmatprep.subr.mxu0 0.0
        %1336 = vmatpush2.msra.mxu0 0.0
        %1337 = vmatprep.subr.mxu0 0.0
        %1338 = vmatpush2.msra.mxu0 0.0
        %1339 = vmatprep.subr.mxu0 0.0
        %1340 = vmatpush2.msra.mxu0 0.0
        %1341 = vmatprep.subr.mxu0 0.0
        %1342 = vmatpush2.msra.mxu0 0.0
        %1343 = vmatprep.subr.mxu0 0.0
        %1344 = vmatpush2.msra.mxu0 0.0
        %1345 = vmatprep.subr.mxu0 0.0
        %1346 = vmatpush2.msra.mxu0 0.0
        %1347 = vmatprep.subr.mxu0 0.0
        %1348 = vmatpush2.msra.mxu0 0.0
        %1349 = vmatprep.mubr.f32.mxu0 0.0
        %1350 = vmatmul.mubr.f32.gmra.mxu0 %v1283
        %v1351 = vpop.f32.mrf.mxu0
        %v1352 = vadd.f32 %v1279, %v1351
        %v1353 = vpop.f32.mrf.mxu0
        %1354 = vdwg.mxu0
        %v1355 = vld [vmem:[%s413] sm:$0xff]
        %v1356 = vadd.f32 %v1352, %v1355
        %1357 = vst.msk [vmem:[%s420] sm:$0xff] %vm1281, %v1356
      $region56: #{decoder_layer.10} parent=47 // pred_fallthru
        _
      %p1358 = scmp.lt.s32.totalorder %s23, 1
      %s1359 = scalar_select %p1358, %s23, 1
      %p1360 = scmp.lt.s32.totalorder %s24, 0
      %s1361 = scalar_select %p1360, %s24, 0
      %s1362 = sadd.s32 %s1361, %s1359
      %s1363 = smul.addr %s1362, 8
      %s1364 = scalar_lea.vmem %s7, %s1363
      // Predicated region
      $region57: #{decoder_layer.10} parent=47 // pred_check
        %p1365 = pneg %p239
      $region58: #{decoder_layer.10} parent=47 // pred_check_branch
        %1367 = sbr.rel (%p1365) target = $region60
      $region59: #{decoder_layer.10} parent=47 // pred_region
        _
      $region60: #{decoder_layer.10} parent=47 // pred_fallthru
        _
    $region48: #{decoder_layer.10} parent=5 // pred_fallthru
      _
    %p1368 = scmp.le.s32.totalorder 2, %s13
    // Predicated region
    $region61: #{decoder_layer.10} parent=5 // pred_check
      %p1369 = pneg %p1368
    $region62: #{decoder_layer.10} parent=5 // pred_check_branch
      %1371 = sbr.rel (%p1369) target = $region64
    $region63: #{decoder_layer.10} parent=5 // pred_region
      %s1372 = ssub.s32 %s13, 2
      // Predicated region
      $region65: #{decoder_layer.10} parent=63 // pred_check
        %p1373 = pneg %p245
      $region66: #{decoder_layer.10} parent=63 // pred_check_branch
        %1375 = sbr.rel (%p1373) target = $region68
      $region67: #{decoder_layer.10} parent=63 // pred_region
        %p1376 = scmp.lt.s32.totalorder %s26, 1
        %s1377 = scalar_select %p1376, %s26, 1
        %p1378 = scmp.lt.s32.totalorder %s27, 0
        %s1379 = scalar_select %p1378, %s27, 0
        %s1380 = sadd.s32 %s1379, %s1377
        %s1381 = smul.addr %s1380, 8
        %s1382 = scalar_lea.vmem %s7, %s1381
      $region68: #{decoder_layer.10} parent=63 // pred_fallthru
        _
    $region64: #{decoder_layer.10} parent=5 // pred_fallthru
      _
  $region6: #{decoder_layer.10} parent=0 // loop_footer
    %s17 = sadd.s32 1, %s13
  $region7: #{decoder_layer.10} parent=0 // loop_footer_branch
    %12 = sbr.rel target = $region3
  $region8: #{decoder_layer.10} parent=0 // loop_exit
    _

</llo_original>
